<compile_context>
chip_gen: v7x
topology: tpu7x:2x2x1
jax: 0.10.0
libtpu: 0.0.40
codegen_flags: <defaults>
</compile_context>

<pallas_src>
import math

import numpy as np
import jax
import jax.numpy as jnp
from jax import lax
from jax.experimental import pallas as pl
from jax.experimental.pallas import tpu as pltpu


# ----------------------------------------------------------------------------
# Fused forward kernel (one grid step = one batch block)
# ----------------------------------------------------------------------------
def _fused_forward_kernel(
    # inputs
    xg_ref,                       # (Bk, R, 8)  f32   input, 8 positions per row (R = L/8)
    w1_ref, b1_ref,               # (24, 256) bf16, (1, 256) f32   conv1+BN1, pool1 folded
    w2_ref, b2_ref,               # (192, 256) bf16, (1, 256) f32  conv2+BN2, pool2 folded
    w3_ref, b3_ref,               # (256, 256) bf16, (1, 256) f32  conv3+BN3, pool3 folded
    fw0_ref, fb0_ref,             # (R*128, 2H) bf16, (1, 2H) f32  fc1+BN4 (rows permuted)
    fw1_ref, fb1_ref,             # (2H, H) bf16, (1, H) f32       fc2+BN5
    fw2_ref, fb2_ref,             # (H, NC) bf16, (1, NC) f32      fc3
    # output
    o_ref,                        # (Bk, NC) f32
):
    f32, bf16 = jnp.float32, jnp.bfloat16
    Bk, R, _ = xg_ref.shape

    def conv_pool(lhs3d, w_ref, b_ref):
        # lhs3d: (Bk, R, K).  One MXU matmul computes every conv position of the
        # row; the two 128-wide column halves hold even / odd positions, so
        # MaxPool1d(2,2) is a single elementwise max of the halves.
        K = lhs3d.shape[-1]
        y = jnp.dot(lhs3d.reshape(Bk * R, K).astype(bf16), w_ref[...],
                    preferred_element_type=f32)
        y = jnp.maximum(y + b_ref[...], 0.0)                    # folded-BN bias + ReLU
        return jnp.maximum(y[:, :128], y[:, 128:]).reshape(Bk, R, 128)

    # --- conv1 (Cin=1, k=5, pad=2) + BN1 + ReLU + pool1 -------------------------
    xg = xg_ref[...]                                            # (Bk, R, 8)
    z8 = jnp.zeros((Bk, 1, 8), f32)
    xprev = jnp.concatenate([z8, xg[:, :R - 1, :]], axis=1)     # row g-1 (zero halo)
    xnext = jnp.concatenate([xg[:, 1:, :], z8], axis=1)         # row g+1 (zero halo)
    lhs1 = jnp.concatenate([xprev, xg, xnext], axis=-1)         # (Bk, R, 24)
    h1 = conv_pool(lhs1, w1_ref, b1_ref)                        # (Bk, R, 128) = 4 pos x 32 ch

    # --- conv2 (Cin=32, k=3, pad=1) + BN2 + ReLU + pool2 ------------------------
    z32 = jnp.zeros((Bk, 1, 32), f32)
    l2 = jnp.concatenate([z32, h1[:, :R - 1, 96:128]], axis=1)  # pooled1 position 4g-1
    r2 = jnp.concatenate([h1[:, 1:, 0:32], z32], axis=1)        # pooled1 position 4g+4
    lhs2 = jnp.concatenate([l2, h1, r2], axis=-1)               # (Bk, R, 192)
    h2 = conv_pool(lhs2, w2_ref, b2_ref)                        # (Bk, R, 128) = 2 pos x 64 ch

    # --- conv3 (Cin=64, k=3, pad=1) + BN3 + ReLU + pool3 ------------------------
    z64 = jnp.zeros((Bk, 1, 64), f32)
    l3 = jnp.concatenate([z64, h2[:, :R - 1, 64:128]], axis=1)  # pooled2 position 2g-1
    r3 = jnp.concatenate([h2[:, 1:, 0:64], z64], axis=1)        # pooled2 position 2g+2
    lhs3 = jnp.concatenate([l3, h2, r3], axis=-1)               # (Bk, R, 256)
    h3 = conv_pool(lhs3, w3_ref, b3_ref)                        # (Bk, R, 128) = final pos g

    # --- flatten (position-major; fc1 rows were permuted to match) + FCs --------
    flat = jnp.concatenate([h3[:, g, :] for g in range(R)], axis=-1)      # (Bk, R*128)
    y = jnp.dot(flat.astype(bf16), fw0_ref[...], preferred_element_type=f32) + fb0_ref[...]
    y = jnp.maximum(y, 0.0)
    y = jnp.dot(y.astype(bf16), fw1_ref[...], preferred_element_type=f32) + fb1_ref[...]
    y = jnp.maximum(y, 0.0)
    o_ref[...] = jnp.dot(y.astype(bf16), fw2_ref[...], preferred_element_type=f32) + fb2_ref[...]


# ----------------------------------------------------------------------------
# Wrapper: single pallas_call, grid over batch blocks
# ----------------------------------------------------------------------------
def forward(params, x, *, batch_block=None, single_buffer_weights=True,
            vmem_limit_bytes=48 * 1024 * 1024):
    """Entire ComplexFingerprintClassifier forward as ONE fused Pallas kernel."""
    B, L = x.shape
    if L % 8 != 0 or L < 16:
        raise ValueError("input_size must be a multiple of 8 and >= 16")
    R = L // 8
    Bk = B if batch_block is None else batch_block
    if B % Bk != 0:
        raise ValueError("batch must be divisible by batch_block")
    if Bk != B and Bk % 8 != 0:
        raise ValueError("batch_block must be a multiple of 8 (or equal to batch)")
    G = B // Bk

    nc = int(params["fw2"].shape[1])
    h2dim = int(params["fw0"].shape[1])
    hdim = int(params["fw1"].shape[1])
    assert int(params["fw0"].shape[0]) == R * 128, "fc1 weight does not match input_size"

    xg = x.reshape(B, R, 8)   # free row-major regrouping: 8 input positions per row

    weights = (params["w1"], params["b1"], params["w2"], params["b2"],
               params["w3"], params["b3"], params["fw0"], params["fb0"],
               params["fw1"], params["fb1"], params["fw2"], params["fb2"])

    # Advisory cost estimate for the whole call (helps XLA scheduling).
    flops = 2 * B * R * (24 * 256 + 192 * 256 + 256 * 256)
    flops += 2 * B * (R * 128 * h2dim + h2dim * hdim + hdim * nc)
    bytes_accessed = 4 * B * L + 4 * B * nc
    bytes_accessed += sum(int(w.size) * w.dtype.itemsize for w in weights)
    cost = pl.CostEstimate(flops=flops, transcendentals=0,
                           bytes_accessed=bytes_accessed)

    def build_and_run(conservative):
        def w_spec(w):
            shp = tuple(w.shape)
            idx = lambda i, _n=len(shp): (0,) * _n
            if conservative:
                return pl.BlockSpec(shp, idx)
            # Grid-invariant weights: single-buffer to save VMEM (esp. on v7x).
            return pl.BlockSpec(shp, idx, pipeline_mode=pl.Buffered(1))

        in_specs = [pl.BlockSpec((Bk, R, 8), lambda i: (i, 0, 0))]
        in_specs += [w_spec(w) for w in weights]
        out_spec = pl.BlockSpec((Bk, nc), lambda i: (i, 0))

        cp = dict(dimension_semantics=("parallel",))   # batch blocks -> both v7x TCs
        if not conservative and vmem_limit_bytes is not None:
            cp["vmem_limit_bytes"] = vmem_limit_bytes

        return pl.pallas_call(
            _fused_forward_kernel,
            out_shape=jax.ShapeDtypeStruct((B, nc), jnp.float32),
            grid_spec=pltpu.PrefetchScalarGridSpec(
                num_scalar_prefetch=0, grid=(G,),
                in_specs=in_specs, out_specs=out_spec),
            compiler_params=pltpu.CompilerParams(**cp),
            cost_estimate=cost,
        )(xg, *weights)

    if single_buffer_weights:
        try:
            return build_and_run(False)
        except Exception:
            pass   # fall back if this JAX/Mosaic build rejects single-buffering
    return build_and_run(True)


# ----------------------------------------------------------------------------
# Parameters: synthetic torch-layout params + one-time folding for the kernel
# ----------------------------------------------------------------------------
def init_raw_params(key, input_size, hidden_size, num_classes):
    """Synthetic parameters in PyTorch layouts (what a checkpoint would provide)."""
    keys = iter(jax.random.split(key, 48))
    p = {}

    def bn(c):
        return dict(
            gamma=1.0 + 0.1 * jax.random.normal(next(keys), (c,), jnp.float32),
            beta=0.1 * jax.random.normal(next(keys), (c,), jnp.float32),
            mean=0.05 * jax.random.normal(next(keys), (c,), jnp.float32),
            var=jax.random.uniform(next(keys), (c,), jnp.float32, minval=0.5, maxval=1.5),
        )

    conv_cfg = [(1, 32, 5), (32, 64, 3), (64, 128, 3)]
    for i, (ci, co, k) in enumerate(conv_cfg, start=1):
        p[f"conv{i}_w"] = jax.random.normal(next(keys), (co, ci, k), jnp.float32) / math.sqrt(ci * k)
        p[f"conv{i}_b"] = 0.05 * jax.random.normal(next(keys), (co,), jnp.float32)
        p[f"bn{i}"] = bn(co)

    fc_in = (input_size // 8) * 128
    fc_cfg = [(fc_in, hidden_size * 2), (hidden_size * 2, hidden_size),
              (hidden_size, num_classes)]
    for i, (din, dout) in enumerate(fc_cfg, start=1):
        p[f"fc{i}_w"] = jax.random.normal(next(keys), (dout, din), jnp.float32) / math.sqrt(din)
        p[f"fc{i}_b"] = 0.05 * jax.random.normal(next(keys), (dout,), jnp.float32)
    p["bn4"] = bn(hidden_size * 2)
    p["bn5"] = bn(hidden_size)
    return p


def fold_params(raw, input_size, eps=1e-5):
    """One-time init cost: fold eval BN into weights/biases and pack the conv
    weights into the pooled im2col RHS layout used by the kernel (8 conv
    positions per row, even|odd positions in the two 128-column halves).
    FC weights go to (in, out) bf16; fc1 rows are permuted so the kernel's
    position-major flatten matches torch's channel-major flatten."""
    R = input_size // 8

    def bn_fold(bn):
        s = np.asarray(bn["gamma"]) / np.sqrt(np.asarray(bn["var"]) + eps)
        t = np.asarray(bn["beta"]) - np.asarray(bn["mean"]) * s
        return s, t

    p = {}

    # conv1: LHS lane i <-> x position 8g + (i - 8); output col = 128*(j%2) + 32*(j//2) + c
    s1, t1 = bn_fold(raw["bn1"])
    w1f = np.transpose(np.asarray(raw["conv1_w"]), (2, 1, 0)).reshape(5, 32) * s1[None, :]
    b1f = np.asarray(raw["conv1_b"]) * s1 + t1
    rhs1 = np.zeros((24, 256), np.float32)
    for j in range(8):                              # conv position within the row
        col = 128 * (j % 2) + 32 * (j // 2)
        for k in range(5):                          # x position = 8g + j + k - 2
            rhs1[j + k + 6, col:col + 32] = w1f[k]
    p["w1"] = jnp.asarray(rhs1, jnp.bfloat16)
    p["b1"] = jnp.asarray(np.tile(b1f, 8).reshape(1, 256), jnp.float32)

    # conv2: LHS lane m <-> pooled1 position 4g - 1 + m//32, channel m%32
    s2, t2 = bn_fold(raw["bn2"])
    w2f = np.transpose(np.asarray(raw["conv2_w"]), (2, 1, 0)) * s2[None, None, :]   # (3,32,64)
    b2f = np.asarray(raw["conv2_b"]) * s2 + t2
    rhs2 = np.zeros((192, 256), np.float32)
    for j in range(4):
        col = 128 * (j % 2) + 64 * (j // 2)
        for k in range(3):
            r0 = 32 * (j + k)
            rhs2[r0:r0 + 32, col:col + 64] = w2f[k]
    p["w2"] = jnp.asarray(rhs2, jnp.bfloat16)
    p["b2"] = jnp.asarray(np.tile(b2f, 4).reshape(1, 256), jnp.float32)

    # conv3: LHS lane m <-> pooled2 position 2g - 1 + m//64, channel m%64
    s3, t3 = bn_fold(raw["bn3"])
    w3f = np.transpose(np.asarray(raw["conv3_w"]), (2, 1, 0)) * s3[None, None, :]   # (3,64,128)
    b3f = np.asarray(raw["conv3_b"]) * s3 + t3
    rhs3 = np.zeros((256, 256), np.float32)
    for j in range(2):
        col = 128 * j
        for k in range(3):
            r0 = 64 * (j + k)
            rhs3[r0:r0 + 64, col:col + 128] = w3f[k]
    p["w3"] = jnp.asarray(rhs3, jnp.bfloat16)
    p["b3"] = jnp.asarray(np.tile(b3f, 2).reshape(1, 256), jnp.float32)

    # fc1 (+bn4): rows from torch order (c*R + l) -> kernel order (l*128 + c)
    s4, t4 = bn_fold(raw["bn4"])
    wt = np.asarray(raw["fc1_w"]).T                              # (R*128, 2H), rows = c*R + l
    wt = wt.reshape(128, R, -1).transpose(1, 0, 2).reshape(R * 128, -1)
    p["fw0"] = jnp.asarray(wt * s4[None, :], jnp.bfloat16)
    p["fb0"] = jnp.asarray((np.asarray(raw["fc1_b"]) * s4 + t4).reshape(1, -1), jnp.float32)

    s5, t5 = bn_fold(raw["bn5"])
    p["fw1"] = jnp.asarray(np.asarray(raw["fc2_w"]).T * s5[None, :], jnp.bfloat16)
    p["fb1"] = jnp.asarray((np.asarray(raw["fc2_b"]) * s5 + t5).reshape(1, -1), jnp.float32)

    p["fw2"] = jnp.asarray(np.asarray(raw["fc3_w"]).T, jnp.bfloat16)
    p["fb2"] = jnp.asarray(np.asarray(raw["fc3_b"]).reshape(1, -1), jnp.float32)
    return p


# ----------------------------------------------------------------------------
# Independent pure-JAX (XLA) reference, torch layouts, unfolded BN
# ----------------------------------------------------------------------------
def reference_forward(raw, x, eps=1e-5):
    h = x[:, None, :]                                            # (B, 1, L)  NCW
    for i, pad in ((1, 2), (2, 1), (3, 1)):
        h = lax.conv_general_dilated(
            h, raw[f"conv{i}_w"], window_strides=(1,), padding=[(pad, pad)],
            dimension_numbers=("NCH", "OIH", "NCH"),
            precision=lax.Precision.HIGHEST)
        h = h + raw[f"conv{i}_b"][None, :, None]
        bn = raw[f"bn{i}"]
        h = (h - bn["mean"][None, :, None]) / jnp.sqrt(bn["var"][None, :, None] + eps)
        h = h * bn["gamma"][None, :, None] + bn["beta"][None, :, None]
        h = jnp.maximum(h, 0.0)
        B, C, L = h.shape
        h = jnp.max(h.reshape(B, C, L // 2, 2), axis=-1)
    h = h.reshape(h.shape[0], -1)                                # torch NCW flatten
    for i, bn_name in ((1, "bn4"), (2, "bn5"), (3, None)):
        h = jnp.dot(h, raw[f"fc{i}_w"].T, precision=lax.Precision.HIGHEST) + raw[f"fc{i}_b"]
        if bn_name is not None:
            bn = raw[bn_name]
            h = (h - bn["mean"]) / jnp.sqrt(bn["var"] + eps) * bn["gamma"] + bn["beta"]
            h = jnp.maximum(h, 0.0)
    return h


if __name__ == "__main__":
    # Small demo shapes (L must be a multiple of 8; pick G = B / batch_block even).
    input_size, hidden_size, num_classes, batch = 64, 32, 16, 16

    key = jax.random.PRNGKey(0)
    pkey, xkey = jax.random.split(key)
    raw = init_raw_params(pkey, input_size, hidden_size, num_classes)
    params = fold_params(raw, input_size)
    x = jax.random.normal(xkey, (batch, input_size), jnp.float32)

    out = forward(params, x, batch_block=8)        # grid=(2,): even # of blocks for v7x TCs
    out = jax.block_until_ready(out)
    assert out.shape == (batch, num_classes), out.shape

    ref = reference_forward(raw, x)
    err = float(jnp.max(jnp.abs(out - ref)))
    # bf16 MXU inputs (f32 accumulation) vs an f32-HIGHEST reference -> loosened tol.
    assert err < 1.5e-1, f"Pallas / reference mismatch: max abs err = {err}"

    print("KERNEL_OK")
</pallas_src>

<mosaic_0001>
module attributes {stable_mosaic.version = 11 : i64} {
  func.func @_fused_forward_kernel(%arg0: i32, %arg1: memref<8x8x8xf32, #tpu.memory_space<vmem>>, %arg2: memref<24x256xbf16, #tpu.memory_space<vmem>>, %arg3: memref<1x256xf32, #tpu.memory_space<vmem>>, %arg4: memref<192x256xbf16, #tpu.memory_space<vmem>>, %arg5: memref<1x256xf32, #tpu.memory_space<vmem>>, %arg6: memref<256x256xbf16, #tpu.memory_space<vmem>>, %arg7: memref<1x256xf32, #tpu.memory_space<vmem>>, %arg8: memref<1024x64xbf16, #tpu.memory_space<vmem>>, %arg9: memref<1x64xf32, #tpu.memory_space<vmem>>, %arg10: memref<64x32xbf16, #tpu.memory_space<vmem>>, %arg11: memref<1x32xf32, #tpu.memory_space<vmem>>, %arg12: memref<32x16xbf16, #tpu.memory_space<vmem>>, %arg13: memref<1x16xf32, #tpu.memory_space<vmem>>, %arg14: memref<8x16xf32, #tpu.memory_space<vmem>>) attributes {dimension_semantics = [#tpu.dimension_semantics<parallel>], iteration_bounds = array<i64: 2>, scalar_prefetch = 0 : i64, scratch_operands = 0 : i64, tpu.core_type = #tpu.core_type<tc>, window_params = [{transform_indices = @transform_0, window_bounds = array<i64: 8, 8, 8>}, {pipeline_mode = #tpu.pipeline_mode<synchronous>, transform_indices = @transform_1, window_bounds = array<i64: 24, 256>}, {pipeline_mode = #tpu.pipeline_mode<synchronous>, transform_indices = @transform_2, window_bounds = array<i64: 1, 256>}, {pipeline_mode = #tpu.pipeline_mode<synchronous>, transform_indices = @transform_3, window_bounds = array<i64: 192, 256>}, {pipeline_mode = #tpu.pipeline_mode<synchronous>, transform_indices = @transform_4, window_bounds = array<i64: 1, 256>}, {pipeline_mode = #tpu.pipeline_mode<synchronous>, transform_indices = @transform_5, window_bounds = array<i64: 256, 256>}, {pipeline_mode = #tpu.pipeline_mode<synchronous>, transform_indices = @transform_6, window_bounds = array<i64: 1, 256>}, {pipeline_mode = #tpu.pipeline_mode<synchronous>, transform_indices = @transform_7, window_bounds = array<i64: 1024, 64>}, {pipeline_mode = #tpu.pipeline_mode<synchronous>, transform_indices = @transform_8, window_bounds = array<i64: 1, 64>}, {pipeline_mode = #tpu.pipeline_mode<synchronous>, transform_indices = @transform_9, window_bounds = array<i64: 64, 32>}, {pipeline_mode = #tpu.pipeline_mode<synchronous>, transform_indices = @transform_10, window_bounds = array<i64: 1, 32>}, {pipeline_mode = #tpu.pipeline_mode<synchronous>, transform_indices = @transform_11, window_bounds = array<i64: 32, 16>}, {pipeline_mode = #tpu.pipeline_mode<synchronous>, transform_indices = @transform_12, window_bounds = array<i64: 1, 16>}, {transform_indices = @transform_13, window_bounds = array<i64: 8, 16>}]} {
    %c0 = arith.constant 0 : index
    %c0_0 = arith.constant 0 : index
    %c0_1 = arith.constant 0 : index
    %0 = vector.load %arg1[%c0, %c0_0, %c0_1] : memref<8x8x8xf32, #tpu.memory_space<vmem>>, vector<8x8x8xf32>
    %cst = arith.constant 0.000000e+00 : f32
    %1 = vector.broadcast %cst : f32 to vector<8x1x8xf32>
    %2 = vector.extract_strided_slice %0 {offsets = [0, 0, 0], sizes = [8, 7, 8], strides = [1, 1, 1]} : vector<8x8x8xf32> to vector<8x7x8xf32>
    %3 = tpu.concatenate %1, %2 in 1 : vector<8x1x8xf32>, vector<8x7x8xf32> -> vector<8x8x8xf32>
    %4 = vector.extract_strided_slice %0 {offsets = [0, 1, 0], sizes = [8, 7, 8], strides = [1, 1, 1]} : vector<8x8x8xf32> to vector<8x7x8xf32>
    %5 = tpu.concatenate %4, %1 in 1 : vector<8x7x8xf32>, vector<8x1x8xf32> -> vector<8x8x8xf32>
    %6 = tpu.concatenate %3, %0, %5 in 2 : vector<8x8x8xf32>, vector<8x8x8xf32>, vector<8x8x8xf32> -> vector<8x8x24xf32>
    %7 = vector.shape_cast %6 : vector<8x8x24xf32> to vector<64x24xf32>
    %8 = arith.truncf %7 : vector<64x24xf32> to vector<64x24xbf16>
    %c0_2 = arith.constant 0 : index
    %c0_3 = arith.constant 0 : index
    %9 = vector.load %arg2[%c0_2, %c0_3] : memref<24x256xbf16, #tpu.memory_space<vmem>>, vector<24x256xbf16>
    %cst_4 = arith.constant dense<0.000000e+00> : vector<64x256xf32>
    %10 = tpu.matmul %8, %9, %cst_4 {dimension_numbers = #tpu.dot_dimension_numbers<[1], [0], [0], [1], [0, 0, 1, 1], [], []>} : vector<64x24xbf16>, vector<24x256xbf16>, vector<64x256xf32> -> vector<64x256xf32>
    %c0_5 = arith.constant 0 : index
    %c0_6 = arith.constant 0 : index
    %11 = vector.load %arg3[%c0_5, %c0_6] : memref<1x256xf32, #tpu.memory_space<vmem>>, vector<1x256xf32>
    %12 = vector.broadcast %11 : vector<1x256xf32> to vector<64x256xf32>
    %13 = arith.addf %10, %12 : vector<64x256xf32>
    %cst_7 = arith.constant 0.000000e+00 : f32
    %14 = vector.broadcast %cst_7 : f32 to vector<64x256xf32>
    %15 = arith.maximumf %13, %14 : vector<64x256xf32>
    %16 = vector.extract_strided_slice %15 {offsets = [0, 0], sizes = [64, 128], strides = [1, 1]} : vector<64x256xf32> to vector<64x128xf32>
    %17 = vector.extract_strided_slice %15 {offsets = [0, 128], sizes = [64, 128], strides = [1, 1]} : vector<64x256xf32> to vector<64x128xf32>
    %18 = arith.maximumf %16, %17 : vector<64x128xf32>
    %19 = vector.shape_cast %18 : vector<64x128xf32> to vector<8x8x128xf32>
    %cst_8 = arith.constant 0.000000e+00 : f32
    %20 = vector.broadcast %cst_8 : f32 to vector<8x1x32xf32>
    %21 = vector.extract_strided_slice %19 {offsets = [0, 0, 96], sizes = [8, 7, 32], strides = [1, 1, 1]} : vector<8x8x128xf32> to vector<8x7x32xf32>
    %22 = tpu.concatenate %20, %21 in 1 : vector<8x1x32xf32>, vector<8x7x32xf32> -> vector<8x8x32xf32>
    %23 = vector.extract_strided_slice %19 {offsets = [0, 1, 0], sizes = [8, 7, 32], strides = [1, 1, 1]} : vector<8x8x128xf32> to vector<8x7x32xf32>
    %24 = tpu.concatenate %23, %20 in 1 : vector<8x7x32xf32>, vector<8x1x32xf32> -> vector<8x8x32xf32>
    %25 = tpu.concatenate %22, %19, %24 in 2 : vector<8x8x32xf32>, vector<8x8x128xf32>, vector<8x8x32xf32> -> vector<8x8x192xf32>
    %26 = vector.shape_cast %25 : vector<8x8x192xf32> to vector<64x192xf32>
    %27 = arith.truncf %26 : vector<64x192xf32> to vector<64x192xbf16>
    %c0_9 = arith.constant 0 : index
    %c0_10 = arith.constant 0 : index
    %28 = vector.load %arg4[%c0_9, %c0_10] : memref<192x256xbf16, #tpu.memory_space<vmem>>, vector<192x256xbf16>
    %cst_11 = arith.constant dense<0.000000e+00> : vector<64x256xf32>
    %29 = tpu.matmul %27, %28, %cst_11 {dimension_numbers = #tpu.dot_dimension_numbers<[1], [0], [0], [1], [0, 0, 1, 1], [], []>} : vector<64x192xbf16>, vector<192x256xbf16>, vector<64x256xf32> -> vector<64x256xf32>
    %c0_12 = arith.constant 0 : index
    %c0_13 = arith.constant 0 : index
    %30 = vector.load %arg5[%c0_12, %c0_13] : memref<1x256xf32, #tpu.memory_space<vmem>>, vector<1x256xf32>
    %31 = vector.broadcast %30 : vector<1x256xf32> to vector<64x256xf32>
    %32 = arith.addf %29, %31 : vector<64x256xf32>
    %cst_14 = arith.constant 0.000000e+00 : f32
    %33 = vector.broadcast %cst_14 : f32 to vector<64x256xf32>
    %34 = arith.maximumf %32, %33 : vector<64x256xf32>
    %35 = vector.extract_strided_slice %34 {offsets = [0, 0], sizes = [64, 128], strides = [1, 1]} : vector<64x256xf32> to vector<64x128xf32>
    %36 = vector.extract_strided_slice %34 {offsets = [0, 128], sizes = [64, 128], strides = [1, 1]} : vector<64x256xf32> to vector<64x128xf32>
    %37 = arith.maximumf %35, %36 : vector<64x128xf32>
    %38 = vector.shape_cast %37 : vector<64x128xf32> to vector<8x8x128xf32>
    %cst_15 = arith.constant 0.000000e+00 : f32
    %39 = vector.broadcast %cst_15 : f32 to vector<8x1x64xf32>
    %40 = vector.extract_strided_slice %38 {offsets = [0, 0, 64], sizes = [8, 7, 64], strides = [1, 1, 1]} : vector<8x8x128xf32> to vector<8x7x64xf32>
    %41 = tpu.concatenate %39, %40 in 1 : vector<8x1x64xf32>, vector<8x7x64xf32> -> vector<8x8x64xf32>
    %42 = vector.extract_strided_slice %38 {offsets = [0, 1, 0], sizes = [8, 7, 64], strides = [1, 1, 1]} : vector<8x8x128xf32> to vector<8x7x64xf32>
    %43 = tpu.concatenate %42, %39 in 1 : vector<8x7x64xf32>, vector<8x1x64xf32> -> vector<8x8x64xf32>
    %44 = tpu.concatenate %41, %38, %43 in 2 : vector<8x8x64xf32>, vector<8x8x128xf32>, vector<8x8x64xf32> -> vector<8x8x256xf32>
    %45 = vector.shape_cast %44 : vector<8x8x256xf32> to vector<64x256xf32>
    %46 = arith.truncf %45 : vector<64x256xf32> to vector<64x256xbf16>
    %c0_16 = arith.constant 0 : index
    %c0_17 = arith.constant 0 : index
    %47 = vector.load %arg6[%c0_16, %c0_17] : memref<256x256xbf16, #tpu.memory_space<vmem>>, vector<256x256xbf16>
    %cst_18 = arith.constant dense<0.000000e+00> : vector<64x256xf32>
    %48 = tpu.matmul %46, %47, %cst_18 {dimension_numbers = #tpu.dot_dimension_numbers<[1], [0], [0], [1], [0, 0, 1, 1], [], []>} : vector<64x256xbf16>, vector<256x256xbf16>, vector<64x256xf32> -> vector<64x256xf32>
    %c0_19 = arith.constant 0 : index
    %c0_20 = arith.constant 0 : index
    %49 = vector.load %arg7[%c0_19, %c0_20] : memref<1x256xf32, #tpu.memory_space<vmem>>, vector<1x256xf32>
    %50 = vector.broadcast %49 : vector<1x256xf32> to vector<64x256xf32>
    %51 = arith.addf %48, %50 : vector<64x256xf32>
    %cst_21 = arith.constant 0.000000e+00 : f32
    %52 = vector.broadcast %cst_21 : f32 to vector<64x256xf32>
    %53 = arith.maximumf %51, %52 : vector<64x256xf32>
    %54 = vector.extract_strided_slice %53 {offsets = [0, 0], sizes = [64, 128], strides = [1, 1]} : vector<64x256xf32> to vector<64x128xf32>
    %55 = vector.extract_strided_slice %53 {offsets = [0, 128], sizes = [64, 128], strides = [1, 1]} : vector<64x256xf32> to vector<64x128xf32>
    %56 = arith.maximumf %54, %55 : vector<64x128xf32>
    %57 = vector.shape_cast %56 : vector<64x128xf32> to vector<8x8x128xf32>
    %58 = vector.extract_strided_slice %57 {offsets = [0, 0, 0], sizes = [8, 1, 128], strides = [1, 1, 1]} : vector<8x8x128xf32> to vector<8x1x128xf32>
    %59 = vector.shape_cast %58 : vector<8x1x128xf32> to vector<8x128xf32>
    %60 = vector.extract_strided_slice %57 {offsets = [0, 1, 0], sizes = [8, 1, 128], strides = [1, 1, 1]} : vector<8x8x128xf32> to vector<8x1x128xf32>
    %61 = vector.shape_cast %60 : vector<8x1x128xf32> to vector<8x128xf32>
    %62 = vector.extract_strided_slice %57 {offsets = [0, 2, 0], sizes = [8, 1, 128], strides = [1, 1, 1]} : vector<8x8x128xf32> to vector<8x1x128xf32>
    %63 = vector.shape_cast %62 : vector<8x1x128xf32> to vector<8x128xf32>
    %64 = vector.extract_strided_slice %57 {offsets = [0, 3, 0], sizes = [8, 1, 128], strides = [1, 1, 1]} : vector<8x8x128xf32> to vector<8x1x128xf32>
    %65 = vector.shape_cast %64 : vector<8x1x128xf32> to vector<8x128xf32>
    %66 = vector.extract_strided_slice %57 {offsets = [0, 4, 0], sizes = [8, 1, 128], strides = [1, 1, 1]} : vector<8x8x128xf32> to vector<8x1x128xf32>
    %67 = vector.shape_cast %66 : vector<8x1x128xf32> to vector<8x128xf32>
    %68 = vector.extract_strided_slice %57 {offsets = [0, 5, 0], sizes = [8, 1, 128], strides = [1, 1, 1]} : vector<8x8x128xf32> to vector<8x1x128xf32>
    %69 = vector.shape_cast %68 : vector<8x1x128xf32> to vector<8x128xf32>
    %70 = vector.extract_strided_slice %57 {offsets = [0, 6, 0], sizes = [8, 1, 128], strides = [1, 1, 1]} : vector<8x8x128xf32> to vector<8x1x128xf32>
    %71 = vector.shape_cast %70 : vector<8x1x128xf32> to vector<8x128xf32>
    %72 = vector.extract_strided_slice %57 {offsets = [0, 7, 0], sizes = [8, 1, 128], strides = [1, 1, 1]} : vector<8x8x128xf32> to vector<8x1x128xf32>
    %73 = vector.shape_cast %72 : vector<8x1x128xf32> to vector<8x128xf32>
    %74 = tpu.concatenate %59, %61, %63, %65, %67, %69, %71, %73 in 1 : vector<8x128xf32>, vector<8x128xf32>, vector<8x128xf32>, vector<8x128xf32>, vector<8x128xf32>, vector<8x128xf32>, vector<8x128xf32>, vector<8x128xf32> -> vector<8x1024xf32>
    %75 = arith.truncf %74 : vector<8x1024xf32> to vector<8x1024xbf16>
    %c0_22 = arith.constant 0 : index
    %c0_23 = arith.constant 0 : index
    %76 = vector.load %arg8[%c0_22, %c0_23] : memref<1024x64xbf16, #tpu.memory_space<vmem>>, vector<1024x64xbf16>
    %cst_24 = arith.constant dense<0.000000e+00> : vector<8x64xf32>
    %77 = tpu.matmul %75, %76, %cst_24 {dimension_numbers = #tpu.dot_dimension_numbers<[1], [0], [0], [1], [0, 0, 1, 1], [], []>} : vector<8x1024xbf16>, vector<1024x64xbf16>, vector<8x64xf32> -> vector<8x64xf32>
    %c0_25 = arith.constant 0 : index
    %c0_26 = arith.constant 0 : index
    %78 = vector.load %arg9[%c0_25, %c0_26] : memref<1x64xf32, #tpu.memory_space<vmem>>, vector<1x64xf32>
    %79 = vector.broadcast %78 : vector<1x64xf32> to vector<8x64xf32>
    %80 = arith.addf %77, %79 : vector<8x64xf32>
    %cst_27 = arith.constant 0.000000e+00 : f32
    %81 = vector.broadcast %cst_27 : f32 to vector<8x64xf32>
    %82 = arith.maximumf %80, %81 : vector<8x64xf32>
    %83 = arith.truncf %82 : vector<8x64xf32> to vector<8x64xbf16>
    %c0_28 = arith.constant 0 : index
    %c0_29 = arith.constant 0 : index
    %84 = vector.load %arg10[%c0_28, %c0_29] : memref<64x32xbf16, #tpu.memory_space<vmem>>, vector<64x32xbf16>
    %cst_30 = arith.constant dense<0.000000e+00> : vector<8x32xf32>
    %85 = tpu.matmul %83, %84, %cst_30 {dimension_numbers = #tpu.dot_dimension_numbers<[1], [0], [0], [1], [0, 0, 1, 1], [], []>} : vector<8x64xbf16>, vector<64x32xbf16>, vector<8x32xf32> -> vector<8x32xf32>
    %c0_31 = arith.constant 0 : index
    %c0_32 = arith.constant 0 : index
    %86 = vector.load %arg11[%c0_31, %c0_32] : memref<1x32xf32, #tpu.memory_space<vmem>>, vector<1x32xf32>
    %87 = vector.broadcast %86 : vector<1x32xf32> to vector<8x32xf32>
    %88 = arith.addf %85, %87 : vector<8x32xf32>
    %cst_33 = arith.constant 0.000000e+00 : f32
    %89 = vector.broadcast %cst_33 : f32 to vector<8x32xf32>
    %90 = arith.maximumf %88, %89 : vector<8x32xf32>
    %91 = arith.truncf %90 : vector<8x32xf32> to vector<8x32xbf16>
    %c0_34 = arith.constant 0 : index
    %c0_35 = arith.constant 0 : index
    %92 = vector.load %arg12[%c0_34, %c0_35] : memref<32x16xbf16, #tpu.memory_space<vmem>>, vector<32x16xbf16>
    %cst_36 = arith.constant dense<0.000000e+00> : vector<8x16xf32>
    %93 = tpu.matmul %91, %92, %cst_36 {dimension_numbers = #tpu.dot_dimension_numbers<[1], [0], [0], [1], [0, 0, 1, 1], [], []>} : vector<8x32xbf16>, vector<32x16xbf16>, vector<8x16xf32> -> vector<8x16xf32>
    %c0_37 = arith.constant 0 : index
    %c0_38 = arith.constant 0 : index
    %94 = vector.load %arg13[%c0_37, %c0_38] : memref<1x16xf32, #tpu.memory_space<vmem>>, vector<1x16xf32>
    %95 = vector.broadcast %94 : vector<1x16xf32> to vector<8x16xf32>
    %96 = arith.addf %93, %95 : vector<8x16xf32>
    %c0_39 = arith.constant 0 : index
    %c0_40 = arith.constant 0 : index
    %97 = vector.load %arg14[%c0_39, %c0_40] : memref<8x16xf32, #tpu.memory_space<vmem>>, vector<8x16xf32>
    tpu.vector_store %arg14[%c0_39, %c0_40], %96 {strides = array<i32>} : memref<8x16xf32, #tpu.memory_space<vmem>>, vector<8x16xf32>,
    return
  }
  func.func @transform_0(%arg0: i32) -> (i32, i32, i32) {
    %c0_i32 = arith.constant 0 : i32
    %c0_i32_0 = arith.constant 0 : i32
    %c0_i32_1 = arith.constant 0 : i32
    return %arg0, %c0_i32, %c0_i32_0 : i32, i32, i32
  }
  func.func @transform_1(%arg0: i32) -> (i32, i32) {
    %c0_i32 = arith.constant 0 : i32
    %c0_i32_0 = arith.constant 0 : i32
    %c0_i32_1 = arith.constant 0 : i32
    return %c0_i32, %c0_i32_0 : i32, i32
  }
  func.func @transform_2(%arg0: i32) -> (i32, i32) {
    %c0_i32 = arith.constant 0 : i32
    %c0_i32_0 = arith.constant 0 : i32
    %c0_i32_1 = arith.constant 0 : i32
    return %c0_i32, %c0_i32_0 : i32, i32
  }
  func.func @transform_3(%arg0: i32) -> (i32, i32) {
    %c0_i32 = arith.constant 0 : i32
    %c0_i32_0 = arith.constant 0 : i32
    %c0_i32_1 = arith.constant 0 : i32
    return %c0_i32, %c0_i32_0 : i32, i32
  }
  func.func @transform_4(%arg0: i32) -> (i32, i32) {
    %c0_i32 = arith.constant 0 : i32
    %c0_i32_0 = arith.constant 0 : i32
    %c0_i32_1 = arith.constant 0 : i32
    return %c0_i32, %c0_i32_0 : i32, i32
  }
  func.func @transform_5(%arg0: i32) -> (i32, i32) {
    %c0_i32 = arith.constant 0 : i32
    %c0_i32_0 = arith.constant 0 : i32
    %c0_i32_1 = arith.constant 0 : i32
    return %c0_i32, %c0_i32_0 : i32, i32
  }
  func.func @transform_6(%arg0: i32) -> (i32, i32) {
    %c0_i32 = arith.constant 0 : i32
    %c0_i32_0 = arith.constant 0 : i32
    %c0_i32_1 = arith.constant 0 : i32
    return %c0_i32, %c0_i32_0 : i32, i32
  }
  func.func @transform_7(%arg0: i32) -> (i32, i32) {
    %c0_i32 = arith.constant 0 : i32
    %c0_i32_0 = arith.constant 0 : i32
    %c0_i32_1 = arith.constant 0 : i32
    return %c0_i32, %c0_i32_0 : i32, i32
  }
  func.func @transform_8(%arg0: i32) -> (i32, i32) {
    %c0_i32 = arith.constant 0 : i32
    %c0_i32_0 = arith.constant 0 : i32
    %c0_i32_1 = arith.constant 0 : i32
    return %c0_i32, %c0_i32_0 : i32, i32
  }
  func.func @transform_9(%arg0: i32) -> (i32, i32) {
    %c0_i32 = arith.constant 0 : i32
    %c0_i32_0 = arith.constant 0 : i32
    %c0_i32_1 = arith.constant 0 : i32
    return %c0_i32, %c0_i32_0 : i32, i32
  }
  func.func @transform_10(%arg0: i32) -> (i32, i32) {
    %c0_i32 = arith.constant 0 : i32
    %c0_i32_0 = arith.constant 0 : i32
    %c0_i32_1 = arith.constant 0 : i32
    return %c0_i32, %c0_i32_0 : i32, i32
  }
  func.func @transform_11(%arg0: i32) -> (i32, i32) {
    %c0_i32 = arith.constant 0 : i32
    %c0_i32_0 = arith.constant 0 : i32
    %c0_i32_1 = arith.constant 0 : i32
    return %c0_i32, %c0_i32_0 : i32, i32
  }
  func.func @transform_12(%arg0: i32) -> (i32, i32) {
    %c0_i32 = arith.constant 0 : i32
    %c0_i32_0 = arith.constant 0 : i32
    %c0_i32_1 = arith.constant 0 : i32
    return %c0_i32, %c0_i32_0 : i32, i32
  }
  func.func @transform_13(%arg0: i32) -> (i32, i32) {
    %c0_i32 = arith.constant 0 : i32
    %c0_i32_0 = arith.constant 0 : i32
    return %arg0, %c0_i32 : i32, i32
  }
}

module attributes {stable_mosaic.version = 11 : i64} {
  func.func @_fused_forward_kernel(%arg0: i32, %arg1: memref<8x8x8xf32, #tpu.memory_space<vmem>>, %arg2: memref<24x256xbf16, #tpu.memory_space<vmem>>, %arg3: memref<1x256xf32, #tpu.memory_space<vmem>>, %arg4: memref<192x256xbf16, #tpu.memory_space<vmem>>, %arg5: memref<1x256xf32, #tpu.memory_space<vmem>>, %arg6: memref<256x256xbf16, #tpu.memory_space<vmem>>, %arg7: memref<1x256xf32, #tpu.memory_space<vmem>>, %arg8: memref<1024x64xbf16, #tpu.memory_space<vmem>>, %arg9: memref<1x64xf32, #tpu.memory_space<vmem>>, %arg10: memref<64x32xbf16, #tpu.memory_space<vmem>>, %arg11: memref<1x32xf32, #tpu.memory_space<vmem>>, %arg12: memref<32x16xbf16, #tpu.memory_space<vmem>>, %arg13: memref<1x16xf32, #tpu.memory_space<vmem>>, %arg14: memref<8x16xf32, #tpu.memory_space<vmem>>) attributes {dimension_semantics = [#tpu.dimension_semantics<parallel>], iteration_bounds = array<i64: 2>, scalar_prefetch = 0 : i64, scratch_operands = 0 : i64, tpu.core_type = #tpu.core_type<tc>, window_params = [{transform_indices = @transform_0, window_bounds = array<i64: 8, 8, 8>}, {pipeline_mode = #tpu.pipeline_mode<synchronous>, transform_indices = @transform_1, window_bounds = array<i64: 24, 256>}, {pipeline_mode = #tpu.pipeline_mode<synchronous>, transform_indices = @transform_2, window_bounds = array<i64: 1, 256>}, {pipeline_mode = #tpu.pipeline_mode<synchronous>, transform_indices = @transform_3, window_bounds = array<i64: 192, 256>}, {pipeline_mode = #tpu.pipeline_mode<synchronous>, transform_indices = @transform_4, window_bounds = array<i64: 1, 256>}, {pipeline_mode = #tpu.pipeline_mode<synchronous>, transform_indices = @transform_5, window_bounds = array<i64: 256, 256>}, {pipeline_mode = #tpu.pipeline_mode<synchronous>, transform_indices = @transform_6, window_bounds = array<i64: 1, 256>}, {pipeline_mode = #tpu.pipeline_mode<synchronous>, transform_indices = @transform_7, window_bounds = array<i64: 1024, 64>}, {pipeline_mode = #tpu.pipeline_mode<synchronous>, transform_indices = @transform_8, window_bounds = array<i64: 1, 64>}, {pipeline_mode = #tpu.pipeline_mode<synchronous>, transform_indices = @transform_9, window_bounds = array<i64: 64, 32>}, {pipeline_mode = #tpu.pipeline_mode<synchronous>, transform_indices = @transform_10, window_bounds = array<i64: 1, 32>}, {pipeline_mode = #tpu.pipeline_mode<synchronous>, transform_indices = @transform_11, window_bounds = array<i64: 32, 16>}, {pipeline_mode = #tpu.pipeline_mode<synchronous>, transform_indices = @transform_12, window_bounds = array<i64: 1, 16>}, {transform_indices = @transform_13, window_bounds = array<i64: 8, 16>}]} {
    %c0 = arith.constant 0 : index
    %c0_0 = arith.constant 0 : index
    %c0_1 = arith.constant 0 : index
    %0 = vector.load %arg1[%c0, %c0_0, %c0_1] : memref<8x8x8xf32, #tpu.memory_space<vmem>>, vector<8x8x8xf32>
    %cst = arith.constant 0.000000e+00 : f32
    %1 = vector.broadcast %cst : f32 to vector<8x1x8xf32>
    %2 = vector.extract_strided_slice %0 {offsets = [0, 0, 0], sizes = [8, 7, 8], strides = [1, 1, 1]} : vector<8x8x8xf32> to vector<8x7x8xf32>
    %3 = tpu.concatenate %1, %2 in 1 : vector<8x1x8xf32>, vector<8x7x8xf32> -> vector<8x8x8xf32>
    %4 = vector.extract_strided_slice %0 {offsets = [0, 1, 0], sizes = [8, 7, 8], strides = [1, 1, 1]} : vector<8x8x8xf32> to vector<8x7x8xf32>
    %5 = tpu.concatenate %4, %1 in 1 : vector<8x7x8xf32>, vector<8x1x8xf32> -> vector<8x8x8xf32>
    %6 = tpu.concatenate %3, %0, %5 in 2 : vector<8x8x8xf32>, vector<8x8x8xf32>, vector<8x8x8xf32> -> vector<8x8x24xf32>
    %7 = vector.shape_cast %6 : vector<8x8x24xf32> to vector<64x24xf32>
    %8 = arith.truncf %7 : vector<64x24xf32> to vector<64x24xbf16>
    %c0_2 = arith.constant 0 : index
    %c0_3 = arith.constant 0 : index
    %9 = vector.load %arg2[%c0_2, %c0_3] : memref<24x256xbf16, #tpu.memory_space<vmem>>, vector<24x256xbf16>
    %cst_4 = arith.constant dense<0.000000e+00> : vector<64x256xf32>
    %10 = tpu.matmul %8, %9, %cst_4 {dimension_numbers = #tpu.dot_dimension_numbers<[1], [0], [0], [1], [0, 0, 1, 1], [], []>} : vector<64x24xbf16>, vector<24x256xbf16>, vector<64x256xf32> -> vector<64x256xf32>
    %c0_5 = arith.constant 0 : index
    %c0_6 = arith.constant 0 : index
    %11 = vector.load %arg3[%c0_5, %c0_6] : memref<1x256xf32, #tpu.memory_space<vmem>>, vector<1x256xf32>
    %12 = vector.broadcast %11 : vector<1x256xf32> to vector<64x256xf32>
    %13 = arith.addf %10, %12 : vector<64x256xf32>
    %cst_7 = arith.constant 0.000000e+00 : f32
    %14 = vector.broadcast %cst_7 : f32 to vector<64x256xf32>
    %15 = arith.maximumf %13, %14 : vector<64x256xf32>
    %16 = vector.extract_strided_slice %15 {offsets = [0, 0], sizes = [64, 128], strides = [1, 1]} : vector<64x256xf32> to vector<64x128xf32>
    %17 = vector.extract_strided_slice %15 {offsets = [0, 128], sizes = [64, 128], strides = [1, 1]} : vector<64x256xf32> to vector<64x128xf32>
    %18 = arith.maximumf %16, %17 : vector<64x128xf32>
    %19 = vector.shape_cast %18 : vector<64x128xf32> to vector<8x8x128xf32>
    %cst_8 = arith.constant 0.000000e+00 : f32
    %20 = vector.broadcast %cst_8 : f32 to vector<8x1x32xf32>
    %21 = vector.extract_strided_slice %19 {offsets = [0, 0, 96], sizes = [8, 7, 32], strides = [1, 1, 1]} : vector<8x8x128xf32> to vector<8x7x32xf32>
    %22 = tpu.concatenate %20, %21 in 1 : vector<8x1x32xf32>, vector<8x7x32xf32> -> vector<8x8x32xf32>
    %23 = vector.extract_strided_slice %19 {offsets = [0, 1, 0], sizes = [8, 7, 32], strides = [1, 1, 1]} : vector<8x8x128xf32> to vector<8x7x32xf32>
    %24 = tpu.concatenate %23, %20 in 1 : vector<8x7x32xf32>, vector<8x1x32xf32> -> vector<8x8x32xf32>
    %25 = tpu.concatenate %22, %19, %24 in 2 : vector<8x8x32xf32>, vector<8x8x128xf32>, vector<8x8x32xf32> -> vector<8x8x192xf32>
    %26 = vector.shape_cast %25 : vector<8x8x192xf32> to vector<64x192xf32>
    %27 = arith.truncf %26 : vector<64x192xf32> to vector<64x192xbf16>
    %c0_9 = arith.constant 0 : index
    %c0_10 = arith.constant 0 : index
    %28 = vector.load %arg4[%c0_9, %c0_10] : memref<192x256xbf16, #tpu.memory_space<vmem>>, vector<192x256xbf16>
    %cst_11 = arith.constant dense<0.000000e+00> : vector<64x256xf32>
    %29 = tpu.matmul %27, %28, %cst_11 {dimension_numbers = #tpu.dot_dimension_numbers<[1], [0], [0], [1], [0, 0, 1, 1], [], []>} : vector<64x192xbf16>, vector<192x256xbf16>, vector<64x256xf32> -> vector<64x256xf32>
    %c0_12 = arith.constant 0 : index
    %c0_13 = arith.constant 0 : index
    %30 = vector.load %arg5[%c0_12, %c0_13] : memref<1x256xf32, #tpu.memory_space<vmem>>, vector<1x256xf32>
    %31 = vector.broadcast %30 : vector<1x256xf32> to vector<64x256xf32>
    %32 = arith.addf %29, %31 : vector<64x256xf32>
    %cst_14 = arith.constant 0.000000e+00 : f32
    %33 = vector.broadcast %cst_14 : f32 to vector<64x256xf32>
    %34 = arith.maximumf %32, %33 : vector<64x256xf32>
    %35 = vector.extract_strided_slice %34 {offsets = [0, 0], sizes = [64, 128], strides = [1, 1]} : vector<64x256xf32> to vector<64x128xf32>
    %36 = vector.extract_strided_slice %34 {offsets = [0, 128], sizes = [64, 128], strides = [1, 1]} : vector<64x256xf32> to vector<64x128xf32>
    %37 = arith.maximumf %35, %36 : vector<64x128xf32>
    %38 = vector.shape_cast %37 : vector<64x128xf32> to vector<8x8x128xf32>
    %cst_15 = arith.constant 0.000000e+00 : f32
    %39 = vector.broadcast %cst_15 : f32 to vector<8x1x64xf32>
    %40 = vector.extract_strided_slice %38 {offsets = [0, 0, 64], sizes = [8, 7, 64], strides = [1, 1, 1]} : vector<8x8x128xf32> to vector<8x7x64xf32>
    %41 = tpu.concatenate %39, %40 in 1 : vector<8x1x64xf32>, vector<8x7x64xf32> -> vector<8x8x64xf32>
    %42 = vector.extract_strided_slice %38 {offsets = [0, 1, 0], sizes = [8, 7, 64], strides = [1, 1, 1]} : vector<8x8x128xf32> to vector<8x7x64xf32>
    %43 = tpu.concatenate %42, %39 in 1 : vector<8x7x64xf32>, vector<8x1x64xf32> -> vector<8x8x64xf32>
    %44 = tpu.concatenate %41, %38, %43 in 2 : vector<8x8x64xf32>, vector<8x8x128xf32>, vector<8x8x64xf32> -> vector<8x8x256xf32>
    %45 = vector.shape_cast %44 : vector<8x8x256xf32> to vector<64x256xf32>
    %46 = arith.truncf %45 : vector<64x256xf32> to vector<64x256xbf16>
    %c0_16 = arith.constant 0 : index
    %c0_17 = arith.constant 0 : index
    %47 = vector.load %arg6[%c0_16, %c0_17] : memref<256x256xbf16, #tpu.memory_space<vmem>>, vector<256x256xbf16>
    %cst_18 = arith.constant dense<0.000000e+00> : vector<64x256xf32>
    %48 = tpu.matmul %46, %47, %cst_18 {dimension_numbers = #tpu.dot_dimension_numbers<[1], [0], [0], [1], [0, 0, 1, 1], [], []>} : vector<64x256xbf16>, vector<256x256xbf16>, vector<64x256xf32> -> vector<64x256xf32>
    %c0_19 = arith.constant 0 : index
    %c0_20 = arith.constant 0 : index
    %49 = vector.load %arg7[%c0_19, %c0_20] : memref<1x256xf32, #tpu.memory_space<vmem>>, vector<1x256xf32>
    %50 = vector.broadcast %49 : vector<1x256xf32> to vector<64x256xf32>
    %51 = arith.addf %48, %50 : vector<64x256xf32>
    %cst_21 = arith.constant 0.000000e+00 : f32
    %52 = vector.broadcast %cst_21 : f32 to vector<64x256xf32>
    %53 = arith.maximumf %51, %52 : vector<64x256xf32>
    %54 = vector.extract_strided_slice %53 {offsets = [0, 0], sizes = [64, 128], strides = [1, 1]} : vector<64x256xf32> to vector<64x128xf32>
    %55 = vector.extract_strided_slice %53 {offsets = [0, 128], sizes = [64, 128], strides = [1, 1]} : vector<64x256xf32> to vector<64x128xf32>
    %56 = arith.maximumf %54, %55 : vector<64x128xf32>
    %57 = vector.shape_cast %56 : vector<64x128xf32> to vector<8x8x128xf32>
    %58 = vector.extract_strided_slice %57 {offsets = [0, 0, 0], sizes = [8, 1, 128], strides = [1, 1, 1]} : vector<8x8x128xf32> to vector<8x1x128xf32>
    %59 = vector.shape_cast %58 : vector<8x1x128xf32> to vector<8x128xf32>
    %60 = vector.extract_strided_slice %57 {offsets = [0, 1, 0], sizes = [8, 1, 128], strides = [1, 1, 1]} : vector<8x8x128xf32> to vector<8x1x128xf32>
    %61 = vector.shape_cast %60 : vector<8x1x128xf32> to vector<8x128xf32>
    %62 = vector.extract_strided_slice %57 {offsets = [0, 2, 0], sizes = [8, 1, 128], strides = [1, 1, 1]} : vector<8x8x128xf32> to vector<8x1x128xf32>
    %63 = vector.shape_cast %62 : vector<8x1x128xf32> to vector<8x128xf32>
    %64 = vector.extract_strided_slice %57 {offsets = [0, 3, 0], sizes = [8, 1, 128], strides = [1, 1, 1]} : vector<8x8x128xf32> to vector<8x1x128xf32>
    %65 = vector.shape_cast %64 : vector<8x1x128xf32> to vector<8x128xf32>
    %66 = vector.extract_strided_slice %57 {offsets = [0, 4, 0], sizes = [8, 1, 128], strides = [1, 1, 1]} : vector<8x8x128xf32> to vector<8x1x128xf32>
    %67 = vector.shape_cast %66 : vector<8x1x128xf32> to vector<8x128xf32>
    %68 = vector.extract_strided_slice %57 {offsets = [0, 5, 0], sizes = [8, 1, 128], strides = [1, 1, 1]} : vector<8x8x128xf32> to vector<8x1x128xf32>
    %69 = vector.shape_cast %68 : vector<8x1x128xf32> to vector<8x128xf32>
    %70 = vector.extract_strided_slice %57 {offsets = [0, 6, 0], sizes = [8, 1, 128], strides = [1, 1, 1]} : vector<8x8x128xf32> to vector<8x1x128xf32>
    %71 = vector.shape_cast %70 : vector<8x1x128xf32> to vector<8x128xf32>
    %72 = vector.extract_strided_slice %57 {offsets = [0, 7, 0], sizes = [8, 1, 128], strides = [1, 1, 1]} : vector<8x8x128xf32> to vector<8x1x128xf32>
    %73 = vector.shape_cast %72 : vector<8x1x128xf32> to vector<8x128xf32>
    %74 = tpu.concatenate %59, %61, %63, %65, %67, %69, %71, %73 in 1 : vector<8x128xf32>, vector<8x128xf32>, vector<8x128xf32>, vector<8x128xf32>, vector<8x128xf32>, vector<8x128xf32>, vector<8x128xf32>, vector<8x128xf32> -> vector<8x1024xf32>
    %75 = arith.truncf %74 : vector<8x1024xf32> to vector<8x1024xbf16>
    %c0_22 = arith.constant 0 : index
    %c0_23 = arith.constant 0 : index
    %76 = vector.load %arg8[%c0_22, %c0_23] : memref<1024x64xbf16, #tpu.memory_space<vmem>>, vector<1024x64xbf16>
    %cst_24 = arith.constant dense<0.000000e+00> : vector<8x64xf32>
    %77 = tpu.matmul %75, %76, %cst_24 {dimension_numbers = #tpu.dot_dimension_numbers<[1], [0], [0], [1], [0, 0, 1, 1], [], []>} : vector<8x1024xbf16>, vector<1024x64xbf16>, vector<8x64xf32> -> vector<8x64xf32>
    %c0_25 = arith.constant 0 : index
    %c0_26 = arith.constant 0 : index
    %78 = vector.load %arg9[%c0_25, %c0_26] : memref<1x64xf32, #tpu.memory_space<vmem>>, vector<1x64xf32>
    %79 = vector.broadcast %78 : vector<1x64xf32> to vector<8x64xf32>
    %80 = arith.addf %77, %79 : vector<8x64xf32>
    %cst_27 = arith.constant 0.000000e+00 : f32
    %81 = vector.broadcast %cst_27 : f32 to vector<8x64xf32>
    %82 = arith.maximumf %80, %81 : vector<8x64xf32>
    %83 = arith.truncf %82 : vector<8x64xf32> to vector<8x64xbf16>
    %c0_28 = arith.constant 0 : index
    %c0_29 = arith.constant 0 : index
    %84 = vector.load %arg10[%c0_28, %c0_29] : memref<64x32xbf16, #tpu.memory_space<vmem>>, vector<64x32xbf16>
    %cst_30 = arith.constant dense<0.000000e+00> : vector<8x32xf32>
    %85 = tpu.matmul %83, %84, %cst_30 {dimension_numbers = #tpu.dot_dimension_numbers<[1], [0], [0], [1], [0, 0, 1, 1], [], []>} : vector<8x64xbf16>, vector<64x32xbf16>, vector<8x32xf32> -> vector<8x32xf32>
    %c0_31 = arith.constant 0 : index
    %c0_32 = arith.constant 0 : index
    %86 = vector.load %arg11[%c0_31, %c0_32] : memref<1x32xf32, #tpu.memory_space<vmem>>, vector<1x32xf32>
    %87 = vector.broadcast %86 : vector<1x32xf32> to vector<8x32xf32>
    %88 = arith.addf %85, %87 : vector<8x32xf32>
    %cst_33 = arith.constant 0.000000e+00 : f32
    %89 = vector.broadcast %cst_33 : f32 to vector<8x32xf32>
    %90 = arith.maximumf %88, %89 : vector<8x32xf32>
    %91 = arith.truncf %90 : vector<8x32xf32> to vector<8x32xbf16>
    %c0_34 = arith.constant 0 : index
    %c0_35 = arith.constant 0 : index
    %92 = vector.load %arg12[%c0_34, %c0_35] : memref<32x16xbf16, #tpu.memory_space<vmem>>, vector<32x16xbf16>
    %cst_36 = arith.constant dense<0.000000e+00> : vector<8x16xf32>
    %93 = tpu.matmul %91, %92, %cst_36 {dimension_numbers = #tpu.dot_dimension_numbers<[1], [0], [0], [1], [0, 0, 1, 1], [], []>} : vector<8x32xbf16>, vector<32x16xbf16>, vector<8x16xf32> -> vector<8x16xf32>
    %c0_37 = arith.constant 0 : index
    %c0_38 = arith.constant 0 : index
    %94 = vector.load %arg13[%c0_37, %c0_38] : memref<1x16xf32, #tpu.memory_space<vmem>>, vector<1x16xf32>
    %95 = vector.broadcast %94 : vector<1x16xf32> to vector<8x16xf32>
    %96 = arith.addf %93, %95 : vector<8x16xf32>
    %c0_39 = arith.constant 0 : index
    %c0_40 = arith.constant 0 : index
    %97 = vector.load %arg14[%c0_39, %c0_40] : memref<8x16xf32, #tpu.memory_space<vmem>>, vector<8x16xf32>
    tpu.vector_store %arg14[%c0_39, %c0_40], %96 {strides = array<i32>} : memref<8x16xf32, #tpu.memory_space<vmem>>, vector<8x16xf32>,
    return
  }
  func.func @transform_0(%arg0: i32) -> (i32, i32, i32) {
    %c0_i32 = arith.constant 0 : i32
    %c0_i32_0 = arith.constant 0 : i32
    %c0_i32_1 = arith.constant 0 : i32
    return %arg0, %c0_i32, %c0_i32_0 : i32, i32, i32
  }
  func.func @transform_1(%arg0: i32) -> (i32, i32) {
    %c0_i32 = arith.constant 0 : i32
    %c0_i32_0 = arith.constant 0 : i32
    %c0_i32_1 = arith.constant 0 : i32
    return %c0_i32, %c0_i32_0 : i32, i32
  }
  func.func @transform_2(%arg0: i32) -> (i32, i32) {
    %c0_i32 = arith.constant 0 : i32
    %c0_i32_0 = arith.constant 0 : i32
    %c0_i32_1 = arith.constant 0 : i32
    return %c0_i32, %c0_i32_0 : i32, i32
  }
  func.func @transform_3(%arg0: i32) -> (i32, i32) {
    %c0_i32 = arith.constant 0 : i32
    %c0_i32_0 = arith.constant 0 : i32
    %c0_i32_1 = arith.constant 0 : i32
    return %c0_i32, %c0_i32_0 : i32, i32
  }
  func.func @transform_4(%arg0: i32) -> (i32, i32) {
    %c0_i32 = arith.constant 0 : i32
    %c0_i32_0 = arith.constant 0 : i32
    %c0_i32_1 = arith.constant 0 : i32
    return %c0_i32, %c0_i32_0 : i32, i32
  }
  func.func @transform_5(%arg0: i32) -> (i32, i32) {
    %c0_i32 = arith.constant 0 : i32
    %c0_i32_0 = arith.constant 0 : i32
    %c0_i32_1 = arith.constant 0 : i32
    return %c0_i32, %c0_i32_0 : i32, i32
  }
  func.func @transform_6(%arg0: i32) -> (i32, i32) {
    %c0_i32 = arith.constant 0 : i32
    %c0_i32_0 = arith.constant 0 : i32
    %c0_i32_1 = arith.constant 0 : i32
    return %c0_i32, %c0_i32_0 : i32, i32
  }
  func.func @transform_7(%arg0: i32) -> (i32, i32) {
    %c0_i32 = arith.constant 0 : i32
    %c0_i32_0 = arith.constant 0 : i32
    %c0_i32_1 = arith.constant 0 : i32
    return %c0_i32, %c0_i32_0 : i32, i32
  }
  func.func @transform_8(%arg0: i32) -> (i32, i32) {
    %c0_i32 = arith.constant 0 : i32
    %c0_i32_0 = arith.constant 0 : i32
    %c0_i32_1 = arith.constant 0 : i32
    return %c0_i32, %c0_i32_0 : i32, i32
  }
  func.func @transform_9(%arg0: i32) -> (i32, i32) {
    %c0_i32 = arith.constant 0 : i32
    %c0_i32_0 = arith.constant 0 : i32
    %c0_i32_1 = arith.constant 0 : i32
    return %c0_i32, %c0_i32_0 : i32, i32
  }
  func.func @transform_10(%arg0: i32) -> (i32, i32) {
    %c0_i32 = arith.constant 0 : i32
    %c0_i32_0 = arith.constant 0 : i32
    %c0_i32_1 = arith.constant 0 : i32
    return %c0_i32, %c0_i32_0 : i32, i32
  }
  func.func @transform_11(%arg0: i32) -> (i32, i32) {
    %c0_i32 = arith.constant 0 : i32
    %c0_i32_0 = arith.constant 0 : i32
    %c0_i32_1 = arith.constant 0 : i32
    return %c0_i32, %c0_i32_0 : i32, i32
  }
  func.func @transform_12(%arg0: i32) -> (i32, i32) {
    %c0_i32 = arith.constant 0 : i32
    %c0_i32_0 = arith.constant 0 : i32
    %c0_i32_1 = arith.constant 0 : i32
    return %c0_i32, %c0_i32_0 : i32, i32
  }
  func.func @transform_13(%arg0: i32) -> (i32, i32) {
    %c0_i32 = arith.constant 0 : i32
    %c0_i32_0 = arith.constant 0 : i32
    return %arg0, %c0_i32 : i32, i32
  }
}

</mosaic_0001>

<llo_original>
// kernel: tpu_custom_call.1
$region0: #{tpu_custom_call.1}
  #allocation0 [shape = 'u32[]', space=smem, size = 0x4, offset = 0x4, fixed_abs, tag = 'smem constant byte address 0x4 - core index']
  #allocation1 [shape = 'u32[144,128]{1,0:T(1,128)}', space=vmem, size = 0x12000, scoped, tag = 'internal scratch']
  %s0 = inlined_call_operand.vmem [shape: f32[16,8,8], index: 0, kind: input, shape index: {}]
  %s1 = inlined_call_operand.vmem [shape: bf16[24,256], index: 1, kind: input, shape index: {}]
  %s2 = inlined_call_operand.vmem [shape: f32[1,256], index: 2, kind: input, shape index: {}]
  %s3 = inlined_call_operand.vmem [shape: bf16[192,256], index: 3, kind: input, shape index: {}]
  %s4 = inlined_call_operand.vmem [shape: f32[1,256], index: 4, kind: input, shape index: {}]
  %s5 = inlined_call_operand.vmem [shape: bf16[256,256], index: 5, kind: input, shape index: {}]
  %s6 = inlined_call_operand.vmem [shape: f32[1,256], index: 6, kind: input, shape index: {}]
  %s7 = inlined_call_operand.vmem [shape: bf16[1024,64], index: 7, kind: input, shape index: {}]
  %s8 = inlined_call_operand.vmem [shape: f32[1,64], index: 8, kind: input, shape index: {}]
  %s9 = inlined_call_operand.vmem [shape: bf16[64,32], index: 9, kind: input, shape index: {}]
  %s10 = inlined_call_operand.vmem [shape: f32[1,32], index: 10, kind: input, shape index: {}]
  %s11 = inlined_call_operand.vmem [shape: bf16[32,16], index: 11, kind: input, shape index: {}]
  %s12 = inlined_call_operand.vmem [shape: f32[1,16], index: 12, kind: input, shape index: {}]
  %s13 = inlined_call_operand.hbm [shape: f32[16,16], index: 13, kind: output, shape index: {}]
  %s14 = sld [smem:[#allocation0]]
  $region85: #{tpu_custom_call.1} parent=0
    _
  %s16 = ssub.s32 1, %s14
  %s17 = scalar_select 0, %s16, %s14
  $region1: #{tpu_custom_call.1} parent=0
    #allocation2 [shape = 'u8[8192]{0}', space=vmem, size = 0x2000, scoped, tag = 'output window, operand 0']
    #allocation3 [shape = 's32[2]{0}', space=sflag, size = 0x8, scoped, tag = 'scoped memory for tpu_custom_call.1']
    %18 = vsyncpa [#allocation3], 0
    %s19 = scalar_lea.sflag [#allocation3], 1
    %20 = vsyncpa %s19, 0
    loop: start=0, step=1, limit=4
    $region2: #{tpu_custom_call.1} parent=1 // loop_pre_header
      _
    $region3: #{tpu_custom_call.1} parent=1 // loop_header
      %s22 = sphi 0, %s26
      %p23 = scmp.ge.s32.totalorder %s22, 4
      %s32 = sphi 0, %s34
      %s35 = sphi 0, %s32
      %s36 = sphi 0, %s35
      %s52 = sphi 0, %s36
      %s56 = sphi 0, %s56
      %s58 = sphi 0, %s56
      %s59 = sphi 0, %s58
      %s73 = sphi 0, %s59
      %s77 = sphi 0, %s77
      %s79 = sphi 0, %s77
      %s80 = sphi 0, %s79
      %s94 = sphi 0, %s80
      %s98 = sphi 0, %s98
      %s100 = sphi 0, %s98
      %s101 = sphi 0, %s100
      %s115 = sphi 0, %s101
      %s119 = sphi 0, %s119
      %s121 = sphi 0, %s119
      %s122 = sphi 0, %s121
      %s136 = sphi 0, %s122
      %s140 = sphi 0, %s140
      %s142 = sphi 0, %s140
      %s143 = sphi 0, %s142
      %s157 = sphi 0, %s143
      %s161 = sphi 0, %s161
      %s163 = sphi 0, %s161
      %s164 = sphi 0, %s163
      %s178 = sphi 0, %s164
      %s182 = sphi 0, %s182
      %s184 = sphi 0, %s182
      %s185 = sphi 0, %s184
      %s199 = sphi 0, %s185
      %s203 = sphi 0, %s203
      %s205 = sphi 0, %s203
      %s206 = sphi 0, %s205
      %s220 = sphi 0, %s206
      %s224 = sphi 0, %s224
      %s226 = sphi 0, %s224
      %s227 = sphi 0, %s226
      %s241 = sphi 0, %s227
      %s245 = sphi 0, %s245
      %s247 = sphi 0, %s245
      %s248 = sphi 0, %s247
      %s262 = sphi 0, %s248
      %s266 = sphi 0, %s266
      %s268 = sphi 0, %s266
      %s269 = sphi 0, %s268
      %s283 = sphi 0, %s269
      %s287 = sphi 0, %s287
      %s289 = sphi 0, %s287
      %s290 = sphi 0, %s289
      %s304 = sphi 0, %s290
      %s310 = sphi 0, %s312
      %s313 = sphi 0, %s310
      %s314 = sphi 0, %s313
      %s330 = sphi 0, %s314
    $region4: #{tpu_custom_call.1} parent=1 // loop_header_branch
      %25 = sbr.rel (%p23) target = $region8
    $region5: #{tpu_custom_call.1} parent=1 // loop_body
      %s27 = ssub.s32 %s22, 1
      %s28 = ssub.s32 %s22, 2
      %s29 = sadd.s32 %s22, 1
      %s30 = ssub.s32 %s22, %s29
      %p31 = scmp.eq.s32.totalorder %s30, 0
      %s33 = sadd.s32 %s32, 1
      %s34 = scalar_select %p31, %s32, %s33
      %p37 = pneg %p31
      %p38 = scmp.eq.s32.totalorder %s22, 1
      %p39 = por %p37, %p38
      %p40 = scmp.ne.s32.totalorder %s32, %s35
      %p41 = scmp.eq.s32.totalorder %s22, 0
      %p42 = por %p40, %p41
      %p43 = scmp.ne.s32.totalorder %s32, %s35
      %p44 = scmp.eq.s32.totalorder %s27, 1
      %p45 = por %p43, %p44
      %p46 = scmp.ne.s32.totalorder %s35, %s36
      %p47 = scmp.eq.s32.totalorder %s27, 0
      %p48 = por %p46, %p47
      %p49 = scmp.ne.s32.totalorder %s35, %s36
      %p50 = scmp.eq.s32.totalorder %s28, 1
      %p51 = por %p49, %p50
      %p53 = scmp.ne.s32.totalorder %s36, %s52
      %p54 = scmp.eq.s32.totalorder %s28, 0
      %p55 = por %p53, %p54
      %s57 = sadd.s32 %s56, 1
      %p60 = scmp.eq.s32.totalorder %s22, 1
      %p61 = scmp.ne.s32.totalorder %s56, %s58
      %p62 = scmp.eq.s32.totalorder %s22, 0
      %p63 = por %p61, %p62
      %p64 = scmp.ne.s32.totalorder %s56, %s58
      %p65 = scmp.eq.s32.totalorder %s27, 1
      %p66 = por %p64, %p65
      %p67 = scmp.ne.s32.totalorder %s58, %s59
      %p68 = scmp.eq.s32.totalorder %s27, 0
      %p69 = por %p67, %p68
      %p70 = scmp.ne.s32.totalorder %s58, %s59
      %p71 = scmp.eq.s32.totalorder %s28, 1
      %p72 = por %p70, %p71
      %p74 = scmp.ne.s32.totalorder %s59, %s73
      %p75 = scmp.eq.s32.totalorder %s28, 0
      %p76 = por %p74, %p75
      %s78 = sadd.s32 %s77, 1
      %p81 = scmp.eq.s32.totalorder %s22, 1
      %p82 = scmp.ne.s32.totalorder %s77, %s79
      %p83 = scmp.eq.s32.totalorder %s22, 0
      %p84 = por %p82, %p83
      %p85 = scmp.ne.s32.totalorder %s77, %s79
      %p86 = scmp.eq.s32.totalorder %s27, 1
      %p87 = por %p85, %p86
      %p88 = scmp.ne.s32.totalorder %s79, %s80
      %p89 = scmp.eq.s32.totalorder %s27, 0
      %p90 = por %p88, %p89
      %p91 = scmp.ne.s32.totalorder %s79, %s80
      %p92 = scmp.eq.s32.totalorder %s28, 1
      %p93 = por %p91, %p92
      %p95 = scmp.ne.s32.totalorder %s80, %s94
      %p96 = scmp.eq.s32.totalorder %s28, 0
      %p97 = por %p95, %p96
      %s99 = sadd.s32 %s98, 1
      %p102 = scmp.eq.s32.totalorder %s22, 1
      %p103 = scmp.ne.s32.totalorder %s98, %s100
      %p104 = scmp.eq.s32.totalorder %s22, 0
      %p105 = por %p103, %p104
      %p106 = scmp.ne.s32.totalorder %s98, %s100
      %p107 = scmp.eq.s32.totalorder %s27, 1
      %p108 = por %p106, %p107
      %p109 = scmp.ne.s32.totalorder %s100, %s101
      %p110 = scmp.eq.s32.totalorder %s27, 0
      %p111 = por %p109, %p110
      %p112 = scmp.ne.s32.totalorder %s100, %s101
      %p113 = scmp.eq.s32.totalorder %s28, 1
      %p114 = por %p112, %p113
      %p116 = scmp.ne.s32.totalorder %s101, %s115
      %p117 = scmp.eq.s32.totalorder %s28, 0
      %p118 = por %p116, %p117
      %s120 = sadd.s32 %s119, 1
      %p123 = scmp.eq.s32.totalorder %s22, 1
      %p124 = scmp.ne.s32.totalorder %s119, %s121
      %p125 = scmp.eq.s32.totalorder %s22, 0
      %p126 = por %p124, %p125
      %p127 = scmp.ne.s32.totalorder %s119, %s121
      %p128 = scmp.eq.s32.totalorder %s27, 1
      %p129 = por %p127, %p128
      %p130 = scmp.ne.s32.totalorder %s121, %s122
      %p131 = scmp.eq.s32.totalorder %s27, 0
      %p132 = por %p130, %p131
      %p133 = scmp.ne.s32.totalorder %s121, %s122
      %p134 = scmp.eq.s32.totalorder %s28, 1
      %p135 = por %p133, %p134
      %p137 = scmp.ne.s32.totalorder %s122, %s136
      %p138 = scmp.eq.s32.totalorder %s28, 0
      %p139 = por %p137, %p138
      %s141 = sadd.s32 %s140, 1
      %p144 = scmp.eq.s32.totalorder %s22, 1
      %p145 = scmp.ne.s32.totalorder %s140, %s142
      %p146 = scmp.eq.s32.totalorder %s22, 0
      %p147 = por %p145, %p146
      %p148 = scmp.ne.s32.totalorder %s140, %s142
      %p149 = scmp.eq.s32.totalorder %s27, 1
      %p150 = por %p148, %p149
      %p151 = scmp.ne.s32.totalorder %s142, %s143
      %p152 = scmp.eq.s32.totalorder %s27, 0
      %p153 = por %p151, %p152
      %p154 = scmp.ne.s32.totalorder %s142, %s143
      %p155 = scmp.eq.s32.totalorder %s28, 1
      %p156 = por %p154, %p155
      %p158 = scmp.ne.s32.totalorder %s143, %s157
      %p159 = scmp.eq.s32.totalorder %s28, 0
      %p160 = por %p158, %p159
      %s162 = sadd.s32 %s161, 1
      %p165 = scmp.eq.s32.totalorder %s22, 1
      %p166 = scmp.ne.s32.totalorder %s161, %s163
      %p167 = scmp.eq.s32.totalorder %s22, 0
      %p168 = por %p166, %p167
      %p169 = scmp.ne.s32.totalorder %s161, %s163
      %p170 = scmp.eq.s32.totalorder %s27, 1
      %p171 = por %p169, %p170
      %p172 = scmp.ne.s32.totalorder %s163, %s164
      %p173 = scmp.eq.s32.totalorder %s27, 0
      %p174 = por %p172, %p173
      %p175 = scmp.ne.s32.totalorder %s163, %s164
      %p176 = scmp.eq.s32.totalorder %s28, 1
      %p177 = por %p175, %p176
      %p179 = scmp.ne.s32.totalorder %s164, %s178
      %p180 = scmp.eq.s32.totalorder %s28, 0
      %p181 = por %p179, %p180
      %s183 = sadd.s32 %s182, 1
      %p186 = scmp.eq.s32.totalorder %s22, 1
      %p187 = scmp.ne.s32.totalorder %s182, %s184
      %p188 = scmp.eq.s32.totalorder %s22, 0
      %p189 = por %p187, %p188
      %p190 = scmp.ne.s32.totalorder %s182, %s184
      %p191 = scmp.eq.s32.totalorder %s27, 1
      %p192 = por %p190, %p191
      %p193 = scmp.ne.s32.totalorder %s184, %s185
      %p194 = scmp.eq.s32.totalorder %s27, 0
      %p195 = por %p193, %p194
      %p196 = scmp.ne.s32.totalorder %s184, %s185
      %p197 = scmp.eq.s32.totalorder %s28, 1
      %p198 = por %p196, %p197
      %p200 = scmp.ne.s32.totalorder %s185, %s199
      %p201 = scmp.eq.s32.totalorder %s28, 0
      %p202 = por %p200, %p201
      %s204 = sadd.s32 %s203, 1
      %p207 = scmp.eq.s32.totalorder %s22, 1
      %p208 = scmp.ne.s32.totalorder %s203, %s205
      %p209 = scmp.eq.s32.totalorder %s22, 0
      %p210 = por %p208, %p209
      %p211 = scmp.ne.s32.totalorder %s203, %s205
      %p212 = scmp.eq.s32.totalorder %s27, 1
      %p213 = por %p211, %p212
      %p214 = scmp.ne.s32.totalorder %s205, %s206
      %p215 = scmp.eq.s32.totalorder %s27, 0
      %p216 = por %p214, %p215
      %p217 = scmp.ne.s32.totalorder %s205, %s206
      %p218 = scmp.eq.s32.totalorder %s28, 1
      %p219 = por %p217, %p218
      %p221 = scmp.ne.s32.totalorder %s206, %s220
      %p222 = scmp.eq.s32.totalorder %s28, 0
      %p223 = por %p221, %p222
      %s225 = sadd.s32 %s224, 1
      %p228 = scmp.eq.s32.totalorder %s22, 1
      %p229 = scmp.ne.s32.totalorder %s224, %s226
      %p230 = scmp.eq.s32.totalorder %s22, 0
      %p231 = por %p229, %p230
      %p232 = scmp.ne.s32.totalorder %s224, %s226
      %p233 = scmp.eq.s32.totalorder %s27, 1
      %p234 = por %p232, %p233
      %p235 = scmp.ne.s32.totalorder %s226, %s227
      %p236 = scmp.eq.s32.totalorder %s27, 0
      %p237 = por %p235, %p236
      %p238 = scmp.ne.s32.totalorder %s226, %s227
      %p239 = scmp.eq.s32.totalorder %s28, 1
      %p240 = por %p238, %p239
      %p242 = scmp.ne.s32.totalorder %s227, %s241
      %p243 = scmp.eq.s32.totalorder %s28, 0
      %p244 = por %p242, %p243
      %s246 = sadd.s32 %s245, 1
      %p249 = scmp.eq.s32.totalorder %s22, 1
      %p250 = scmp.ne.s32.totalorder %s245, %s247
      %p251 = scmp.eq.s32.totalorder %s22, 0
      %p252 = por %p250, %p251
      %p253 = scmp.ne.s32.totalorder %s245, %s247
      %p254 = scmp.eq.s32.totalorder %s27, 1
      %p255 = por %p253, %p254
      %p256 = scmp.ne.s32.totalorder %s247, %s248
      %p257 = scmp.eq.s32.totalorder %s27, 0
      %p258 = por %p256, %p257
      %p259 = scmp.ne.s32.totalorder %s247, %s248
      %p260 = scmp.eq.s32.totalorder %s28, 1
      %p261 = por %p259, %p260
      %p263 = scmp.ne.s32.totalorder %s248, %s262
      %p264 = scmp.eq.s32.totalorder %s28, 0
      %p265 = por %p263, %p264
      %s267 = sadd.s32 %s266, 1
      %p270 = scmp.eq.s32.totalorder %s22, 1
      %p271 = scmp.ne.s32.totalorder %s266, %s268
      %p272 = scmp.eq.s32.totalorder %s22, 0
      %p273 = por %p271, %p272
      %p274 = scmp.ne.s32.totalorder %s266, %s268
      %p275 = scmp.eq.s32.totalorder %s27, 1
      %p276 = por %p274, %p275
      %p277 = scmp.ne.s32.totalorder %s268, %s269
      %p278 = scmp.eq.s32.totalorder %s27, 0
      %p279 = por %p277, %p278
      %p280 = scmp.ne.s32.totalorder %s268, %s269
      %p281 = scmp.eq.s32.totalorder %s28, 1
      %p282 = por %p280, %p281
      %p284 = scmp.ne.s32.totalorder %s269, %s283
      %p285 = scmp.eq.s32.totalorder %s28, 0
      %p286 = por %p284, %p285
      %s288 = sadd.s32 %s287, 1
      %p291 = scmp.eq.s32.totalorder %s22, 1
      %p292 = scmp.ne.s32.totalorder %s287, %s289
      %p293 = scmp.eq.s32.totalorder %s22, 0
      %p294 = por %p292, %p293
      %p295 = scmp.ne.s32.totalorder %s287, %s289
      %p296 = scmp.eq.s32.totalorder %s27, 1
      %p297 = por %p295, %p296
      %p298 = scmp.ne.s32.totalorder %s289, %s290
      %p299 = scmp.eq.s32.totalorder %s27, 0
      %p300 = por %p298, %p299
      %p301 = scmp.ne.s32.totalorder %s289, %s290
      %p302 = scmp.eq.s32.totalorder %s28, 1
      %p303 = por %p301, %p302
      %p305 = scmp.ne.s32.totalorder %s290, %s304
      %p306 = scmp.eq.s32.totalorder %s28, 0
      %p307 = por %p305, %p306
      %s308 = ssub.s32 %s22, %s29
      %p309 = scmp.eq.s32.totalorder %s308, 0
      %s311 = sadd.s32 %s310, 1
      %s312 = scalar_select %p309, %s310, %s311
      %p315 = pneg %p309
      %p316 = scmp.eq.s32.totalorder %s22, 1
      %p317 = por %p315, %p316
      %p318 = scmp.ne.s32.totalorder %s310, %s313
      %p319 = scmp.eq.s32.totalorder %s22, 0
      %p320 = por %p318, %p319
      %p321 = scmp.ne.s32.totalorder %s310, %s313
      %p322 = scmp.eq.s32.totalorder %s27, 1
      %p323 = por %p321, %p322
      %p324 = scmp.ne.s32.totalorder %s313, %s314
      %p325 = scmp.eq.s32.totalorder %s27, 0
      %p326 = por %p324, %p325
      %p327 = scmp.ne.s32.totalorder %s313, %s314
      %p328 = scmp.eq.s32.totalorder %s28, 1
      %p329 = por %p327, %p328
      %p331 = scmp.ne.s32.totalorder %s314, %s330
      %p332 = scmp.eq.s32.totalorder %s28, 0
      %p333 = por %p331, %p332
      %p334 = scmp.le.s32.totalorder 1, %s22
      %p335 = scmp.lt.s32.totalorder %s22, 3
      %p336 = pnand %p334, %p335
      %p337 = pneg %p336
      // Predicated region
      $region9: #{tpu_custom_call.1} parent=5 // pred_check
        _
      $region10: #{tpu_custom_call.1} parent=5 // pred_check_branch
        %339 = sbr.rel (%p336) target = $region12
      $region11: #{tpu_custom_call.1} parent=5 // pred_region
        %s340 = ssub.s32 %s22, 1
        // Predicated region
        $region13: #{tpu_custom_call.1} parent=11 // pred_check
          %p341 = pneg %p69
        $region14: #{tpu_custom_call.1} parent=11 // pred_check_branch
          %343 = sbr.rel (%p341) target = $region16
        $region15: #{tpu_custom_call.1} parent=11 // pred_region
          _
        $region16: #{tpu_custom_call.1} parent=11 // pred_fallthru
          _
        // Predicated region
        $region17: #{tpu_custom_call.1} parent=11 // pred_check
          %p344 = pneg %p90
        $region18: #{tpu_custom_call.1} parent=11 // pred_check_branch
          %346 = sbr.rel (%p344) target = $region20
        $region19: #{tpu_custom_call.1} parent=11 // pred_region
          _
        $region20: #{tpu_custom_call.1} parent=11 // pred_fallthru
          _
        // Predicated region
        $region21: #{tpu_custom_call.1} parent=11 // pred_check
          %p347 = pneg %p111
        $region22: #{tpu_custom_call.1} parent=11 // pred_check_branch
          %349 = sbr.rel (%p347) target = $region24
        $region23: #{tpu_custom_call.1} parent=11 // pred_region
          _
        $region24: #{tpu_custom_call.1} parent=11 // pred_fallthru
          _
        // Predicated region
        $region25: #{tpu_custom_call.1} parent=11 // pred_check
          %p350 = pneg %p132
        $region26: #{tpu_custom_call.1} parent=11 // pred_check_branch
          %352 = sbr.rel (%p350) target = $region28
        $region27: #{tpu_custom_call.1} parent=11 // pred_region
          _
        $region28: #{tpu_custom_call.1} parent=11 // pred_fallthru
          _
        // Predicated region
        $region29: #{tpu_custom_call.1} parent=11 // pred_check
          %p353 = pneg %p153
        $region30: #{tpu_custom_call.1} parent=11 // pred_check_branch
          %355 = sbr.rel (%p353) target = $region32
        $region31: #{tpu_custom_call.1} parent=11 // pred_region
          _
        $region32: #{tpu_custom_call.1} parent=11 // pred_fallthru
          _
        // Predicated region
        $region33: #{tpu_custom_call.1} parent=11 // pred_check
          %p356 = pneg %p174
        $region34: #{tpu_custom_call.1} parent=11 // pred_check_branch
          %358 = sbr.rel (%p356) target = $region36
        $region35: #{tpu_custom_call.1} parent=11 // pred_region
          _
        $region36: #{tpu_custom_call.1} parent=11 // pred_fallthru
          _
        // Predicated region
        $region37: #{tpu_custom_call.1} parent=11 // pred_check
          %p359 = pneg %p195
        $region38: #{tpu_custom_call.1} parent=11 // pred_check_branch
          %361 = sbr.rel (%p359) target = $region40
        $region39: #{tpu_custom_call.1} parent=11 // pred_region
          _
        $region40: #{tpu_custom_call.1} parent=11 // pred_fallthru
          _
        // Predicated region
        $region41: #{tpu_custom_call.1} parent=11 // pred_check
          %p362 = pneg %p216
        $region42: #{tpu_custom_call.1} parent=11 // pred_check_branch
          %364 = sbr.rel (%p362) target = $region44
        $region43: #{tpu_custom_call.1} parent=11 // pred_region
          _
        $region44: #{tpu_custom_call.1} parent=11 // pred_fallthru
          _
        // Predicated region
        $region45: #{tpu_custom_call.1} parent=11 // pred_check
          %p365 = pneg %p237
        $region46: #{tpu_custom_call.1} parent=11 // pred_check_branch
          %367 = sbr.rel (%p365) target = $region48
        $region47: #{tpu_custom_call.1} parent=11 // pred_region
          _
        $region48: #{tpu_custom_call.1} parent=11 // pred_fallthru
          _
        // Predicated region
        $region49: #{tpu_custom_call.1} parent=11 // pred_check
          %p368 = pneg %p258
        $region50: #{tpu_custom_call.1} parent=11 // pred_check_branch
          %370 = sbr.rel (%p368) target = $region52
        $region51: #{tpu_custom_call.1} parent=11 // pred_region
          _
        $region52: #{tpu_custom_call.1} parent=11 // pred_fallthru
          _
        // Predicated region
        $region53: #{tpu_custom_call.1} parent=11 // pred_check
          %p371 = pneg %p279
        $region54: #{tpu_custom_call.1} parent=11 // pred_check_branch
          %373 = sbr.rel (%p371) target = $region56
        $region55: #{tpu_custom_call.1} parent=11 // pred_region
          _
        $region56: #{tpu_custom_call.1} parent=11 // pred_fallthru
          _
        // Predicated region
        $region57: #{tpu_custom_call.1} parent=11 // pred_check
          %p374 = pneg %p300
        $region58: #{tpu_custom_call.1} parent=11 // pred_check_branch
          %376 = sbr.rel (%p374) target = $region60
        $region59: #{tpu_custom_call.1} parent=11 // pred_region
          _
        $region60: #{tpu_custom_call.1} parent=11 // pred_fallthru
          _
      $region12: #{tpu_custom_call.1} parent=5 // pred_fallthru
        _
      %p377 = scmp.lt.s32.totalorder %s22, 2
      // Predicated region
      $region61: #{tpu_custom_call.1} parent=5 // pred_check
        %p378 = pneg %p377
      $region62: #{tpu_custom_call.1} parent=5 // pred_check_branch
        %380 = sbr.rel (%p378) target = $region64
      $region63: #{tpu_custom_call.1} parent=5 // pred_region
        // Predicated region
        $region65: #{tpu_custom_call.1} parent=63 // pred_check
          %p381 = pneg %p42
        $region66: #{tpu_custom_call.1} parent=63 // pred_check_branch
          %383 = sbr.rel (%p381) target = $region68
        $region67: #{tpu_custom_call.1} parent=63 // pred_region
          %s384 = smul.u32 8, %s22
          %p385 = scmp.lt.s32.totalorder %s384, 15
          %s386 = scalar_select %p385, %s384, 15
          %s387 = smul.addr %s386, 8
          %s388 = scalar_lea.vmem %s0, %s387
          %s389 = smul.u32 8, %s22
        $region68: #{tpu_custom_call.1} parent=63 // pred_fallthru
          _
      $region64: #{tpu_custom_call.1} parent=5 // pred_fallthru
        _
      %p390 = scmp.le.s32.totalorder 1, %s22
      %p391 = scmp.lt.s32.totalorder %s22, 3
      %p392 = pnand %p390, %p391
      %p393 = pneg %p392
      // Predicated region
      $region69: #{tpu_custom_call.1} parent=5 // pred_check
        _
      $region70: #{tpu_custom_call.1} parent=5 // pred_check_branch
        %395 = sbr.rel (%p392) target = $region72
      $region71: #{tpu_custom_call.1} parent=5 // pred_region
        %s396 = ssub.s32 %s22, 1
        %s397 = smul.u32 8, %s27
        %p398 = scmp.lt.s32.totalorder %s397, 15
        %s399 = scalar_select %p398, %s397, 15
        %s400 = smul.addr %s399, 8
        %s401 = scalar_lea.vmem %s0, %s400
        %p402 = pneg %p48
        %p403 = pneg %p45
        %p404 = pneg %p69
        %p405 = pneg %p66
        %p406 = pneg %p90
        %p407 = pneg %p87
        %p408 = pneg %p111
        %p409 = pneg %p108
        %p410 = pneg %p132
        %p411 = pneg %p129
        %p412 = pneg %p153
        %p413 = pneg %p150
        %p414 = pneg %p174
        %p415 = pneg %p171
        %p416 = pneg %p195
        %p417 = pneg %p192
        %p418 = pneg %p216
        %p419 = pneg %p213
        %p420 = pneg %p237
        %p421 = pneg %p234
        %p422 = pneg %p258
        %p423 = pneg %p255
        %p424 = pneg %p279
        %p425 = pneg %p276
        %p426 = pneg %p300
        %p427 = pneg %p297
        %p428 = pneg %p326
        %p429 = pneg %p323
        %s430 = sand.u32 %s313, 1
        %s431 = scalar_lea.sflag [#allocation3], %s430
        %s432 = sand.u32 %s313, 1
        %s433 = smul.addr %s432, 8
        %s434 = scalar_lea.vmem [#allocation2], %s433
        %s435 = smul.u32 8, %s27
        %p436 = scmp.lt.s32.totalorder %s435, 15
        %s437 = scalar_select %p436, %s435, 15
        %s438 = smul.addr %s437, 8
        %s439 = scalar_lea.vmem %s0, %s438
        %s440 = smul.u32 8, %s27
        %v442 = vld [vmem:[%s439] sm:$0xff]
        %v443 = vld [vmem:[%s439 + $0x8] sm:$0xff]
        %v444 = vld [vmem:[%s439 + $0x10] sm:$0xff]
        %v445 = vld [vmem:[%s439 + $0x18] sm:$0xff]
        %v446 = vld [vmem:[%s439 + $0x20] sm:$0xff]
        %v447 = vld [vmem:[%s439 + $0x28] sm:$0xff]
        %v448 = vld [vmem:[%s439 + $0x30] sm:$0xff]
        %v449 = vld [vmem:[%s439 + $0x38] sm:$0xff]
        %v458 = vrot.slane %v442, 7
        %v459 = vrot.slane %v443, 7
        %v460 = vrot.slane %v444, 7
        %v461 = vrot.slane %v445, 7
        %v462 = vrot.slane %v446, 7
        %v463 = vrot.slane %v447, 7
        %v464 = vrot.slane %v448, 7
        %v465 = vrot.slane %v449, 7
        %vm474 = vcmask 1040384
        %v475 = vsel %vm474, 0.0, %v458
        %v476 = vsel %vm474, 0.0, %v459
        %v477 = vsel %vm474, 0.0, %v460
        %v478 = vsel %vm474, 0.0, %v461
        %v479 = vsel %vm474, 0.0, %v462
        %v480 = vsel %vm474, 0.0, %v463
        %v481 = vsel %vm474, 0.0, %v464
        %v482 = vsel %vm474, 0.0, %v465
        %v483 = vrot.slane %v442, 1
        %v484 = vrot.slane %v443, 1
        %v485 = vrot.slane %v444, 1
        %v486 = vrot.slane %v445, 1
        %v487 = vrot.slane %v446, 1
        %v488 = vrot.slane %v447, 1
        %v489 = vrot.slane %v448, 1
        %v490 = vrot.slane %v449, 1
        %vm499 = vcmask 1046528
        %v500 = vsel %vm499, %v483, 0.0
        %v501 = vsel %vm499, %v484, 0.0
        %v502 = vsel %vm499, %v485, 0.0
        %v503 = vsel %vm499, %v486, 0.0
        %v504 = vsel %vm499, %v487, 0.0
        %v505 = vsel %vm499, %v488, 0.0
        %v506 = vsel %vm499, %v489, 0.0
        %v507 = vsel %vm499, %v490, 0.0
        %508 = vrot.lane.b32.xlu0 %v442, 8
        %v509 = vpop.permute.xlu0 %508
        %510 = vrot.lane.b32.xlu0 %v443, 8
        %v511 = vpop.permute.xlu0 %510
        %512 = vrot.lane.b32.xlu0 %v444, 8
        %v513 = vpop.permute.xlu0 %512
        %514 = vrot.lane.b32.xlu0 %v445, 8
        %v515 = vpop.permute.xlu0 %514
        %516 = vrot.lane.b32.xlu0 %v446, 8
        %v517 = vpop.permute.xlu0 %516
        %518 = vrot.lane.b32.xlu0 %v447, 8
        %v519 = vpop.permute.xlu0 %518
        %520 = vrot.lane.b32.xlu0 %v448, 8
        %v521 = vpop.permute.xlu0 %520
        %522 = vrot.lane.b32.xlu0 %v449, 8
        %v523 = vpop.permute.xlu0 %522
        %540 = vrot.lane.b32.xlu0 %v500, 16
        %v541 = vpop.permute.xlu0 %540
        %542 = vrot.lane.b32.xlu0 %v501, 16
        %v543 = vpop.permute.xlu0 %542
        %544 = vrot.lane.b32.xlu0 %v502, 16
        %v545 = vpop.permute.xlu0 %544
        %546 = vrot.lane.b32.xlu0 %v503, 16
        %v547 = vpop.permute.xlu0 %546
        %548 = vrot.lane.b32.xlu0 %v504, 16
        %v549 = vpop.permute.xlu0 %548
        %550 = vrot.lane.b32.xlu0 %v505, 16
        %v551 = vpop.permute.xlu0 %550
        %552 = vrot.lane.b32.xlu0 %v506, 16
        %v553 = vpop.permute.xlu0 %552
        %554 = vrot.lane.b32.xlu0 %v507, 16
        %v555 = vpop.permute.xlu0 %554
        %vm564 = vcmask 64512
        %v565 = vsel %vm564, %v475, %v509
        %v566 = vsel %vm564, %v476, %v511
        %v567 = vsel %vm564, %v477, %v513
        %v568 = vsel %vm564, %v478, %v515
        %v569 = vsel %vm564, %v479, %v517
        %v570 = vsel %vm564, %v480, %v519
        %v571 = vsel %vm564, %v481, %v521
        %v572 = vsel %vm564, %v482, %v523
        %vm573 = vcmask 130048
        %v574 = vsel %vm573, %v565, %v541
        %v575 = vsel %vm573, %v566, %v543
        %v576 = vsel %vm573, %v567, %v545
        %v577 = vsel %vm573, %v568, %v547
        %v578 = vsel %vm573, %v569, %v549
        %v579 = vsel %vm573, %v570, %v551
        %v580 = vsel %vm573, %v571, %v553
        %v581 = vsel %vm573, %v572, %v555
        %v582 = vpack.c.bf16 %v575, %v574
        %v583 = vpack.c.bf16 %v577, %v576
        %v584 = vpack.c.bf16 %v579, %v578
        %v585 = vpack.c.bf16 %v581, %v580
        %v586 = vld [vmem:[%s1] sm:$0xff]
        %v587 = vld [vmem:[%s1 + $0x8] sm:$0xff]
        %v588 = vld [vmem:[%s1 + $0x10] sm:$0xff]
        %v589 = vld [vmem:[%s2] sm:$0x3]
        %v591 = vlaneseq
        %v592 = vshrl.u32 %v591, 7
        %v593 = vsub.s32 0, %v592
        %v594 = vrot.slane %v589, %v593
        %v595 = vlaneseq
        %v596 = vshrl.u32 %v595, 7
        %v597 = vsub.s32 1, %v596
        %v598 = vrot.slane %v589, %v597
        %v604 = vunpack.c.l.b16 %v586
        %v605 = vunpack.c.h.b16 %v586
        %v606 = vunpack.c.l.b16 %v587
        %v607 = vunpack.c.h.b16 %v587
        %v608 = vunpack.c.l.b16 %v588
        %v609 = vunpack.c.h.b16 %v588
        %v610 = vpack.c.b16 %v606, %v604
        %v611 = vpack.c.b16 %v607, %v605
        %v612 = vpack.c.b16 %v608, %v608
        %v613 = vpack.c.b16 %v609, %v609
        %vm616 = vcmask 195584
        %v618 = vsel %vm616, %v582, 0
        %v621 = vsel %vm616, %v583, 0
        %v624 = vsel %vm616, %v584, 0
        %v627 = vsel %vm616, %v585, 0
        %vm629 = vcmask 1043456
        %v631 = vsel %vm629, %v612, 0
        %v634 = vsel %vm629, %v613, 0
        %636 = vmatprep.subr.bf16.mxu0 %v611
        %637 = vmatpush1.bf16.msra.mxu0 %v610
        %638 = vmatprep.subr.bf16.mxu0 %v634
        %639 = vmatpush1.bf16.msra.mxu0 %v631
        %640 = vmatprep.subr.bf16.mxu0 0
        %641 = vmatpush1.bf16.msra.mxu0 0
        %642 = vmatprep.subr.bf16.mxu0 0
        %643 = vmatpush1.bf16.msra.mxu0 0
        %644 = vmatprep.subr.bf16.mxu0 0
        %645 = vmatpush1.bf16.msra.mxu0 0
        %646 = vmatprep.subr.bf16.mxu0 0
        %647 = vmatpush1.bf16.msra.mxu0 0
        %648 = vmatprep.subr.bf16.mxu0 0
        %649 = vmatpush1.bf16.msra.mxu0 0
        %650 = vmatprep.subr.bf16.mxu0 0
        %651 = vmatpush1.bf16.msra.mxu0 0
        %652 = vmatprep.subr.bf16.mxu0 0
        %653 = vmatpush1.bf16.msra.mxu0 0
        %654 = vmatprep.subr.bf16.mxu0 0
        %655 = vmatpush1.bf16.msra.mxu0 0
        %656 = vmatprep.subr.bf16.mxu0 0
        %657 = vmatpush1.bf16.msra.mxu0 0
        %658 = vmatprep.subr.bf16.mxu0 0
        %659 = vmatpush1.bf16.msra.mxu0 0
        %660 = vmatprep.subr.bf16.mxu0 0
        %661 = vmatpush1.bf16.msra.mxu0 0
        %662 = vmatprep.subr.bf16.mxu0 0
        %663 = vmatpush1.bf16.msra.mxu0 0
        %664 = vmatprep.subr.bf16.mxu0 0
        %665 = vmatpush1.bf16.msra.mxu0 0
        %666 = vmatprep.subr.bf16.mxu0 0
        %667 = vmatpush1.bf16.msra.mxu0 0
        %668 = vmatprep.mubr.bf16.mxu0 0
        %669 = vmatmul.mubr.bf16.gmra.mrb[0].mxu0 %v618
        %v670 = vpop.f32.mrb[0].mxu0
        %v671 = vadd.f32 %v594, %v670
        %v672 = vpop.f32.mrb[0].mxu0
        %v673 = vadd.f32 %v598, %v672
        %v674 = vpop.f32.mrb[0].mxu0
        %v675 = vadd.f32 %v594, %v674
        %v676 = vpop.f32.mrb[0].mxu0
        %v677 = vadd.f32 %v598, %v676
        %678 = vmatprep.mubr.bf16.mxu0 0
        %679 = vmatmul.mubr.bf16.gmra.mrb[0].mxu0 %v621
        %v680 = vpop.f32.mrb[0].mxu0
        %v681 = vadd.f32 %v594, %v680
        %v682 = vpop.f32.mrb[0].mxu0
        %v683 = vadd.f32 %v598, %v682
        %v684 = vpop.f32.mrb[0].mxu0
        %v685 = vadd.f32 %v594, %v684
        %v686 = vpop.f32.mrb[0].mxu0
        %v687 = vadd.f32 %v598, %v686
        %688 = vmatprep.mubr.bf16.mxu0 0
        %689 = vmatmul.mubr.bf16.gmra.mrb[0].mxu0 %v624
        %v690 = vpop.f32.mrb[0].mxu0
        %v691 = vadd.f32 %v594, %v690
        %v692 = vpop.f32.mrb[0].mxu0
        %v693 = vadd.f32 %v598, %v692
        %v694 = vpop.f32.mrb[0].mxu0
        %v695 = vadd.f32 %v594, %v694
        %v696 = vpop.f32.mrb[0].mxu0
        %v697 = vadd.f32 %v598, %v696
        %698 = vmatprep.mubr.bf16.mxu0 0
        %699 = vmatmul.mubr.bf16.gmra.mrb[0].mxu0 %v627
        %v700 = vpop.f32.mrb[0].mxu0
        %v701 = vadd.f32 %v594, %v700
        %v702 = vpop.f32.mrb[0].mxu0
        %v703 = vadd.f32 %v598, %v702
        %v704 = vpop.f32.mrb[0].mxu0
        %v705 = vadd.f32 %v594, %v704
        %v706 = vpop.f32.mrb[0].mxu0
        %v707 = vadd.f32 %v598, %v706
        %708 = vdwg.mxu0
        %v709 = vmax.f32 %v671, 0.0
        %v710 = vmax.f32 %v673, 0.0
        %v711 = vmax.f32 %v675, 0.0
        %v712 = vmax.f32 %v677, 0.0
        %v713 = vmax.f32 %v681, 0.0
        %v714 = vmax.f32 %v683, 0.0
        %v715 = vmax.f32 %v685, 0.0
        %v716 = vmax.f32 %v687, 0.0
        %v717 = vmax.f32 %v691, 0.0
        %v718 = vmax.f32 %v693, 0.0
        %v719 = vmax.f32 %v695, 0.0
        %v720 = vmax.f32 %v697, 0.0
        %v721 = vmax.f32 %v701, 0.0
        %v722 = vmax.f32 %v703, 0.0
        %v723 = vmax.f32 %v705, 0.0
        %v724 = vmax.f32 %v707, 0.0
        %v725 = vmax.f32 %v709, %v710
        %v726 = vmax.f32 %v711, %v712
        %v727 = vmax.f32 %v713, %v714
        %v728 = vmax.f32 %v715, %v716
        %v729 = vmax.f32 %v717, %v718
        %v730 = vmax.f32 %v719, %v720
        %v731 = vmax.f32 %v721, %v722
        %v732 = vmax.f32 %v723, %v724
        %v741 = vrot.slane %v725, 7
        %v742 = vrot.slane %v726, 7
        %v743 = vrot.slane %v727, 7
        %v744 = vrot.slane %v728, 7
        %v745 = vrot.slane %v729, 7
        %v746 = vrot.slane %v730, 7
        %v747 = vrot.slane %v731, 7
        %v748 = vrot.slane %v732, 7
        %749 = vrot.lane.b32.xlu0 %v741, 32
        %v750 = vpop.permute.xlu0 %749
        %751 = vrot.lane.b32.xlu0 %v742, 32
        %v752 = vpop.permute.xlu0 %751
        %753 = vrot.lane.b32.xlu0 %v743, 32
        %v754 = vpop.permute.xlu0 %753
        %755 = vrot.lane.b32.xlu0 %v744, 32
        %v756 = vpop.permute.xlu0 %755
        %757 = vrot.lane.b32.xlu0 %v745, 32
        %v758 = vpop.permute.xlu0 %757
        %759 = vrot.lane.b32.xlu0 %v746, 32
        %v760 = vpop.permute.xlu0 %759
        %761 = vrot.lane.b32.xlu0 %v747, 32
        %v762 = vpop.permute.xlu0 %761
        %763 = vrot.lane.b32.xlu0 %v748, 32
        %v764 = vpop.permute.xlu0 %763
        %v773 = vsel %vm474, 0.0, %v750
        %v774 = vsel %vm474, 0.0, %v752
        %v775 = vsel %vm474, 0.0, %v754
        %v776 = vsel %vm474, 0.0, %v756
        %v777 = vsel %vm474, 0.0, %v758
        %v778 = vsel %vm474, 0.0, %v760
        %v779 = vsel %vm474, 0.0, %v762
        %v780 = vsel %vm474, 0.0, %v764
        %v781 = vrot.slane %v725, 1
        %v782 = vrot.slane %v726, 1
        %v783 = vrot.slane %v727, 1
        %v784 = vrot.slane %v728, 1
        %v785 = vrot.slane %v729, 1
        %v786 = vrot.slane %v730, 1
        %v787 = vrot.slane %v731, 1
        %v788 = vrot.slane %v732, 1
        %v797 = vsel %vm499, %v781, 0.0
        %v798 = vsel %vm499, %v782, 0.0
        %v799 = vsel %vm499, %v783, 0.0
        %v800 = vsel %vm499, %v784, 0.0
        %v801 = vsel %vm499, %v785, 0.0
        %v802 = vsel %vm499, %v786, 0.0
        %v803 = vsel %vm499, %v787, 0.0
        %v804 = vsel %vm499, %v788, 0.0
        %805 = vrot.lane.b32.xlu0 %v725, 32
        %v806 = vpop.permute.xlu0 %805
        %807 = vrot.lane.b32.xlu0 %v726, 32
        %v808 = vpop.permute.xlu0 %807
        %809 = vrot.lane.b32.xlu0 %v727, 32
        %v810 = vpop.permute.xlu0 %809
        %811 = vrot.lane.b32.xlu0 %v728, 32
        %v812 = vpop.permute.xlu0 %811
        %813 = vrot.lane.b32.xlu0 %v729, 32
        %v814 = vpop.permute.xlu0 %813
        %815 = vrot.lane.b32.xlu0 %v730, 32
        %v816 = vpop.permute.xlu0 %815
        %817 = vrot.lane.b32.xlu0 %v731, 32
        %v818 = vpop.permute.xlu0 %817
        %819 = vrot.lane.b32.xlu0 %v732, 32
        %v820 = vpop.permute.xlu0 %819
        %837 = vrot.lane.b32.xlu0 %v797, 32
        %v838 = vpop.permute.xlu0 %837
        %839 = vrot.lane.b32.xlu0 %v798, 32
        %v840 = vpop.permute.xlu0 %839
        %841 = vrot.lane.b32.xlu0 %v799, 32
        %v842 = vpop.permute.xlu0 %841
        %843 = vrot.lane.b32.xlu0 %v800, 32
        %v844 = vpop.permute.xlu0 %843
        %845 = vrot.lane.b32.xlu0 %v801, 32
        %v846 = vpop.permute.xlu0 %845
        %847 = vrot.lane.b32.xlu0 %v802, 32
        %v848 = vpop.permute.xlu0 %847
        %849 = vrot.lane.b32.xlu0 %v803, 32
        %v850 = vpop.permute.xlu0 %849
        %851 = vrot.lane.b32.xlu0 %v804, 32
        %v852 = vpop.permute.xlu0 %851
        %vm861 = vcmask 261120
        %v862 = vsel %vm861, %v773, %v806
        %v863 = vsel %vm861, %v774, %v808
        %v864 = vsel %vm861, %v775, %v810
        %v865 = vsel %vm861, %v776, %v812
        %v866 = vsel %vm861, %v777, %v814
        %v867 = vsel %vm861, %v778, %v816
        %v868 = vsel %vm861, %v779, %v818
        %v869 = vsel %vm861, %v780, %v820
        %v870 = vsel %vm861, %v806, %v838
        %v871 = vsel %vm861, %v808, %v840
        %v872 = vsel %vm861, %v810, %v842
        %v873 = vsel %vm861, %v812, %v844
        %v874 = vsel %vm861, %v814, %v846
        %v875 = vsel %vm861, %v816, %v848
        %v876 = vsel %vm861, %v818, %v850
        %v877 = vsel %vm861, %v820, %v852
        %v878 = vpack.c.bf16 %v863, %v862
        %v879 = vpack.c.bf16 %v871, %v870
        %v880 = vpack.c.bf16 %v865, %v864
        %v881 = vpack.c.bf16 %v873, %v872
        %v882 = vpack.c.bf16 %v867, %v866
        %v883 = vpack.c.bf16 %v875, %v874
        %v884 = vpack.c.bf16 %v869, %v868
        %v885 = vpack.c.bf16 %v877, %v876
        %v886 = vld [vmem:[%s3] sm:$0xff]
        %v887 = vld [vmem:[%s3 + $0x8] sm:$0xff]
        %v888 = vld [vmem:[%s3 + $0x10] sm:$0xff]
        %v889 = vld [vmem:[%s3 + $0x18] sm:$0xff]
        %v890 = vld [vmem:[%s3 + $0x20] sm:$0xff]
        %v891 = vld [vmem:[%s3 + $0x28] sm:$0xff]
        %v892 = vld [vmem:[%s3 + $0x30] sm:$0xff]
        %v893 = vld [vmem:[%s3 + $0x38] sm:$0xff]
        %v894 = vld [vmem:[%s3 + $0x40] sm:$0xff]
        %v895 = vld [vmem:[%s3 + $0x48] sm:$0xff]
        %v896 = vld [vmem:[%s3 + $0x50] sm:$0xff]
        %v897 = vld [vmem:[%s3 + $0x58] sm:$0xff]
        %v898 = vld [vmem:[%s3 + $0x60] sm:$0xff]
        %v899 = vld [vmem:[%s3 + $0x68] sm:$0xff]
        %v900 = vld [vmem:[%s3 + $0x70] sm:$0xff]
        %v901 = vld [vmem:[%s3 + $0x78] sm:$0xff]
        %v902 = vld [vmem:[%s3 + $0x80] sm:$0xff]
        %v903 = vld [vmem:[%s3 + $0x88] sm:$0xff]
        %v904 = vld [vmem:[%s3 + $0x90] sm:$0xff]
        %v905 = vld [vmem:[%s3 + $0x98] sm:$0xff]
        %v906 = vld [vmem:[%s3 + $0xa0] sm:$0xff]
        %v907 = vld [vmem:[%s3 + $0xa8] sm:$0xff]
        %v908 = vld [vmem:[%s3 + $0xb0] sm:$0xff]
        %v909 = vld [vmem:[%s3 + $0xb8] sm:$0xff]
        %v910 = vld [vmem:[%s4] sm:$0x3]
        %v912 = vlaneseq
        %v913 = vshrl.u32 %v912, 7
        %v914 = vsub.s32 0, %v913
        %v915 = vrot.slane %v910, %v914
        %v916 = vlaneseq
        %v917 = vshrl.u32 %v916, 7
        %v918 = vsub.s32 1, %v917
        %v919 = vrot.slane %v910, %v918
        %v946 = vunpack.c.l.b16 %v886
        %v947 = vunpack.c.h.b16 %v886
        %v948 = vunpack.c.l.b16 %v887
        %v949 = vunpack.c.h.b16 %v887
        %v950 = vunpack.c.l.b16 %v888
        %v951 = vunpack.c.h.b16 %v888
        %v952 = vunpack.c.l.b16 %v889
        %v953 = vunpack.c.h.b16 %v889
        %v954 = vunpack.c.l.b16 %v890
        %v955 = vunpack.c.h.b16 %v890
        %v956 = vunpack.c.l.b16 %v891
        %v957 = vunpack.c.h.b16 %v891
        %v958 = vunpack.c.l.b16 %v892
        %v959 = vunpack.c.h.b16 %v892
        %v960 = vunpack.c.l.b16 %v893
        %v961 = vunpack.c.h.b16 %v893
        %v962 = vunpack.c.l.b16 %v894
        %v963 = vunpack.c.h.b16 %v894
        %v964 = vunpack.c.l.b16 %v895
        %v965 = vunpack.c.h.b16 %v895
        %v966 = vunpack.c.l.b16 %v896
        %v967 = vunpack.c.h.b16 %v896
        %v968 = vunpack.c.l.b16 %v897
        %v969 = vunpack.c.h.b16 %v897
        %v970 = vunpack.c.l.b16 %v898
        %v971 = vunpack.c.h.b16 %v898
        %v972 = vunpack.c.l.b16 %v899
        %v973 = vunpack.c.h.b16 %v899
        %v974 = vunpack.c.l.b16 %v900
        %v975 = vunpack.c.h.b16 %v900
        %v976 = vunpack.c.l.b16 %v901
        %v977 = vunpack.c.h.b16 %v901
        %v978 = vunpack.c.l.b16 %v902
        %v979 = vunpack.c.h.b16 %v902
        %v980 = vunpack.c.l.b16 %v903
        %v981 = vunpack.c.h.b16 %v903
        %v982 = vunpack.c.l.b16 %v904
        %v983 = vunpack.c.h.b16 %v904
        %v984 = vunpack.c.l.b16 %v905
        %v985 = vunpack.c.h.b16 %v905
        %v986 = vunpack.c.l.b16 %v906
        %v987 = vunpack.c.h.b16 %v906
        %v988 = vunpack.c.l.b16 %v907
        %v989 = vunpack.c.h.b16 %v907
        %v990 = vunpack.c.l.b16 %v908
        %v991 = vunpack.c.h.b16 %v908
        %v992 = vunpack.c.l.b16 %v909
        %v993 = vunpack.c.h.b16 %v909
        %v994 = vpack.c.b16 %v948, %v946
        %v995 = vpack.c.b16 %v949, %v947
        %v996 = vpack.c.b16 %v952, %v950
        %v997 = vpack.c.b16 %v953, %v951
        %v998 = vpack.c.b16 %v956, %v954
        %v999 = vpack.c.b16 %v957, %v955
        %v1000 = vpack.c.b16 %v960, %v958
        %v1001 = vpack.c.b16 %v961, %v959
        %v1002 = vpack.c.b16 %v964, %v962
        %v1003 = vpack.c.b16 %v965, %v963
        %v1004 = vpack.c.b16 %v968, %v966
        %v1005 = vpack.c.b16 %v969, %v967
        %v1006 = vpack.c.b16 %v972, %v970
        %v1007 = vpack.c.b16 %v973, %v971
        %v1008 = vpack.c.b16 %v976, %v974
        %v1009 = vpack.c.b16 %v977, %v975
        %v1010 = vpack.c.b16 %v980, %v978
        %v1011 = vpack.c.b16 %v981, %v979
        %v1012 = vpack.c.b16 %v984, %v982
        %v1013 = vpack.c.b16 %v985, %v983
        %v1014 = vpack.c.b16 %v988, %v986
        %v1015 = vpack.c.b16 %v989, %v987
        %v1016 = vpack.c.b16 %v992, %v990
        %v1017 = vpack.c.b16 %v993, %v991
        %vm1042 = vcmask 523264
        %v1044 = vsel %vm1042, %v879, 0
        %v1047 = vsel %vm1042, %v881, 0
        %v1050 = vsel %vm1042, %v883, 0
        %v1053 = vsel %vm1042, %v885, 0
        %1055 = vmatprep.subr.bf16.mxu0 %v995
        %1056 = vmatpush1.bf16.msra.mxu0 %v994
        %1057 = vmatprep.subr.bf16.mxu0 %v997
        %1058 = vmatpush1.bf16.msra.mxu0 %v996
        %1059 = vmatprep.subr.bf16.mxu0 %v999
        %1060 = vmatpush1.bf16.msra.mxu0 %v998
        %1061 = vmatprep.subr.bf16.mxu0 %v1001
        %1062 = vmatpush1.bf16.msra.mxu0 %v1000
        %1063 = vmatprep.subr.bf16.mxu0 %v1003
        %1064 = vmatpush1.bf16.msra.mxu0 %v1002
        %1065 = vmatprep.subr.bf16.mxu0 %v1005
        %1066 = vmatpush1.bf16.msra.mxu0 %v1004
        %1067 = vmatprep.subr.bf16.mxu0 %v1007
        %1068 = vmatpush1.bf16.msra.mxu0 %v1006
        %1069 = vmatprep.subr.bf16.mxu0 %v1009
        %1070 = vmatpush1.bf16.msra.mxu0 %v1008
        %1071 = vmatprep.subr.bf16.mxu0 %v1011
        %1072 = vmatpush1.bf16.msra.mxu0 %v1010
        %1073 = vmatprep.subr.bf16.mxu0 %v1013
        %1074 = vmatpush1.bf16.msra.mxu0 %v1012
        %1075 = vmatprep.subr.bf16.mxu0 %v1015
        %1076 = vmatpush1.bf16.msra.mxu0 %v1014
        %1077 = vmatprep.subr.bf16.mxu0 %v1017
        %1078 = vmatpush1.bf16.msra.mxu0 %v1016
        %1079 = vmatprep.subr.bf16.mxu0 0
        %1080 = vmatpush1.bf16.msra.mxu0 0
        %1081 = vmatprep.subr.bf16.mxu0 0
        %1082 = vmatpush1.bf16.msra.mxu0 0
        %1083 = vmatprep.subr.bf16.mxu0 0
        %1084 = vmatpush1.bf16.msra.mxu0 0
        %1085 = vmatprep.subr.bf16.mxu0 0
        %1086 = vmatpush1.bf16.msra.mxu0 0
        %1087 = vmatprep.mubr.bf16.mxu0 %v1044
        %1088 = vmatmul.mubr.bf16.gmra.mrb[0].mxu0 %v878
        %v1089 = vpop.f32.mrb[0].mxu0
        %v1090 = vadd.f32 %v915, %v1089
        %v1091 = vpop.f32.mrb[0].mxu0
        %v1092 = vadd.f32 %v919, %v1091
        %v1093 = vpop.f32.mrb[0].mxu0
        %v1094 = vadd.f32 %v915, %v1093
        %v1095 = vpop.f32.mrb[0].mxu0
        %v1096 = vadd.f32 %v919, %v1095
        %1097 = vmatprep.mubr.bf16.mxu0 %v1047
        %1098 = vmatmul.mubr.bf16.gmra.mrb[0].mxu0 %v880
        %v1099 = vpop.f32.mrb[0].mxu0
        %v1100 = vadd.f32 %v915, %v1099
        %v1101 = vpop.f32.mrb[0].mxu0
        %v1102 = vadd.f32 %v919, %v1101
        %v1103 = vpop.f32.mrb[0].mxu0
        %v1104 = vadd.f32 %v915, %v1103
        %v1105 = vpop.f32.mrb[0].mxu0
        %v1106 = vadd.f32 %v919, %v1105
        %1107 = vmatprep.mubr.bf16.mxu0 %v1050
        %1108 = vmatmul.mubr.bf16.gmra.mrb[0].mxu0 %v882
        %v1109 = vpop.f32.mrb[0].mxu0
        %v1110 = vadd.f32 %v915, %v1109
        %v1111 = vpop.f32.mrb[0].mxu0
        %v1112 = vadd.f32 %v919, %v1111
        %v1113 = vpop.f32.mrb[0].mxu0
        %v1114 = vadd.f32 %v915, %v1113
        %v1115 = vpop.f32.mrb[0].mxu0
        %v1116 = vadd.f32 %v919, %v1115
        %1117 = vmatprep.mubr.bf16.mxu0 %v1053
        %1118 = vmatmul.mubr.bf16.gmra.mrb[0].mxu0 %v884
        %v1119 = vpop.f32.mrb[0].mxu0
        %v1120 = vadd.f32 %v915, %v1119
        %v1121 = vpop.f32.mrb[0].mxu0
        %v1122 = vadd.f32 %v919, %v1121
        %v1123 = vpop.f32.mrb[0].mxu0
        %v1124 = vadd.f32 %v915, %v1123
        %v1125 = vpop.f32.mrb[0].mxu0
        %v1126 = vadd.f32 %v919, %v1125
        %1127 = vdwg.mxu0
        %v1128 = vmax.f32 %v1090, 0.0
        %v1129 = vmax.f32 %v1092, 0.0
        %v1130 = vmax.f32 %v1094, 0.0
        %v1131 = vmax.f32 %v1096, 0.0
        %v1132 = vmax.f32 %v1100, 0.0
        %v1133 = vmax.f32 %v1102, 0.0
        %v1134 = vmax.f32 %v1104, 0.0
        %v1135 = vmax.f32 %v1106, 0.0
        %v1136 = vmax.f32 %v1110, 0.0
        %v1137 = vmax.f32 %v1112, 0.0
        %v1138 = vmax.f32 %v1114, 0.0
        %v1139 = vmax.f32 %v1116, 0.0
        %v1140 = vmax.f32 %v1120, 0.0
        %v1141 = vmax.f32 %v1122, 0.0
        %v1142 = vmax.f32 %v1124, 0.0
        %v1143 = vmax.f32 %v1126, 0.0
        %v1144 = vmax.f32 %v1128, %v1129
        %v1145 = vmax.f32 %v1130, %v1131
        %v1146 = vmax.f32 %v1132, %v1133
        %v1147 = vmax.f32 %v1134, %v1135
        %v1148 = vmax.f32 %v1136, %v1137
        %v1149 = vmax.f32 %v1138, %v1139
        %v1150 = vmax.f32 %v1140, %v1141
        %v1151 = vmax.f32 %v1142, %v1143
        %v1160 = vrot.slane %v1144, 7
        %v1161 = vrot.slane %v1145, 7
        %v1162 = vrot.slane %v1146, 7
        %v1163 = vrot.slane %v1147, 7
        %v1164 = vrot.slane %v1148, 7
        %v1165 = vrot.slane %v1149, 7
        %v1166 = vrot.slane %v1150, 7
        %v1167 = vrot.slane %v1151, 7
        %1168 = vrot.lane.b32.xlu0 %v1160, 64
        %v1169 = vpop.permute.xlu0 %1168
        %1170 = vrot.lane.b32.xlu0 %v1161, 64
        %v1171 = vpop.permute.xlu0 %1170
        %1172 = vrot.lane.b32.xlu0 %v1162, 64
        %v1173 = vpop.permute.xlu0 %1172
        %1174 = vrot.lane.b32.xlu0 %v1163, 64
        %v1175 = vpop.permute.xlu0 %1174
        %1176 = vrot.lane.b32.xlu0 %v1164, 64
        %v1177 = vpop.permute.xlu0 %1176
        %1178 = vrot.lane.b32.xlu0 %v1165, 64
        %v1179 = vpop.permute.xlu0 %1178
        %1180 = vrot.lane.b32.xlu0 %v1166, 64
        %v1181 = vpop.permute.xlu0 %1180
        %1182 = vrot.lane.b32.xlu0 %v1167, 64
        %v1183 = vpop.permute.xlu0 %1182
        %v1192 = vsel %vm474, 0.0, %v1169
        %v1193 = vsel %vm474, 0.0, %v1171
        %v1194 = vsel %vm474, 0.0, %v1173
        %v1195 = vsel %vm474, 0.0, %v1175
        %v1196 = vsel %vm474, 0.0, %v1177
        %v1197 = vsel %vm474, 0.0, %v1179
        %v1198 = vsel %vm474, 0.0, %v1181
        %v1199 = vsel %vm474, 0.0, %v1183
        %v1200 = vrot.slane %v1144, 1
        %v1201 = vrot.slane %v1145, 1
        %v1202 = vrot.slane %v1146, 1
        %v1203 = vrot.slane %v1147, 1
        %v1204 = vrot.slane %v1148, 1
        %v1205 = vrot.slane %v1149, 1
        %v1206 = vrot.slane %v1150, 1
        %v1207 = vrot.slane %v1151, 1
        %v1216 = vsel %vm499, %v1200, 0.0
        %v1217 = vsel %vm499, %v1201, 0.0
        %v1218 = vsel %vm499, %v1202, 0.0
        %v1219 = vsel %vm499, %v1203, 0.0
        %v1220 = vsel %vm499, %v1204, 0.0
        %v1221 = vsel %vm499, %v1205, 0.0
        %v1222 = vsel %vm499, %v1206, 0.0
        %v1223 = vsel %vm499, %v1207, 0.0
        %1224 = vrot.lane.b32.xlu0 %v1144, 64
        %v1225 = vpop.permute.xlu0 %1224
        %1226 = vrot.lane.b32.xlu0 %v1145, 64
        %v1227 = vpop.permute.xlu0 %1226
        %1228 = vrot.lane.b32.xlu0 %v1146, 64
        %v1229 = vpop.permute.xlu0 %1228
        %1230 = vrot.lane.b32.xlu0 %v1147, 64
        %v1231 = vpop.permute.xlu0 %1230
        %1232 = vrot.lane.b32.xlu0 %v1148, 64
        %v1233 = vpop.permute.xlu0 %1232
        %1234 = vrot.lane.b32.xlu0 %v1149, 64
        %v1235 = vpop.permute.xlu0 %1234
        %1236 = vrot.lane.b32.xlu0 %v1150, 64
        %v1237 = vpop.permute.xlu0 %1236
        %1238 = vrot.lane.b32.xlu0 %v1151, 64
        %v1239 = vpop.permute.xlu0 %1238
        %1256 = vrot.lane.b32.xlu0 %v1216, 64
        %v1257 = vpop.permute.xlu0 %1256
        %1258 = vrot.lane.b32.xlu0 %v1217, 64
        %v1259 = vpop.permute.xlu0 %1258
        %1260 = vrot.lane.b32.xlu0 %v1218, 64
        %v1261 = vpop.permute.xlu0 %1260
        %1262 = vrot.lane.b32.xlu0 %v1219, 64
        %v1263 = vpop.permute.xlu0 %1262
        %1264 = vrot.lane.b32.xlu0 %v1220, 64
        %v1265 = vpop.permute.xlu0 %1264
        %1266 = vrot.lane.b32.xlu0 %v1221, 64
        %v1267 = vpop.permute.xlu0 %1266
        %1268 = vrot.lane.b32.xlu0 %v1222, 64
        %v1269 = vpop.permute.xlu0 %1268
        %1270 = vrot.lane.b32.xlu0 %v1223, 64
        %v1271 = vpop.permute.xlu0 %1270
        %v1280 = vsel %vm1042, %v1192, %v1225
        %v1281 = vsel %vm1042, %v1193, %v1227
        %v1282 = vsel %vm1042, %v1194, %v1229
        %v1283 = vsel %vm1042, %v1195, %v1231
        %v1284 = vsel %vm1042, %v1196, %v1233
        %v1285 = vsel %vm1042, %v1197, %v1235
        %v1286 = vsel %vm1042, %v1198, %v1237
        %v1287 = vsel %vm1042, %v1199, %v1239
        %v1288 = vsel %vm1042, %v1225, %v1257
        %v1289 = vsel %vm1042, %v1227, %v1259
        %v1290 = vsel %vm1042, %v1229, %v1261
        %v1291 = vsel %vm1042, %v1231, %v1263
        %v1292 = vsel %vm1042, %v1233, %v1265
        %v1293 = vsel %vm1042, %v1235, %v1267
        %v1294 = vsel %vm1042, %v1237, %v1269
        %v1295 = vsel %vm1042, %v1239, %v1271
        %v1296 = vpack.c.bf16 %v1281, %v1280
        %v1297 = vpack.c.bf16 %v1289, %v1288
        %v1298 = vpack.c.bf16 %v1283, %v1282
        %v1299 = vpack.c.bf16 %v1291, %v1290
        %v1300 = vpack.c.bf16 %v1285, %v1284
        %v1301 = vpack.c.bf16 %v1293, %v1292
        %v1302 = vpack.c.bf16 %v1287, %v1286
        %v1303 = vpack.c.bf16 %v1295, %v1294
        %v1304 = vld [vmem:[%s5] sm:$0xff]
        %v1305 = vld [vmem:[%s5 + $0x8] sm:$0xff]
        %v1306 = vld [vmem:[%s5 + $0x10] sm:$0xff]
        %v1307 = vld [vmem:[%s5 + $0x18] sm:$0xff]
        %v1308 = vld [vmem:[%s5 + $0x20] sm:$0xff]
        %v1309 = vld [vmem:[%s5 + $0x28] sm:$0xff]
        %v1310 = vld [vmem:[%s5 + $0x30] sm:$0xff]
        %v1311 = vld [vmem:[%s5 + $0x38] sm:$0xff]
        %v1312 = vld [vmem:[%s5 + $0x40] sm:$0xff]
        %v1313 = vld [vmem:[%s5 + $0x48] sm:$0xff]
        %v1314 = vld [vmem:[%s5 + $0x50] sm:$0xff]
        %v1315 = vld [vmem:[%s5 + $0x58] sm:$0xff]
        %v1316 = vld [vmem:[%s5 + $0x60] sm:$0xff]
        %v1317 = vld [vmem:[%s5 + $0x68] sm:$0xff]
        %v1318 = vld [vmem:[%s5 + $0x70] sm:$0xff]
        %v1319 = vld [vmem:[%s5 + $0x78] sm:$0xff]
        %v1320 = vld [vmem:[%s5 + $0x80] sm:$0xff]
        %v1321 = vld [vmem:[%s5 + $0x88] sm:$0xff]
        %v1322 = vld [vmem:[%s5 + $0x90] sm:$0xff]
        %v1323 = vld [vmem:[%s5 + $0x98] sm:$0xff]
        %v1324 = vld [vmem:[%s5 + $0xa0] sm:$0xff]
        %v1325 = vld [vmem:[%s5 + $0xa8] sm:$0xff]
        %v1326 = vld [vmem:[%s5 + $0xb0] sm:$0xff]
        %v1327 = vld [vmem:[%s5 + $0xb8] sm:$0xff]
        %v1328 = vld [vmem:[%s5 + $0xc0] sm:$0xff]
        %v1329 = vld [vmem:[%s5 + $0xc8] sm:$0xff]
        %v1330 = vld [vmem:[%s5 + $0xd0] sm:$0xff]
        %v1331 = vld [vmem:[%s5 + $0xd8] sm:$0xff]
        %v1332 = vld [vmem:[%s5 + $0xe0] sm:$0xff]
        %v1333 = vld [vmem:[%s5 + $0xe8] sm:$0xff]
        %v1334 = vld [vmem:[%s5 + $0xf0] sm:$0xff]
        %v1335 = vld [vmem:[%s5 + $0xf8] sm:$0xff]
        %v1336 = vld [vmem:[%s6] sm:$0x3]
        %v1338 = vlaneseq
        %v1339 = vshrl.u32 %v1338, 7
        %v1340 = vsub.s32 0, %v1339
        %v1341 = vrot.slane %v1336, %v1340
        %v1342 = vlaneseq
        %v1343 = vshrl.u32 %v1342, 7
        %v1344 = vsub.s32 1, %v1343
        %v1345 = vrot.slane %v1336, %v1344
        %v1380 = vunpack.c.l.b16 %v1304
        %v1381 = vunpack.c.h.b16 %v1304
        %v1382 = vunpack.c.l.b16 %v1305
        %v1383 = vunpack.c.h.b16 %v1305
        %v1384 = vunpack.c.l.b16 %v1306
        %v1385 = vunpack.c.h.b16 %v1306
        %v1386 = vunpack.c.l.b16 %v1307
        %v1387 = vunpack.c.h.b16 %v1307
        %v1388 = vunpack.c.l.b16 %v1308
        %v1389 = vunpack.c.h.b16 %v1308
        %v1390 = vunpack.c.l.b16 %v1309
        %v1391 = vunpack.c.h.b16 %v1309
        %v1392 = vunpack.c.l.b16 %v1310
        %v1393 = vunpack.c.h.b16 %v1310
        %v1394 = vunpack.c.l.b16 %v1311
        %v1395 = vunpack.c.h.b16 %v1311
        %v1396 = vunpack.c.l.b16 %v1312
        %v1397 = vunpack.c.h.b16 %v1312
        %v1398 = vunpack.c.l.b16 %v1313
        %v1399 = vunpack.c.h.b16 %v1313
        %v1400 = vunpack.c.l.b16 %v1314
        %v1401 = vunpack.c.h.b16 %v1314
        %v1402 = vunpack.c.l.b16 %v1315
        %v1403 = vunpack.c.h.b16 %v1315
        %v1404 = vunpack.c.l.b16 %v1316
        %v1405 = vunpack.c.h.b16 %v1316
        %v1406 = vunpack.c.l.b16 %v1317
        %v1407 = vunpack.c.h.b16 %v1317
        %v1408 = vunpack.c.l.b16 %v1318
        %v1409 = vunpack.c.h.b16 %v1318
        %v1410 = vunpack.c.l.b16 %v1319
        %v1411 = vunpack.c.h.b16 %v1319
        %v1412 = vunpack.c.l.b16 %v1320
        %v1413 = vunpack.c.h.b16 %v1320
        %v1414 = vunpack.c.l.b16 %v1321
        %v1415 = vunpack.c.h.b16 %v1321
        %v1416 = vunpack.c.l.b16 %v1322
        %v1417 = vunpack.c.h.b16 %v1322
        %v1418 = vunpack.c.l.b16 %v1323
        %v1419 = vunpack.c.h.b16 %v1323
        %v1420 = vunpack.c.l.b16 %v1324
        %v1421 = vunpack.c.h.b16 %v1324
        %v1422 = vunpack.c.l.b16 %v1325
        %v1423 = vunpack.c.h.b16 %v1325
        %v1424 = vunpack.c.l.b16 %v1326
        %v1425 = vunpack.c.h.b16 %v1326
        %v1426 = vunpack.c.l.b16 %v1327
        %v1427 = vunpack.c.h.b16 %v1327
        %v1428 = vunpack.c.l.b16 %v1328
        %v1429 = vunpack.c.h.b16 %v1328
        %v1430 = vunpack.c.l.b16 %v1329
        %v1431 = vunpack.c.h.b16 %v1329
        %v1432 = vunpack.c.l.b16 %v1330
        %v1433 = vunpack.c.h.b16 %v1330
        %v1434 = vunpack.c.l.b16 %v1331
        %v1435 = vunpack.c.h.b16 %v1331
        %v1436 = vunpack.c.l.b16 %v1332
        %v1437 = vunpack.c.h.b16 %v1332
        %v1438 = vunpack.c.l.b16 %v1333
        %v1439 = vunpack.c.h.b16 %v1333
        %v1440 = vunpack.c.l.b16 %v1334
        %v1441 = vunpack.c.h.b16 %v1334
        %v1442 = vunpack.c.l.b16 %v1335
        %v1443 = vunpack.c.h.b16 %v1335
        %v1444 = vpack.c.b16 %v1382, %v1380
        %v1445 = vpack.c.b16 %v1383, %v1381
        %v1446 = vpack.c.b16 %v1386, %v1384
        %v1447 = vpack.c.b16 %v1387, %v1385
        %v1448 = vpack.c.b16 %v1390, %v1388
        %v1449 = vpack.c.b16 %v1391, %v1389
        %v1450 = vpack.c.b16 %v1394, %v1392
        %v1451 = vpack.c.b16 %v1395, %v1393
        %v1452 = vpack.c.b16 %v1398, %v1396
        %v1453 = vpack.c.b16 %v1399, %v1397
        %v1454 = vpack.c.b16 %v1402, %v1400
        %v1455 = vpack.c.b16 %v1403, %v1401
        %v1456 = vpack.c.b16 %v1406, %v1404
        %v1457 = vpack.c.b16 %v1407, %v1405
        %v1458 = vpack.c.b16 %v1410, %v1408
        %v1459 = vpack.c.b16 %v1411, %v1409
        %v1460 = vpack.c.b16 %v1414, %v1412
        %v1461 = vpack.c.b16 %v1415, %v1413
        %v1462 = vpack.c.b16 %v1418, %v1416
        %v1463 = vpack.c.b16 %v1419, %v1417
        %v1464 = vpack.c.b16 %v1422, %v1420
        %v1465 = vpack.c.b16 %v1423, %v1421
        %v1466 = vpack.c.b16 %v1426, %v1424
        %v1467 = vpack.c.b16 %v1427, %v1425
        %v1468 = vpack.c.b16 %v1430, %v1428
        %v1469 = vpack.c.b16 %v1431, %v1429
        %v1470 = vpack.c.b16 %v1434, %v1432
        %v1471 = vpack.c.b16 %v1435, %v1433
        %v1472 = vpack.c.b16 %v1438, %v1436
        %v1473 = vpack.c.b16 %v1439, %v1437
        %v1474 = vpack.c.b16 %v1442, %v1440
        %v1475 = vpack.c.b16 %v1443, %v1441
        %1508 = vmatprep.subr.bf16.mxu0 %v1445
        %1509 = vmatpush1.bf16.msra.mxu0 %v1444
        %1510 = vmatprep.subr.bf16.mxu0 %v1447
        %1511 = vmatpush1.bf16.msra.mxu0 %v1446
        %1512 = vmatprep.subr.bf16.mxu0 %v1449
        %1513 = vmatpush1.bf16.msra.mxu0 %v1448
        %1514 = vmatprep.subr.bf16.mxu0 %v1451
        %1515 = vmatpush1.bf16.msra.mxu0 %v1450
        %1516 = vmatprep.subr.bf16.mxu0 %v1453
        %1517 = vmatpush1.bf16.msra.mxu0 %v1452
        %1518 = vmatprep.subr.bf16.mxu0 %v1455
        %1519 = vmatpush1.bf16.msra.mxu0 %v1454
        %1520 = vmatprep.subr.bf16.mxu0 %v1457
        %1521 = vmatpush1.bf16.msra.mxu0 %v1456
        %1522 = vmatprep.subr.bf16.mxu0 %v1459
        %1523 = vmatpush1.bf16.msra.mxu0 %v1458
        %1524 = vmatprep.subr.bf16.mxu0 %v1461
        %1525 = vmatpush1.bf16.msra.mxu0 %v1460
        %1526 = vmatprep.subr.bf16.mxu0 %v1463
        %1527 = vmatpush1.bf16.msra.mxu0 %v1462
        %1528 = vmatprep.subr.bf16.mxu0 %v1465
        %1529 = vmatpush1.bf16.msra.mxu0 %v1464
        %1530 = vmatprep.subr.bf16.mxu0 %v1467
        %1531 = vmatpush1.bf16.msra.mxu0 %v1466
        %1532 = vmatprep.subr.bf16.mxu0 %v1469
        %1533 = vmatpush1.bf16.msra.mxu0 %v1468
        %1534 = vmatprep.subr.bf16.mxu0 %v1471
        %1535 = vmatpush1.bf16.msra.mxu0 %v1470
        %1536 = vmatprep.subr.bf16.mxu0 %v1473
        %1537 = vmatpush1.bf16.msra.mxu0 %v1472
        %1538 = vmatprep.subr.bf16.mxu0 %v1475
        %1539 = vmatpush1.bf16.msra.mxu0 %v1474
        %1540 = vmatprep.mubr.bf16.mxu0 %v1297
        %1541 = vmatmul.mubr.bf16.gmra.mrb[0].mxu0 %v1296
        %v1542 = vpop.f32.mrb[0].mxu0
        %v1543 = vadd.f32 %v1341, %v1542
        %v1544 = vpop.f32.mrb[0].mxu0
        %v1545 = vadd.f32 %v1345, %v1544
        %v1546 = vpop.f32.mrb[0].mxu0
        %v1547 = vadd.f32 %v1341, %v1546
        %v1548 = vpop.f32.mrb[0].mxu0
        %v1549 = vadd.f32 %v1345, %v1548
        %1550 = vmatprep.mubr.bf16.mxu0 %v1299
        %1551 = vmatmul.mubr.bf16.gmra.mrb[0].mxu0 %v1298
        %v1552 = vpop.f32.mrb[0].mxu0
        %v1553 = vadd.f32 %v1341, %v1552
        %v1554 = vpop.f32.mrb[0].mxu0
        %v1555 = vadd.f32 %v1345, %v1554
        %v1556 = vpop.f32.mrb[0].mxu0
        %v1557 = vadd.f32 %v1341, %v1556
        %v1558 = vpop.f32.mrb[0].mxu0
        %v1559 = vadd.f32 %v1345, %v1558
        %1560 = vmatprep.mubr.bf16.mxu0 %v1301
        %1561 = vmatmul.mubr.bf16.gmra.mrb[0].mxu0 %v1300
        %v1562 = vpop.f32.mrb[0].mxu0
        %v1563 = vadd.f32 %v1341, %v1562
        %v1564 = vpop.f32.mrb[0].mxu0
        %v1565 = vadd.f32 %v1345, %v1564
        %v1566 = vpop.f32.mrb[0].mxu0
        %v1567 = vadd.f32 %v1341, %v1566
        %v1568 = vpop.f32.mrb[0].mxu0
        %v1569 = vadd.f32 %v1345, %v1568
        %1570 = vmatprep.mubr.bf16.mxu0 %v1303
        %1571 = vmatmul.mubr.bf16.gmra.mrb[0].mxu0 %v1302
        %v1572 = vpop.f32.mrb[0].mxu0
        %v1573 = vadd.f32 %v1341, %v1572
        %v1574 = vpop.f32.mrb[0].mxu0
        %v1575 = vadd.f32 %v1345, %v1574
        %v1576 = vpop.f32.mrb[0].mxu0
        %v1577 = vadd.f32 %v1341, %v1576
        %v1578 = vpop.f32.mrb[0].mxu0
        %v1579 = vadd.f32 %v1345, %v1578
        %1580 = vdwg.mxu0
        %v1581 = vmax.f32 %v1543, 0.0
        %v1582 = vmax.f32 %v1545, 0.0
        %v1583 = vmax.f32 %v1547, 0.0
        %v1584 = vmax.f32 %v1549, 0.0
        %v1585 = vmax.f32 %v1553, 0.0
        %v1586 = vmax.f32 %v1555, 0.0
        %v1587 = vmax.f32 %v1557, 0.0
        %v1588 = vmax.f32 %v1559, 0.0
        %v1589 = vmax.f32 %v1563, 0.0
        %v1590 = vmax.f32 %v1565, 0.0
        %v1591 = vmax.f32 %v1567, 0.0
        %v1592 = vmax.f32 %v1569, 0.0
        %v1593 = vmax.f32 %v1573, 0.0
        %v1594 = vmax.f32 %v1575, 0.0
        %v1595 = vmax.f32 %v1577, 0.0
        %v1596 = vmax.f32 %v1579, 0.0
        %v1597 = vmax.f32 %v1581, %v1582
        %v1598 = vmax.f32 %v1583, %v1584
        %v1599 = vmax.f32 %v1585, %v1586
        %v1600 = vmax.f32 %v1587, %v1588
        %v1601 = vmax.f32 %v1589, %v1590
        %v1602 = vmax.f32 %v1591, %v1592
        %v1603 = vmax.f32 %v1593, %v1594
        %v1604 = vmax.f32 %v1595, %v1596
        %v1613 = vrot.slane %v1598, 7
        %vm1614 = vcmask 1041409
        %v1615 = vsel %vm1614, %v1613, %v1597
        %v1616 = vrot.slane %v1599, 6
        %vm1617 = vcmask 1042434
        %v1618 = vsel %vm1617, %v1616, %v1615
        %v1619 = vrot.slane %v1600, 5
        %vm1620 = vcmask 1043459
        %v1621 = vsel %vm1620, %v1619, %v1618
        %v1622 = vrot.slane %v1601, 4
        %vm1623 = vcmask 1044484
        %v1624 = vsel %vm1623, %v1622, %v1621
        %v1625 = vrot.slane %v1602, 3
        %vm1626 = vcmask 1045509
        %v1627 = vsel %vm1626, %v1625, %v1624
        %v1628 = vrot.slane %v1603, 2
        %vm1629 = vcmask 1046534
        %v1630 = vsel %vm1629, %v1628, %v1627
        %v1631 = vrot.slane %v1604, 1
        %vm1632 = vcmask 1047559
        %v1633 = vsel %vm1632, %v1631, %v1630
        %v1635 = vrot.slane %v1597, 1
        %v1636 = vsel %vm1614, %v1598, %v1635
        %v1637 = vrot.slane %v1599, 7
        %v1638 = vsel %vm1617, %v1637, %v1636
        %v1639 = vrot.slane %v1600, 6
        %v1640 = vsel %vm1620, %v1639, %v1638
        %v1641 = vrot.slane %v1601, 5
        %v1642 = vsel %vm1623, %v1641, %v1640
        %v1643 = vrot.slane %v1602, 4
        %v1644 = vsel %vm1626, %v1643, %v1642
        %v1645 = vrot.slane %v1603, 3
        %v1646 = vsel %vm1629, %v1645, %v1644
        %v1647 = vrot.slane %v1604, 2
        %v1648 = vsel %vm1632, %v1647, %v1646
        %v1650 = vrot.slane %v1597, 2
        %v1651 = vrot.slane %v1598, 1
        %v1652 = vsel %vm1614, %v1651, %v1650
        %v1653 = vsel %vm1617, %v1599, %v1652
        %v1654 = vrot.slane %v1600, 7
        %v1655 = vsel %vm1620, %v1654, %v1653
        %v1656 = vrot.slane %v1601, 6
        %v1657 = vsel %vm1623, %v1656, %v1655
        %v1658 = vrot.slane %v1602, 5
        %v1659 = vsel %vm1626, %v1658, %v1657
        %v1660 = vrot.slane %v1603, 4
        %v1661 = vsel %vm1629, %v1660, %v1659
        %v1662 = vrot.slane %v1604, 3
        %v1663 = vsel %vm1632, %v1662, %v1661
        %v1665 = vrot.slane %v1597, 3
        %v1666 = vrot.slane %v1598, 2
        %v1667 = vsel %vm1614, %v1666, %v1665
        %v1668 = vrot.slane %v1599, 1
        %v1669 = vsel %vm1617, %v1668, %v1667
        %v1670 = vsel %vm1620, %v1600, %v1669
        %v1671 = vrot.slane %v1601, 7
        %v1672 = vsel %vm1623, %v1671, %v1670
        %v1673 = vrot.slane %v1602, 6
        %v1674 = vsel %vm1626, %v1673, %v1672
        %v1675 = vrot.slane %v1603, 5
        %v1676 = vsel %vm1629, %v1675, %v1674
        %v1677 = vrot.slane %v1604, 4
        %v1678 = vsel %vm1632, %v1677, %v1676
        %v1680 = vrot.slane %v1597, 4
        %v1681 = vrot.slane %v1598, 3
        %v1682 = vsel %vm1614, %v1681, %v1680
        %v1683 = vrot.slane %v1599, 2
        %v1684 = vsel %vm1617, %v1683, %v1682
        %v1685 = vrot.slane %v1600, 1
        %v1686 = vsel %vm1620, %v1685, %v1684
        %v1687 = vsel %vm1623, %v1601, %v1686
        %v1688 = vrot.slane %v1602, 7
        %v1689 = vsel %vm1626, %v1688, %v1687
        %v1690 = vrot.slane %v1603, 6
        %v1691 = vsel %vm1629, %v1690, %v1689
        %v1692 = vrot.slane %v1604, 5
        %v1693 = vsel %vm1632, %v1692, %v1691
        %v1695 = vrot.slane %v1597, 5
        %v1696 = vrot.slane %v1598, 4
        %v1697 = vsel %vm1614, %v1696, %v1695
        %v1698 = vrot.slane %v1599, 3
        %v1699 = vsel %vm1617, %v1698, %v1697
        %v1700 = vrot.slane %v1600, 2
        %v1701 = vsel %vm1620, %v1700, %v1699
        %v1702 = vrot.slane %v1601, 1
        %v1703 = vsel %vm1623, %v1702, %v1701
        %v1704 = vsel %vm1626, %v1602, %v1703
        %v1705 = vrot.slane %v1603, 7
        %v1706 = vsel %vm1629, %v1705, %v1704
        %v1707 = vrot.slane %v1604, 6
        %v1708 = vsel %vm1632, %v1707, %v1706
        %v1710 = vrot.slane %v1597, 6
        %v1711 = vrot.slane %v1598, 5
        %v1712 = vsel %vm1614, %v1711, %v1710
        %v1713 = vrot.slane %v1599, 4
        %v1714 = vsel %vm1617, %v1713, %v1712
        %v1715 = vrot.slane %v1600, 3
        %v1716 = vsel %vm1620, %v1715, %v1714
        %v1717 = vrot.slane %v1601, 2
        %v1718 = vsel %vm1623, %v1717, %v1716
        %v1719 = vrot.slane %v1602, 1
        %v1720 = vsel %vm1626, %v1719, %v1718
        %v1721 = vsel %vm1629, %v1603, %v1720
        %v1722 = vrot.slane %v1604, 7
        %v1723 = vsel %vm1632, %v1722, %v1721
        %v1725 = vrot.slane %v1597, 7
        %v1726 = vrot.slane %v1598, 6
        %v1727 = vsel %vm1614, %v1726, %v1725
        %v1728 = vrot.slane %v1599, 5
        %v1729 = vsel %vm1617, %v1728, %v1727
        %v1730 = vrot.slane %v1600, 4
        %v1731 = vsel %vm1620, %v1730, %v1729
        %v1732 = vrot.slane %v1601, 3
        %v1733 = vsel %vm1623, %v1732, %v1731
        %v1734 = vrot.slane %v1602, 2
        %v1735 = vsel %vm1626, %v1734, %v1733
        %v1736 = vrot.slane %v1603, 1
        %v1737 = vsel %vm1629, %v1736, %v1735
        %v1738 = vsel %vm1632, %v1604, %v1737
        %v1740 = vpack.c.bf16 %v1633, %v1633
        %v1741 = vpack.c.bf16 %v1648, %v1648
        %v1742 = vpack.c.bf16 %v1663, %v1663
        %v1743 = vpack.c.bf16 %v1678, %v1678
        %v1744 = vpack.c.bf16 %v1693, %v1693
        %v1745 = vpack.c.bf16 %v1708, %v1708
        %v1746 = vpack.c.bf16 %v1723, %v1723
        %v1747 = vpack.c.bf16 %v1738, %v1738
        %v1748 = vld [vmem:[%s7] sm:$0xf]
        %v1749 = vld [vmem:[%s7 + $0x4] sm:$0xf]
        %v1750 = vld [vmem:[%s7 + $0x8] sm:$0xf]
        %v1751 = vld [vmem:[%s7 + $0xc] sm:$0xf]
        %v1752 = vld [vmem:[%s7 + $0x10] sm:$0xf]
        %v1753 = vld [vmem:[%s7 + $0x14] sm:$0xf]
        %v1754 = vld [vmem:[%s7 + $0x18] sm:$0xf]
        %v1755 = vld [vmem:[%s7 + $0x1c] sm:$0xf]
        %v1756 = vld [vmem:[%s7 + $0x20] sm:$0xf]
        %v1757 = vld [vmem:[%s7 + $0x24] sm:$0xf]
        %v1758 = vld [vmem:[%s7 + $0x28] sm:$0xf]
        %v1759 = vld [vmem:[%s7 + $0x2c] sm:$0xf]
        %v1760 = vld [vmem:[%s7 + $0x30] sm:$0xf]
        %v1761 = vld [vmem:[%s7 + $0x34] sm:$0xf]
        %v1762 = vld [vmem:[%s7 + $0x38] sm:$0xf]
        %v1763 = vld [vmem:[%s7 + $0x3c] sm:$0xf]
        %v1764 = vld [vmem:[%s7 + $0x40] sm:$0xf]
        %v1765 = vld [vmem:[%s7 + $0x44] sm:$0xf]
        %v1766 = vld [vmem:[%s7 + $0x48] sm:$0xf]
        %v1767 = vld [vmem:[%s7 + $0x4c] sm:$0xf]
        %v1768 = vld [vmem:[%s7 + $0x50] sm:$0xf]
        %v1769 = vld [vmem:[%s7 + $0x54] sm:$0xf]
        %v1770 = vld [vmem:[%s7 + $0x58] sm:$0xf]
        %v1771 = vld [vmem:[%s7 + $0x5c] sm:$0xf]
        %v1772 = vld [vmem:[%s7 + $0x60] sm:$0xf]
        %v1773 = vld [vmem:[%s7 + $0x64] sm:$0xf]
        %v1774 = vld [vmem:[%s7 + $0x68] sm:$0xf]
        %v1775 = vld [vmem:[%s7 + $0x6c] sm:$0xf]
        %v1776 = vld [vmem:[%s7 + $0x70] sm:$0xf]
        %v1777 = vld [vmem:[%s7 + $0x74] sm:$0xf]
        %v1778 = vld [vmem:[%s7 + $0x78] sm:$0xf]
        %v1779 = vld [vmem:[%s7 + $0x7c] sm:$0xf]
        %v1780 = vld [vmem:[%s7 + $0x80] sm:$0xf]
        %v1781 = vld [vmem:[%s7 + $0x84] sm:$0xf]
        %v1782 = vld [vmem:[%s7 + $0x88] sm:$0xf]
        %v1783 = vld [vmem:[%s7 + $0x8c] sm:$0xf]
        %v1784 = vld [vmem:[%s7 + $0x90] sm:$0xf]
        %v1785 = vld [vmem:[%s7 + $0x94] sm:$0xf]
        %v1786 = vld [vmem:[%s7 + $0x98] sm:$0xf]
        %v1787 = vld [vmem:[%s7 + $0x9c] sm:$0xf]
        %v1788 = vld [vmem:[%s7 + $0xa0] sm:$0xf]
        %v1789 = vld [vmem:[%s7 + $0xa4] sm:$0xf]
        %v1790 = vld [vmem:[%s7 + $0xa8] sm:$0xf]
        %v1791 = vld [vmem:[%s7 + $0xac] sm:$0xf]
        %v1792 = vld [vmem:[%s7 + $0xb0] sm:$0xf]
        %v1793 = vld [vmem:[%s7 + $0xb4] sm:$0xf]
        %v1794 = vld [vmem:[%s7 + $0xb8] sm:$0xf]
        %v1795 = vld [vmem:[%s7 + $0xbc] sm:$0xf]
        %v1796 = vld [vmem:[%s7 + $0xc0] sm:$0xf]
        %v1797 = vld [vmem:[%s7 + $0xc4] sm:$0xf]
        %v1798 = vld [vmem:[%s7 + $0xc8] sm:$0xf]
        %v1799 = vld [vmem:[%s7 + $0xcc] sm:$0xf]
        %v1800 = vld [vmem:[%s7 + $0xd0] sm:$0xf]
        %v1801 = vld [vmem:[%s7 + $0xd4] sm:$0xf]
        %v1802 = vld [vmem:[%s7 + $0xd8] sm:$0xf]
        %v1803 = vld [vmem:[%s7 + $0xdc] sm:$0xf]
        %v1804 = vld [vmem:[%s7 + $0xe0] sm:$0xf]
        %v1805 = vld [vmem:[%s7 + $0xe4] sm:$0xf]
        %v1806 = vld [vmem:[%s7 + $0xe8] sm:$0xf]
        %v1807 = vld [vmem:[%s7 + $0xec] sm:$0xf]
        %v1808 = vld [vmem:[%s7 + $0xf0] sm:$0xf]
        %v1809 = vld [vmem:[%s7 + $0xf4] sm:$0xf]
        %v1810 = vld [vmem:[%s7 + $0xf8] sm:$0xf]
        %v1811 = vld [vmem:[%s7 + $0xfc] sm:$0xf]
        %v1812 = vld [vmem:[%s7 + $0x100] sm:$0xf]
        %v1813 = vld [vmem:[%s7 + $0x104] sm:$0xf]
        %v1814 = vld [vmem:[%s7 + $0x108] sm:$0xf]
        %v1815 = vld [vmem:[%s7 + $0x10c] sm:$0xf]
        %v1816 = vld [vmem:[%s7 + $0x110] sm:$0xf]
        %v1817 = vld [vmem:[%s7 + $0x114] sm:$0xf]
        %v1818 = vld [vmem:[%s7 + $0x118] sm:$0xf]
        %v1819 = vld [vmem:[%s7 + $0x11c] sm:$0xf]
        %v1820 = vld [vmem:[%s7 + $0x120] sm:$0xf]
        %v1821 = vld [vmem:[%s7 + $0x124] sm:$0xf]
        %v1822 = vld [vmem:[%s7 + $0x128] sm:$0xf]
        %v1823 = vld [vmem:[%s7 + $0x12c] sm:$0xf]
        %v1824 = vld [vmem:[%s7 + $0x130] sm:$0xf]
        %v1825 = vld [vmem:[%s7 + $0x134] sm:$0xf]
        %v1826 = vld [vmem:[%s7 + $0x138] sm:$0xf]
        %v1827 = vld [vmem:[%s7 + $0x13c] sm:$0xf]
        %v1828 = vld [vmem:[%s7 + $0x140] sm:$0xf]
        %v1829 = vld [vmem:[%s7 + $0x144] sm:$0xf]
        %v1830 = vld [vmem:[%s7 + $0x148] sm:$0xf]
        %v1831 = vld [vmem:[%s7 + $0x14c] sm:$0xf]
        %v1832 = vld [vmem:[%s7 + $0x150] sm:$0xf]
        %v1833 = vld [vmem:[%s7 + $0x154] sm:$0xf]
        %v1834 = vld [vmem:[%s7 + $0x158] sm:$0xf]
        %v1835 = vld [vmem:[%s7 + $0x15c] sm:$0xf]
        %v1836 = vld [vmem:[%s7 + $0x160] sm:$0xf]
        %v1837 = vld [vmem:[%s7 + $0x164] sm:$0xf]
        %v1838 = vld [vmem:[%s7 + $0x168] sm:$0xf]
        %v1839 = vld [vmem:[%s7 + $0x16c] sm:$0xf]
        %v1840 = vld [vmem:[%s7 + $0x170] sm:$0xf]
        %v1841 = vld [vmem:[%s7 + $0x174] sm:$0xf]
        %v1842 = vld [vmem:[%s7 + $0x178] sm:$0xf]
        %v1843 = vld [vmem:[%s7 + $0x17c] sm:$0xf]
        %v1844 = vld [vmem:[%s7 + $0x180] sm:$0xf]
        %v1845 = vld [vmem:[%s7 + $0x184] sm:$0xf]
        %v1846 = vld [vmem:[%s7 + $0x188] sm:$0xf]
        %v1847 = vld [vmem:[%s7 + $0x18c] sm:$0xf]
        %v1848 = vld [vmem:[%s7 + $0x190] sm:$0xf]
        %v1849 = vld [vmem:[%s7 + $0x194] sm:$0xf]
        %v1850 = vld [vmem:[%s7 + $0x198] sm:$0xf]
        %v1851 = vld [vmem:[%s7 + $0x19c] sm:$0xf]
        %v1852 = vld [vmem:[%s7 + $0x1a0] sm:$0xf]
        %v1853 = vld [vmem:[%s7 + $0x1a4] sm:$0xf]
        %v1854 = vld [vmem:[%s7 + $0x1a8] sm:$0xf]
        %v1855 = vld [vmem:[%s7 + $0x1ac] sm:$0xf]
        %v1856 = vld [vmem:[%s7 + $0x1b0] sm:$0xf]
        %v1857 = vld [vmem:[%s7 + $0x1b4] sm:$0xf]
        %v1858 = vld [vmem:[%s7 + $0x1b8] sm:$0xf]
        %v1859 = vld [vmem:[%s7 + $0x1bc] sm:$0xf]
        %v1860 = vld [vmem:[%s7 + $0x1c0] sm:$0xf]
        %v1861 = vld [vmem:[%s7 + $0x1c4] sm:$0xf]
        %v1862 = vld [vmem:[%s7 + $0x1c8] sm:$0xf]
        %v1863 = vld [vmem:[%s7 + $0x1cc] sm:$0xf]
        %v1864 = vld [vmem:[%s7 + $0x1d0] sm:$0xf]
        %v1865 = vld [vmem:[%s7 + $0x1d4] sm:$0xf]
        %v1866 = vld [vmem:[%s7 + $0x1d8] sm:$0xf]
        %v1867 = vld [vmem:[%s7 + $0x1dc] sm:$0xf]
        %v1868 = vld [vmem:[%s7 + $0x1e0] sm:$0xf]
        %v1869 = vld [vmem:[%s7 + $0x1e4] sm:$0xf]
        %v1870 = vld [vmem:[%s7 + $0x1e8] sm:$0xf]
        %v1871 = vld [vmem:[%s7 + $0x1ec] sm:$0xf]
        %v1872 = vld [vmem:[%s7 + $0x1f0] sm:$0xf]
        %v1873 = vld [vmem:[%s7 + $0x1f4] sm:$0xf]
        %v1874 = vld [vmem:[%s7 + $0x1f8] sm:$0xf]
        %v1875 = vld [vmem:[%s7 + $0x1fc] sm:$0xf]
        %v1876 = vld [vmem:[%s8] sm:$0x1]
        %v1878 = vlaneseq
        %v1879 = vshrl.u32 %v1878, 7
        %v1880 = vsub.s32 0, %v1879
        %v1881 = vrot.slane %v1876, %v1880
        %v2011 = vunpack.c.l.b16 %v1748
        %v2012 = vunpack.c.l.b16 %v1749
        %v2013 = vunpack.c.l.b16 %v1750
        %v2014 = vunpack.c.l.b16 %v1751
        %v2015 = vunpack.c.l.b16 %v1752
        %v2016 = vunpack.c.l.b16 %v1753
        %v2017 = vunpack.c.l.b16 %v1754
        %v2018 = vunpack.c.l.b16 %v1755
        %v2019 = vunpack.c.l.b16 %v1756
        %v2020 = vunpack.c.l.b16 %v1757
        %v2021 = vunpack.c.l.b16 %v1758
        %v2022 = vunpack.c.l.b16 %v1759
        %v2023 = vunpack.c.l.b16 %v1760
        %v2024 = vunpack.c.l.b16 %v1761
        %v2025 = vunpack.c.l.b16 %v1762
        %v2026 = vunpack.c.l.b16 %v1763
        %v2027 = vunpack.c.l.b16 %v1764
        %v2028 = vunpack.c.l.b16 %v1765
        %v2029 = vunpack.c.l.b16 %v1766
        %v2030 = vunpack.c.l.b16 %v1767
        %v2031 = vunpack.c.l.b16 %v1768
        %v2032 = vunpack.c.l.b16 %v1769
        %v2033 = vunpack.c.l.b16 %v1770
        %v2034 = vunpack.c.l.b16 %v1771
        %v2035 = vunpack.c.l.b16 %v1772
        %v2036 = vunpack.c.l.b16 %v1773
        %v2037 = vunpack.c.l.b16 %v1774
        %v2038 = vunpack.c.l.b16 %v1775
        %v2039 = vunpack.c.l.b16 %v1776
        %v2040 = vunpack.c.l.b16 %v1777
        %v2041 = vunpack.c.l.b16 %v1778
        %v2042 = vunpack.c.l.b16 %v1779
        %v2043 = vunpack.c.l.b16 %v1780
        %v2044 = vunpack.c.l.b16 %v1781
        %v2045 = vunpack.c.l.b16 %v1782
        %v2046 = vunpack.c.l.b16 %v1783
        %v2047 = vunpack.c.l.b16 %v1784
        %v2048 = vunpack.c.l.b16 %v1785
        %v2049 = vunpack.c.l.b16 %v1786
        %v2050 = vunpack.c.l.b16 %v1787
        %v2051 = vunpack.c.l.b16 %v1788
        %v2052 = vunpack.c.l.b16 %v1789
        %v2053 = vunpack.c.l.b16 %v1790
        %v2054 = vunpack.c.l.b16 %v1791
        %v2055 = vunpack.c.l.b16 %v1792
        %v2056 = vunpack.c.l.b16 %v1793
        %v2057 = vunpack.c.l.b16 %v1794
        %v2058 = vunpack.c.l.b16 %v1795
        %v2059 = vunpack.c.l.b16 %v1796
        %v2060 = vunpack.c.l.b16 %v1797
        %v2061 = vunpack.c.l.b16 %v1798
        %v2062 = vunpack.c.l.b16 %v1799
        %v2063 = vunpack.c.l.b16 %v1800
        %v2064 = vunpack.c.l.b16 %v1801
        %v2065 = vunpack.c.l.b16 %v1802
        %v2066 = vunpack.c.l.b16 %v1803
        %v2067 = vunpack.c.l.b16 %v1804
        %v2068 = vunpack.c.l.b16 %v1805
        %v2069 = vunpack.c.l.b16 %v1806
        %v2070 = vunpack.c.l.b16 %v1807
        %v2071 = vunpack.c.l.b16 %v1808
        %v2072 = vunpack.c.l.b16 %v1809
        %v2073 = vunpack.c.l.b16 %v1810
        %v2074 = vunpack.c.l.b16 %v1811
        %v2075 = vunpack.c.l.b16 %v1812
        %v2076 = vunpack.c.l.b16 %v1813
        %v2077 = vunpack.c.l.b16 %v1814
        %v2078 = vunpack.c.l.b16 %v1815
        %v2079 = vunpack.c.l.b16 %v1816
        %v2080 = vunpack.c.l.b16 %v1817
        %v2081 = vunpack.c.l.b16 %v1818
        %v2082 = vunpack.c.l.b16 %v1819
        %v2083 = vunpack.c.l.b16 %v1820
        %v2084 = vunpack.c.l.b16 %v1821
        %v2085 = vunpack.c.l.b16 %v1822
        %v2086 = vunpack.c.l.b16 %v1823
        %v2087 = vunpack.c.l.b16 %v1824
        %v2088 = vunpack.c.l.b16 %v1825
        %v2089 = vunpack.c.l.b16 %v1826
        %v2090 = vunpack.c.l.b16 %v1827
        %v2091 = vunpack.c.l.b16 %v1828
        %v2092 = vunpack.c.l.b16 %v1829
        %v2093 = vunpack.c.l.b16 %v1830
        %v2094 = vunpack.c.l.b16 %v1831
        %v2095 = vunpack.c.l.b16 %v1832
        %v2096 = vunpack.c.l.b16 %v1833
        %v2097 = vunpack.c.l.b16 %v1834
        %v2098 = vunpack.c.l.b16 %v1835
        %v2099 = vunpack.c.l.b16 %v1836
        %v2100 = vunpack.c.l.b16 %v1837
        %v2101 = vunpack.c.l.b16 %v1838
        %v2102 = vunpack.c.l.b16 %v1839
        %v2103 = vunpack.c.l.b16 %v1840
        %v2104 = vunpack.c.l.b16 %v1841
        %v2105 = vunpack.c.l.b16 %v1842
        %v2106 = vunpack.c.l.b16 %v1843
        %v2107 = vunpack.c.l.b16 %v1844
        %v2108 = vunpack.c.l.b16 %v1845
        %v2109 = vunpack.c.l.b16 %v1846
        %v2110 = vunpack.c.l.b16 %v1847
        %v2111 = vunpack.c.l.b16 %v1848
        %v2112 = vunpack.c.l.b16 %v1849
        %v2113 = vunpack.c.l.b16 %v1850
        %v2114 = vunpack.c.l.b16 %v1851
        %v2115 = vunpack.c.l.b16 %v1852
        %v2116 = vunpack.c.l.b16 %v1853
        %v2117 = vunpack.c.l.b16 %v1854
        %v2118 = vunpack.c.l.b16 %v1855
        %v2119 = vunpack.c.l.b16 %v1856
        %v2120 = vunpack.c.l.b16 %v1857
        %v2121 = vunpack.c.l.b16 %v1858
        %v2122 = vunpack.c.l.b16 %v1859
        %v2123 = vunpack.c.l.b16 %v1860
        %v2124 = vunpack.c.l.b16 %v1861
        %v2125 = vunpack.c.l.b16 %v1862
        %v2126 = vunpack.c.l.b16 %v1863
        %v2127 = vunpack.c.l.b16 %v1864
        %v2128 = vunpack.c.l.b16 %v1865
        %v2129 = vunpack.c.l.b16 %v1866
        %v2130 = vunpack.c.l.b16 %v1867
        %v2131 = vunpack.c.l.b16 %v1868
        %v2132 = vunpack.c.l.b16 %v1869
        %v2133 = vunpack.c.l.b16 %v1870
        %v2134 = vunpack.c.l.b16 %v1871
        %v2135 = vunpack.c.l.b16 %v1872
        %v2136 = vunpack.c.l.b16 %v1873
        %v2137 = vunpack.c.l.b16 %v1874
        %v2138 = vunpack.c.l.b16 %v1875
        %v2139 = vpack.c.b16 %v2012, %v2011
        %v2140 = vpack.c.b16 %v2014, %v2013
        %v2141 = vpack.c.b16 %v2016, %v2015
        %v2142 = vpack.c.b16 %v2018, %v2017
        %v2143 = vpack.c.b16 %v2020, %v2019
        %v2144 = vpack.c.b16 %v2022, %v2021
        %v2145 = vpack.c.b16 %v2024, %v2023
        %v2146 = vpack.c.b16 %v2026, %v2025
        %v2147 = vpack.c.b16 %v2028, %v2027
        %v2148 = vpack.c.b16 %v2030, %v2029
        %v2149 = vpack.c.b16 %v2032, %v2031
        %v2150 = vpack.c.b16 %v2034, %v2033
        %v2151 = vpack.c.b16 %v2036, %v2035
        %v2152 = vpack.c.b16 %v2038, %v2037
        %v2153 = vpack.c.b16 %v2040, %v2039
        %v2154 = vpack.c.b16 %v2042, %v2041
        %v2155 = vpack.c.b16 %v2044, %v2043
        %v2156 = vpack.c.b16 %v2046, %v2045
        %v2157 = vpack.c.b16 %v2048, %v2047
        %v2158 = vpack.c.b16 %v2050, %v2049
        %v2159 = vpack.c.b16 %v2052, %v2051
        %v2160 = vpack.c.b16 %v2054, %v2053
        %v2161 = vpack.c.b16 %v2056, %v2055
        %v2162 = vpack.c.b16 %v2058, %v2057
        %v2163 = vpack.c.b16 %v2060, %v2059
        %v2164 = vpack.c.b16 %v2062, %v2061
        %v2165 = vpack.c.b16 %v2064, %v2063
        %v2166 = vpack.c.b16 %v2066, %v2065
        %v2167 = vpack.c.b16 %v2068, %v2067
        %v2168 = vpack.c.b16 %v2070, %v2069
        %v2169 = vpack.c.b16 %v2072, %v2071
        %v2170 = vpack.c.b16 %v2074, %v2073
        %v2171 = vpack.c.b16 %v2076, %v2075
        %v2172 = vpack.c.b16 %v2078, %v2077
        %v2173 = vpack.c.b16 %v2080, %v2079
        %v2174 = vpack.c.b16 %v2082, %v2081
        %v2175 = vpack.c.b16 %v2084, %v2083
        %v2176 = vpack.c.b16 %v2086, %v2085
        %v2177 = vpack.c.b16 %v2088, %v2087
        %v2178 = vpack.c.b16 %v2090, %v2089
        %v2179 = vpack.c.b16 %v2092, %v2091
        %v2180 = vpack.c.b16 %v2094, %v2093
        %v2181 = vpack.c.b16 %v2096, %v2095
        %v2182 = vpack.c.b16 %v2098, %v2097
        %v2183 = vpack.c.b16 %v2100, %v2099
        %v2184 = vpack.c.b16 %v2102, %v2101
        %v2185 = vpack.c.b16 %v2104, %v2103
        %v2186 = vpack.c.b16 %v2106, %v2105
        %v2187 = vpack.c.b16 %v2108, %v2107
        %v2188 = vpack.c.b16 %v2110, %v2109
        %v2189 = vpack.c.b16 %v2112, %v2111
        %v2190 = vpack.c.b16 %v2114, %v2113
        %v2191 = vpack.c.b16 %v2116, %v2115
        %v2192 = vpack.c.b16 %v2118, %v2117
        %v2193 = vpack.c.b16 %v2120, %v2119
        %v2194 = vpack.c.b16 %v2122, %v2121
        %v2195 = vpack.c.b16 %v2124, %v2123
        %v2196 = vpack.c.b16 %v2126, %v2125
        %v2197 = vpack.c.b16 %v2128, %v2127
        %v2198 = vpack.c.b16 %v2130, %v2129
        %v2199 = vpack.c.b16 %v2132, %v2131
        %v2200 = vpack.c.b16 %v2134, %v2133
        %v2201 = vpack.c.b16 %v2136, %v2135
        %v2202 = vpack.c.b16 %v2138, %v2137
        %2267 = vmatprep.subr.bf16.mxu0 0
        %2268 = vmatpush1.bf16.msra.mxu0 %v2139
        %2269 = vmatprep.subr.bf16.mxu0 0
        %2270 = vmatpush1.bf16.msra.mxu0 %v2140
        %2271 = vmatprep.subr.bf16.mxu0 0
        %2272 = vmatpush1.bf16.msra.mxu0 %v2141
        %2273 = vmatprep.subr.bf16.mxu0 0
        %2274 = vmatpush1.bf16.msra.mxu0 %v2142
        %2275 = vmatprep.subr.bf16.mxu0 0
        %2276 = vmatpush1.bf16.msra.mxu0 %v2143
        %2277 = vmatprep.subr.bf16.mxu0 0
        %2278 = vmatpush1.bf16.msra.mxu0 %v2144
        %2279 = vmatprep.subr.bf16.mxu0 0
        %2280 = vmatpush1.bf16.msra.mxu0 %v2145
        %2281 = vmatprep.subr.bf16.mxu0 0
        %2282 = vmatpush1.bf16.msra.mxu0 %v2146
        %2283 = vmatprep.subr.bf16.mxu0 0
        %2284 = vmatpush1.bf16.msra.mxu0 %v2147
        %2285 = vmatprep.subr.bf16.mxu0 0
        %2286 = vmatpush1.bf16.msra.mxu0 %v2148
        %2287 = vmatprep.subr.bf16.mxu0 0
        %2288 = vmatpush1.bf16.msra.mxu0 %v2149
        %2289 = vmatprep.subr.bf16.mxu0 0
        %2290 = vmatpush1.bf16.msra.mxu0 %v2150
        %2291 = vmatprep.subr.bf16.mxu0 0
        %2292 = vmatpush1.bf16.msra.mxu0 %v2151
        %2293 = vmatprep.subr.bf16.mxu0 0
        %2294 = vmatpush1.bf16.msra.mxu0 %v2152
        %2295 = vmatprep.subr.bf16.mxu0 0
        %2296 = vmatpush1.bf16.msra.mxu0 %v2153
        %2297 = vmatprep.subr.bf16.mxu0 0
        %2298 = vmatpush1.bf16.msra.mxu0 %v2154
        %2299 = vmatprep.mubr.bf16.mxu0 %v1741
        %2300 = vmatmul.mubr.bf16.gmra.mrb[0].mxu0 %v1740
        %v2301 = vpop.f32.mrb[0].mxu0
        %v2302 = vadd.f32 %v1881, %v2301
        %v2303 = vpop.f32.mrb[0].mxu0
        %v2304 = vpop.f32.mrb[0].mxu0
        %v2305 = vpop.f32.mrb[0].mxu0
        %2306 = vdwg.mxu0
        %2307 = vmatprep.subr.bf16.mxu0 0
        %2308 = vmatpush1.bf16.msra.mxu0 %v2155
        %2309 = vmatprep.subr.bf16.mxu0 0
        %2310 = vmatpush1.bf16.msra.mxu0 %v2156
        %2311 = vmatprep.subr.bf16.mxu0 0
        %2312 = vmatpush1.bf16.msra.mxu0 %v2157
        %2313 = vmatprep.subr.bf16.mxu0 0
        %2314 = vmatpush1.bf16.msra.mxu0 %v2158
        %2315 = vmatprep.subr.bf16.mxu0 0
        %2316 = vmatpush1.bf16.msra.mxu0 %v2159
        %2317 = vmatprep.subr.bf16.mxu0 0
        %2318 = vmatpush1.bf16.msra.mxu0 %v2160
        %2319 = vmatprep.subr.bf16.mxu0 0
        %2320 = vmatpush1.bf16.msra.mxu0 %v2161
        %2321 = vmatprep.subr.bf16.mxu0 0
        %2322 = vmatpush1.bf16.msra.mxu0 %v2162
        %2323 = vmatprep.subr.bf16.mxu0 0
        %2324 = vmatpush1.bf16.msra.mxu0 %v2163
        %2325 = vmatprep.subr.bf16.mxu0 0
        %2326 = vmatpush1.bf16.msra.mxu0 %v2164
        %2327 = vmatprep.subr.bf16.mxu0 0
        %2328 = vmatpush1.bf16.msra.mxu0 %v2165
        %2329 = vmatprep.subr.bf16.mxu0 0
        %2330 = vmatpush1.bf16.msra.mxu0 %v2166
        %2331 = vmatprep.subr.bf16.mxu0 0
        %2332 = vmatpush1.bf16.msra.mxu0 %v2167
        %2333 = vmatprep.subr.bf16.mxu0 0
        %2334 = vmatpush1.bf16.msra.mxu0 %v2168
        %2335 = vmatprep.subr.bf16.mxu0 0
        %2336 = vmatpush1.bf16.msra.mxu0 %v2169
        %2337 = vmatprep.subr.bf16.mxu0 0
        %2338 = vmatpush1.bf16.msra.mxu0 %v2170
        %2339 = vmatprep.mubr.bf16.mxu0 %v1743
        %2340 = vmatmul.mubr.bf16.gmra.mrb[0].mxu0 %v1742
        %v2341 = vpop.f32.mrb[0].mxu0
        %v2342 = vadd.f32 %v2302, %v2341
        %v2343 = vpop.f32.mrb[0].mxu0
        %v2344 = vpop.f32.mrb[0].mxu0
        %v2345 = vpop.f32.mrb[0].mxu0
        %2346 = vdwg.mxu0
        %2347 = vmatprep.subr.bf16.mxu0 0
        %2348 = vmatpush1.bf16.msra.mxu0 %v2171
        %2349 = vmatprep.subr.bf16.mxu0 0
        %2350 = vmatpush1.bf16.msra.mxu0 %v2172
        %2351 = vmatprep.subr.bf16.mxu0 0
        %2352 = vmatpush1.bf16.msra.mxu0 %v2173
        %2353 = vmatprep.subr.bf16.mxu0 0
        %2354 = vmatpush1.bf16.msra.mxu0 %v2174
        %2355 = vmatprep.subr.bf16.mxu0 0
        %2356 = vmatpush1.bf16.msra.mxu0 %v2175
        %2357 = vmatprep.subr.bf16.mxu0 0
        %2358 = vmatpush1.bf16.msra.mxu0 %v2176
        %2359 = vmatprep.subr.bf16.mxu0 0
        %2360 = vmatpush1.bf16.msra.mxu0 %v2177
        %2361 = vmatprep.subr.bf16.mxu0 0
        %2362 = vmatpush1.bf16.msra.mxu0 %v2178
        %2363 = vmatprep.subr.bf16.mxu0 0
        %2364 = vmatpush1.bf16.msra.mxu0 %v2179
        %2365 = vmatprep.subr.bf16.mxu0 0
        %2366 = vmatpush1.bf16.msra.mxu0 %v2180
        %2367 = vmatprep.subr.bf16.mxu0 0
        %2368 = vmatpush1.bf16.msra.mxu0 %v2181
        %2369 = vmatprep.subr.bf16.mxu0 0
        %2370 = vmatpush1.bf16.msra.mxu0 %v2182
        %2371 = vmatprep.subr.bf16.mxu0 0
        %2372 = vmatpush1.bf16.msra.mxu0 %v2183
        %2373 = vmatprep.subr.bf16.mxu0 0
        %2374 = vmatpush1.bf16.msra.mxu0 %v2184
        %2375 = vmatprep.subr.bf16.mxu0 0
        %2376 = vmatpush1.bf16.msra.mxu0 %v2185
        %2377 = vmatprep.subr.bf16.mxu0 0
        %2378 = vmatpush1.bf16.msra.mxu0 %v2186
        %2379 = vmatprep.mubr.bf16.mxu0 %v1745
        %2380 = vmatmul.mubr.bf16.gmra.mrb[0].mxu0 %v1744
        %v2381 = vpop.f32.mrb[0].mxu0
        %v2382 = vadd.f32 %v2342, %v2381
        %v2383 = vpop.f32.mrb[0].mxu0
        %v2384 = vpop.f32.mrb[0].mxu0
        %v2385 = vpop.f32.mrb[0].mxu0
        %2386 = vdwg.mxu0
        %2387 = vmatprep.subr.bf16.mxu0 0
        %2388 = vmatpush1.bf16.msra.mxu0 %v2187
        %2389 = vmatprep.subr.bf16.mxu0 0
        %2390 = vmatpush1.bf16.msra.mxu0 %v2188
        %2391 = vmatprep.subr.bf16.mxu0 0
        %2392 = vmatpush1.bf16.msra.mxu0 %v2189
        %2393 = vmatprep.subr.bf16.mxu0 0
        %2394 = vmatpush1.bf16.msra.mxu0 %v2190
        %2395 = vmatprep.subr.bf16.mxu0 0
        %2396 = vmatpush1.bf16.msra.mxu0 %v2191
        %2397 = vmatprep.subr.bf16.mxu0 0
        %2398 = vmatpush1.bf16.msra.mxu0 %v2192
        %2399 = vmatprep.subr.bf16.mxu0 0
        %2400 = vmatpush1.bf16.msra.mxu0 %v2193
        %2401 = vmatprep.subr.bf16.mxu0 0
        %2402 = vmatpush1.bf16.msra.mxu0 %v2194
        %2403 = vmatprep.subr.bf16.mxu0 0
        %2404 = vmatpush1.bf16.msra.mxu0 %v2195
        %2405 = vmatprep.subr.bf16.mxu0 0
        %2406 = vmatpush1.bf16.msra.mxu0 %v2196
        %2407 = vmatprep.subr.bf16.mxu0 0
        %2408 = vmatpush1.bf16.msra.mxu0 %v2197
        %2409 = vmatprep.subr.bf16.mxu0 0
        %2410 = vmatpush1.bf16.msra.mxu0 %v2198
        %2411 = vmatprep.subr.bf16.mxu0 0
        %2412 = vmatpush1.bf16.msra.mxu0 %v2199
        %2413 = vmatprep.subr.bf16.mxu0 0
        %2414 = vmatpush1.bf16.msra.mxu0 %v2200
        %2415 = vmatprep.subr.bf16.mxu0 0
        %2416 = vmatpush1.bf16.msra.mxu0 %v2201
        %2417 = vmatprep.subr.bf16.mxu0 0
        %2418 = vmatpush1.bf16.msra.mxu0 %v2202
        %2419 = vmatprep.mubr.bf16.mxu0 %v1747
        %2420 = vmatmul.mubr.bf16.gmra.mrb[0].mxu0 %v1746
        %v2421 = vpop.f32.mrb[0].mxu0
        %v2422 = vadd.f32 %v2382, %v2421
        %v2423 = vpop.f32.mrb[0].mxu0
        %v2424 = vpop.f32.mrb[0].mxu0
        %v2425 = vpop.f32.mrb[0].mxu0
        %2426 = vdwg.mxu0
        %v2427 = vmax.f32 %v2422, 0.0
        %v2428 = vpack.c.bf16 %v2427, %v2427
        %v2429 = vld [vmem:[%s9] sm:$0xf]
        %v2430 = vld [vmem:[%s9 + $0x4] sm:$0xf]
        %v2431 = vld [vmem:[%s9 + $0x8] sm:$0xf]
        %v2432 = vld [vmem:[%s9 + $0xc] sm:$0xf]
        %v2433 = vld [vmem:[%s9 + $0x10] sm:$0xf]
        %v2434 = vld [vmem:[%s9 + $0x14] sm:$0xf]
        %v2435 = vld [vmem:[%s9 + $0x18] sm:$0xf]
        %v2436 = vld [vmem:[%s9 + $0x1c] sm:$0xf]
        %v2437 = vld [vmem:[%s10] sm:$0x1]
        %v2439 = vlaneseq
        %v2440 = vshrl.u32 %v2439, 7
        %v2441 = vsub.s32 0, %v2440
        %v2442 = vrot.slane %v2437, %v2441
        %v2452 = vunpack.c.l.b16 %v2429
        %v2453 = vunpack.c.l.b16 %v2430
        %v2454 = vunpack.c.l.b16 %v2431
        %v2455 = vunpack.c.l.b16 %v2432
        %v2456 = vunpack.c.l.b16 %v2433
        %v2457 = vunpack.c.l.b16 %v2434
        %v2458 = vunpack.c.l.b16 %v2435
        %v2459 = vunpack.c.l.b16 %v2436
        %v2460 = vpack.c.b16 %v2453, %v2452
        %v2461 = vpack.c.b16 %v2455, %v2454
        %v2462 = vpack.c.b16 %v2457, %v2456
        %v2463 = vpack.c.b16 %v2459, %v2458
        %v2469 = vsel %vm1042, %v2428, 0
        %2471 = vmatprep.subr.bf16.mxu0 0
        %2472 = vmatpush1.bf16.msra.mxu0 %v2460
        %2473 = vmatprep.subr.bf16.mxu0 0
        %2474 = vmatpush1.bf16.msra.mxu0 %v2461
        %2475 = vmatprep.subr.bf16.mxu0 0
        %2476 = vmatpush1.bf16.msra.mxu0 %v2462
        %2477 = vmatprep.subr.bf16.mxu0 0
        %2478 = vmatpush1.bf16.msra.mxu0 %v2463
        %2479 = vmatprep.subr.bf16.mxu0 0
        %2480 = vmatpush1.bf16.msra.mxu0 0
        %2481 = vmatprep.subr.bf16.mxu0 0
        %2482 = vmatpush1.bf16.msra.mxu0 0
        %2483 = vmatprep.subr.bf16.mxu0 0
        %2484 = vmatpush1.bf16.msra.mxu0 0
        %2485 = vmatprep.subr.bf16.mxu0 0
        %2486 = vmatpush1.bf16.msra.mxu0 0
        %2487 = vmatprep.subr.bf16.mxu0 0
        %2488 = vmatpush1.bf16.msra.mxu0 0
        %2489 = vmatprep.subr.bf16.mxu0 0
        %2490 = vmatpush1.bf16.msra.mxu0 0
        %2491 = vmatprep.subr.bf16.mxu0 0
        %2492 = vmatpush1.bf16.msra.mxu0 0
        %2493 = vmatprep.subr.bf16.mxu0 0
        %2494 = vmatpush1.bf16.msra.mxu0 0
        %2495 = vmatprep.subr.bf16.mxu0 0
        %2496 = vmatpush1.bf16.msra.mxu0 0
        %2497 = vmatprep.subr.bf16.mxu0 0
        %2498 = vmatpush1.bf16.msra.mxu0 0
        %2499 = vmatprep.subr.bf16.mxu0 0
        %2500 = vmatpush1.bf16.msra.mxu0 0
        %2501 = vmatprep.subr.bf16.mxu0 0
        %2502 = vmatpush1.bf16.msra.mxu0 0
        %2503 = vmatprep.mubr.bf16.mxu0 0
        %2504 = vmatmul.mubr.bf16.gmra.mrb[0].mxu0 %v2469
        %v2505 = vpop.f32.mrb[0].mxu0
        %v2506 = vadd.f32 %v2442, %v2505
        %v2507 = vpop.f32.mrb[0].mxu0
        %v2508 = vpop.f32.mrb[0].mxu0
        %v2509 = vpop.f32.mrb[0].mxu0
        %2510 = vdwg.mxu0
        %v2511 = vmax.f32 %v2506, 0.0
        %v2512 = vpack.c.bf16 %v2511, %v2511
        %v2513 = vld [vmem:[%s11] sm:$0xf]
        %v2514 = vld [vmem:[%s11 + $0x4] sm:$0xf]
        %v2515 = vld [vmem:[%s11 + $0x8] sm:$0xf]
        %v2516 = vld [vmem:[%s11 + $0xc] sm:$0xf]
        %v2517 = vld [vmem:[%s12] sm:$0x1]
        %v2519 = vlaneseq
        %v2520 = vshrl.u32 %v2519, 7
        %v2521 = vsub.s32 0, %v2520
        %v2522 = vrot.slane %v2517, %v2521
        %v2528 = vunpack.c.l.b16 %v2513
        %v2529 = vunpack.c.l.b16 %v2514
        %v2530 = vunpack.c.l.b16 %v2515
        %v2531 = vunpack.c.l.b16 %v2516
        %v2532 = vpack.c.b16 %v2529, %v2528
        %v2533 = vpack.c.b16 %v2531, %v2530
        %v2537 = vsel %vm861, %v2512, 0
        %2539 = vmatprep.subr.bf16.mxu0 0
        %2540 = vmatpush1.bf16.msra.mxu0 %v2532
        %2541 = vmatprep.subr.bf16.mxu0 0
        %2542 = vmatpush1.bf16.msra.mxu0 %v2533
        %2543 = vmatprep.subr.bf16.mxu0 0
        %2544 = vmatpush1.bf16.msra.mxu0 0
        %2545 = vmatprep.subr.bf16.mxu0 0
        %2546 = vmatpush1.bf16.msra.mxu0 0
        %2547 = vmatprep.subr.bf16.mxu0 0
        %2548 = vmatpush1.bf16.msra.mxu0 0
        %2549 = vmatprep.subr.bf16.mxu0 0
        %2550 = vmatpush1.bf16.msra.mxu0 0
        %2551 = vmatprep.subr.bf16.mxu0 0
        %2552 = vmatpush1.bf16.msra.mxu0 0
        %2553 = vmatprep.subr.bf16.mxu0 0
        %2554 = vmatpush1.bf16.msra.mxu0 0
        %2555 = vmatprep.subr.bf16.mxu0 0
        %2556 = vmatpush1.bf16.msra.mxu0 0
        %2557 = vmatprep.subr.bf16.mxu0 0
        %2558 = vmatpush1.bf16.msra.mxu0 0
        %2559 = vmatprep.subr.bf16.mxu0 0
        %2560 = vmatpush1.bf16.msra.mxu0 0
        %2561 = vmatprep.subr.bf16.mxu0 0
        %2562 = vmatpush1.bf16.msra.mxu0 0
        %2563 = vmatprep.subr.bf16.mxu0 0
        %2564 = vmatpush1.bf16.msra.mxu0 0
        %2565 = vmatprep.subr.bf16.mxu0 0
        %2566 = vmatpush1.bf16.msra.mxu0 0
        %2567 = vmatprep.subr.bf16.mxu0 0
        %2568 = vmatpush1.bf16.msra.mxu0 0
        %2569 = vmatprep.subr.bf16.mxu0 0
        %2570 = vmatpush1.bf16.msra.mxu0 0
        %2571 = vmatprep.mubr.bf16.mxu0 0
        %2572 = vmatmul.mubr.bf16.gmra.mrb[0].mxu0 %v2537
        %v2573 = vpop.f32.mrb[0].mxu0
        %v2574 = vadd.f32 %v2522, %v2573
        %v2575 = vpop.f32.mrb[0].mxu0
        %v2576 = vpop.f32.mrb[0].mxu0
        %v2577 = vpop.f32.mrb[0].mxu0
        %2578 = vdwg.mxu0
        %2579 = vst.msk [vmem:[%s434] sm:$0xff] %vm573, %v2574
        %s2580 = sand.u32 %s313, 1
        %s2581 = scalar_lea.sflag [#allocation3], %s2580
        %s2582 = sand.u32 %s313, 1
        %s2583 = smul.addr %s2582, 8
        %s2584 = scalar_lea.vmem [#allocation2], %s2583
        // Predicated region
        $region73: #{tpu_custom_call.1} parent=71 // pred_check
          %p2585 = pneg %p323
        $region74: #{tpu_custom_call.1} parent=71 // pred_check_branch
          %2587 = sbr.rel (%p2585) target = $region76
        $region75: #{tpu_custom_call.1} parent=71 // pred_region
          %s2589 = ssub.s32 128, 128
          %2590 = vsyncadd %s2581, %s2589
          %s2591 = smul.addr %s27, 128
          %s2592 = scalar_lea.hbm %s13, %s2591
          %s2594 = sshll.u32 %s2584, 4
          %s2595 = int_to_ptr.vmem [resolvable:$true] %s2594
          %2597 = dma.vmem_to_hbm [thread:$0]  %s2595, 128, %s2592, %s2581
        $region76: #{tpu_custom_call.1} parent=71 // pred_fallthru
          _
      $region72: #{tpu_custom_call.1} parent=5 // pred_fallthru
        _
      %p2598 = scmp.le.s32.totalorder 2, %s22
      // Predicated region
      $region77: #{tpu_custom_call.1} parent=5 // pred_check
        %p2599 = pneg %p2598
      $region78: #{tpu_custom_call.1} parent=5 // pred_check_branch
        %2601 = sbr.rel (%p2599) target = $region80
      $region79: #{tpu_custom_call.1} parent=5 // pred_region
        %s2602 = ssub.s32 %s22, 2
        // Predicated region
        $region81: #{tpu_custom_call.1} parent=79 // pred_check
          %p2603 = pneg %p329
        $region82: #{tpu_custom_call.1} parent=79 // pred_check_branch
          %2605 = sbr.rel (%p2603) target = $region84
        $region83: #{tpu_custom_call.1} parent=79 // pred_region
          %s2606 = sand.u32 %s314, 1
          %s2607 = scalar_lea.sflag [#allocation3], %s2606
          %s2608 = sand.u32 %s314, 1
          %s2609 = smul.addr %s2608, 8
          %s2610 = scalar_lea.vmem [#allocation2], %s2609
          %2611 = dma.done %s2607, 128
        $region84: #{tpu_custom_call.1} parent=79 // pred_fallthru
          _
      $region80: #{tpu_custom_call.1} parent=5 // pred_fallthru
        _
    $region6: #{tpu_custom_call.1} parent=1 // loop_footer
      %s26 = sadd.s32 1, %s22
    $region7: #{tpu_custom_call.1} parent=1 // loop_footer_branch
      %21 = sbr.rel target = $region3
    $region8: #{tpu_custom_call.1} parent=1 // loop_exit
      _
    %2612 = vsyncpa [#allocation3], 1
    %s2613 = scalar_lea.sflag [#allocation3], 1
    %2614 = vsyncpa %s2613, 1

// kernel: tpu_custom_call.1
$region0: #{tpu_custom_call.1}
  #allocation0 [shape = 'u32[]', space=smem, size = 0x4, offset = 0x4, fixed_abs, tag = 'smem constant byte address 0x4 - core index']
  #allocation1 [shape = 'u32[144,128]{1,0:T(1,128)}', space=vmem, size = 0x12000, scoped, tag = 'internal scratch']
  %s0 = inlined_call_operand.vmem [shape: f32[16,8,8], index: 0, kind: input, shape index: {}]
  %s1 = inlined_call_operand.vmem [shape: bf16[24,256], index: 1, kind: input, shape index: {}]
  %s2 = inlined_call_operand.vmem [shape: f32[1,256], index: 2, kind: input, shape index: {}]
  %s3 = inlined_call_operand.vmem [shape: bf16[192,256], index: 3, kind: input, shape index: {}]
  %s4 = inlined_call_operand.vmem [shape: f32[1,256], index: 4, kind: input, shape index: {}]
  %s5 = inlined_call_operand.vmem [shape: bf16[256,256], index: 5, kind: input, shape index: {}]
  %s6 = inlined_call_operand.vmem [shape: f32[1,256], index: 6, kind: input, shape index: {}]
  %s7 = inlined_call_operand.vmem [shape: bf16[1024,64], index: 7, kind: input, shape index: {}]
  %s8 = inlined_call_operand.vmem [shape: f32[1,64], index: 8, kind: input, shape index: {}]
  %s9 = inlined_call_operand.vmem [shape: bf16[64,32], index: 9, kind: input, shape index: {}]
  %s10 = inlined_call_operand.vmem [shape: f32[1,32], index: 10, kind: input, shape index: {}]
  %s11 = inlined_call_operand.vmem [shape: bf16[32,16], index: 11, kind: input, shape index: {}]
  %s12 = inlined_call_operand.vmem [shape: f32[1,16], index: 12, kind: input, shape index: {}]
  %s13 = inlined_call_operand.hbm [shape: f32[16,16], index: 13, kind: output, shape index: {}]
  %s14 = sld [smem:[#allocation0]]
  $region85: #{tpu_custom_call.1} parent=0
    _
  %s16 = ssub.s32 1, %s14
  %s17 = scalar_select 0, %s16, %s14
  $region1: #{tpu_custom_call.1} parent=0
    #allocation2 [shape = 'u8[8192]{0}', space=vmem, size = 0x2000, scoped, tag = 'output window, operand 0']
    #allocation3 [shape = 's32[2]{0}', space=sflag, size = 0x8, scoped, tag = 'scoped memory for tpu_custom_call.1']
    %18 = vsyncpa [#allocation3], 0
    %s19 = scalar_lea.sflag [#allocation3], 1
    %20 = vsyncpa %s19, 0
    loop: start=0, step=1, limit=4
    $region2: #{tpu_custom_call.1} parent=1 // loop_pre_header
      _
    $region3: #{tpu_custom_call.1} parent=1 // loop_header
      %s22 = sphi 0, %s26
      %p23 = scmp.ge.s32.totalorder %s22, 4
      %s32 = sphi 0, %s34
      %s35 = sphi 0, %s32
      %s36 = sphi 0, %s35
      %s52 = sphi 0, %s36
      %s56 = sphi 0, %s56
      %s58 = sphi 0, %s56
      %s59 = sphi 0, %s58
      %s73 = sphi 0, %s59
      %s77 = sphi 0, %s77
      %s79 = sphi 0, %s77
      %s80 = sphi 0, %s79
      %s94 = sphi 0, %s80
      %s98 = sphi 0, %s98
      %s100 = sphi 0, %s98
      %s101 = sphi 0, %s100
      %s115 = sphi 0, %s101
      %s119 = sphi 0, %s119
      %s121 = sphi 0, %s119
      %s122 = sphi 0, %s121
      %s136 = sphi 0, %s122
      %s140 = sphi 0, %s140
      %s142 = sphi 0, %s140
      %s143 = sphi 0, %s142
      %s157 = sphi 0, %s143
      %s161 = sphi 0, %s161
      %s163 = sphi 0, %s161
      %s164 = sphi 0, %s163
      %s178 = sphi 0, %s164
      %s182 = sphi 0, %s182
      %s184 = sphi 0, %s182
      %s185 = sphi 0, %s184
      %s199 = sphi 0, %s185
      %s203 = sphi 0, %s203
      %s205 = sphi 0, %s203
      %s206 = sphi 0, %s205
      %s220 = sphi 0, %s206
      %s224 = sphi 0, %s224
      %s226 = sphi 0, %s224
      %s227 = sphi 0, %s226
      %s241 = sphi 0, %s227
      %s245 = sphi 0, %s245
      %s247 = sphi 0, %s245
      %s248 = sphi 0, %s247
      %s262 = sphi 0, %s248
      %s266 = sphi 0, %s266
      %s268 = sphi 0, %s266
      %s269 = sphi 0, %s268
      %s283 = sphi 0, %s269
      %s287 = sphi 0, %s287
      %s289 = sphi 0, %s287
      %s290 = sphi 0, %s289
      %s304 = sphi 0, %s290
      %s310 = sphi 0, %s312
      %s313 = sphi 0, %s310
      %s314 = sphi 0, %s313
      %s330 = sphi 0, %s314
    $region4: #{tpu_custom_call.1} parent=1 // loop_header_branch
      %25 = sbr.rel (%p23) target = $region8
    $region5: #{tpu_custom_call.1} parent=1 // loop_body
      %s27 = ssub.s32 %s22, 1
      %s28 = ssub.s32 %s22, 2
      %s29 = sadd.s32 %s22, 1
      %s30 = ssub.s32 %s22, %s29
      %p31 = scmp.eq.s32.totalorder %s30, 0
      %s33 = sadd.s32 %s32, 1
      %s34 = scalar_select %p31, %s32, %s33
      %p37 = pneg %p31
      %p38 = scmp.eq.s32.totalorder %s22, 1
      %p39 = por %p37, %p38
      %p40 = scmp.ne.s32.totalorder %s32, %s35
      %p41 = scmp.eq.s32.totalorder %s22, 0
      %p42 = por %p40, %p41
      %p43 = scmp.ne.s32.totalorder %s32, %s35
      %p44 = scmp.eq.s32.totalorder %s27, 1
      %p45 = por %p43, %p44
      %p46 = scmp.ne.s32.totalorder %s35, %s36
      %p47 = scmp.eq.s32.totalorder %s27, 0
      %p48 = por %p46, %p47
      %p49 = scmp.ne.s32.totalorder %s35, %s36
      %p50 = scmp.eq.s32.totalorder %s28, 1
      %p51 = por %p49, %p50
      %p53 = scmp.ne.s32.totalorder %s36, %s52
      %p54 = scmp.eq.s32.totalorder %s28, 0
      %p55 = por %p53, %p54
      %s57 = sadd.s32 %s56, 1
      %p60 = scmp.eq.s32.totalorder %s22, 1
      %p61 = scmp.ne.s32.totalorder %s56, %s58
      %p62 = scmp.eq.s32.totalorder %s22, 0
      %p63 = por %p61, %p62
      %p64 = scmp.ne.s32.totalorder %s56, %s58
      %p65 = scmp.eq.s32.totalorder %s27, 1
      %p66 = por %p64, %p65
      %p67 = scmp.ne.s32.totalorder %s58, %s59
      %p68 = scmp.eq.s32.totalorder %s27, 0
      %p69 = por %p67, %p68
      %p70 = scmp.ne.s32.totalorder %s58, %s59
      %p71 = scmp.eq.s32.totalorder %s28, 1
      %p72 = por %p70, %p71
      %p74 = scmp.ne.s32.totalorder %s59, %s73
      %p75 = scmp.eq.s32.totalorder %s28, 0
      %p76 = por %p74, %p75
      %s78 = sadd.s32 %s77, 1
      %p81 = scmp.eq.s32.totalorder %s22, 1
      %p82 = scmp.ne.s32.totalorder %s77, %s79
      %p83 = scmp.eq.s32.totalorder %s22, 0
      %p84 = por %p82, %p83
      %p85 = scmp.ne.s32.totalorder %s77, %s79
      %p86 = scmp.eq.s32.totalorder %s27, 1
      %p87 = por %p85, %p86
      %p88 = scmp.ne.s32.totalorder %s79, %s80
      %p89 = scmp.eq.s32.totalorder %s27, 0
      %p90 = por %p88, %p89
      %p91 = scmp.ne.s32.totalorder %s79, %s80
      %p92 = scmp.eq.s32.totalorder %s28, 1
      %p93 = por %p91, %p92
      %p95 = scmp.ne.s32.totalorder %s80, %s94
      %p96 = scmp.eq.s32.totalorder %s28, 0
      %p97 = por %p95, %p96
      %s99 = sadd.s32 %s98, 1
      %p102 = scmp.eq.s32.totalorder %s22, 1
      %p103 = scmp.ne.s32.totalorder %s98, %s100
      %p104 = scmp.eq.s32.totalorder %s22, 0
      %p105 = por %p103, %p104
      %p106 = scmp.ne.s32.totalorder %s98, %s100
      %p107 = scmp.eq.s32.totalorder %s27, 1
      %p108 = por %p106, %p107
      %p109 = scmp.ne.s32.totalorder %s100, %s101
      %p110 = scmp.eq.s32.totalorder %s27, 0
      %p111 = por %p109, %p110
      %p112 = scmp.ne.s32.totalorder %s100, %s101
      %p113 = scmp.eq.s32.totalorder %s28, 1
      %p114 = por %p112, %p113
      %p116 = scmp.ne.s32.totalorder %s101, %s115
      %p117 = scmp.eq.s32.totalorder %s28, 0
      %p118 = por %p116, %p117
      %s120 = sadd.s32 %s119, 1
      %p123 = scmp.eq.s32.totalorder %s22, 1
      %p124 = scmp.ne.s32.totalorder %s119, %s121
      %p125 = scmp.eq.s32.totalorder %s22, 0
      %p126 = por %p124, %p125
      %p127 = scmp.ne.s32.totalorder %s119, %s121
      %p128 = scmp.eq.s32.totalorder %s27, 1
      %p129 = por %p127, %p128
      %p130 = scmp.ne.s32.totalorder %s121, %s122
      %p131 = scmp.eq.s32.totalorder %s27, 0
      %p132 = por %p130, %p131
      %p133 = scmp.ne.s32.totalorder %s121, %s122
      %p134 = scmp.eq.s32.totalorder %s28, 1
      %p135 = por %p133, %p134
      %p137 = scmp.ne.s32.totalorder %s122, %s136
      %p138 = scmp.eq.s32.totalorder %s28, 0
      %p139 = por %p137, %p138
      %s141 = sadd.s32 %s140, 1
      %p144 = scmp.eq.s32.totalorder %s22, 1
      %p145 = scmp.ne.s32.totalorder %s140, %s142
      %p146 = scmp.eq.s32.totalorder %s22, 0
      %p147 = por %p145, %p146
      %p148 = scmp.ne.s32.totalorder %s140, %s142
      %p149 = scmp.eq.s32.totalorder %s27, 1
      %p150 = por %p148, %p149
      %p151 = scmp.ne.s32.totalorder %s142, %s143
      %p152 = scmp.eq.s32.totalorder %s27, 0
      %p153 = por %p151, %p152
      %p154 = scmp.ne.s32.totalorder %s142, %s143
      %p155 = scmp.eq.s32.totalorder %s28, 1
      %p156 = por %p154, %p155
      %p158 = scmp.ne.s32.totalorder %s143, %s157
      %p159 = scmp.eq.s32.totalorder %s28, 0
      %p160 = por %p158, %p159
      %s162 = sadd.s32 %s161, 1
      %p165 = scmp.eq.s32.totalorder %s22, 1
      %p166 = scmp.ne.s32.totalorder %s161, %s163
      %p167 = scmp.eq.s32.totalorder %s22, 0
      %p168 = por %p166, %p167
      %p169 = scmp.ne.s32.totalorder %s161, %s163
      %p170 = scmp.eq.s32.totalorder %s27, 1
      %p171 = por %p169, %p170
      %p172 = scmp.ne.s32.totalorder %s163, %s164
      %p173 = scmp.eq.s32.totalorder %s27, 0
      %p174 = por %p172, %p173
      %p175 = scmp.ne.s32.totalorder %s163, %s164
      %p176 = scmp.eq.s32.totalorder %s28, 1
      %p177 = por %p175, %p176
      %p179 = scmp.ne.s32.totalorder %s164, %s178
      %p180 = scmp.eq.s32.totalorder %s28, 0
      %p181 = por %p179, %p180
      %s183 = sadd.s32 %s182, 1
      %p186 = scmp.eq.s32.totalorder %s22, 1
      %p187 = scmp.ne.s32.totalorder %s182, %s184
      %p188 = scmp.eq.s32.totalorder %s22, 0
      %p189 = por %p187, %p188
      %p190 = scmp.ne.s32.totalorder %s182, %s184
      %p191 = scmp.eq.s32.totalorder %s27, 1
      %p192 = por %p190, %p191
      %p193 = scmp.ne.s32.totalorder %s184, %s185
      %p194 = scmp.eq.s32.totalorder %s27, 0
      %p195 = por %p193, %p194
      %p196 = scmp.ne.s32.totalorder %s184, %s185
      %p197 = scmp.eq.s32.totalorder %s28, 1
      %p198 = por %p196, %p197
      %p200 = scmp.ne.s32.totalorder %s185, %s199
      %p201 = scmp.eq.s32.totalorder %s28, 0
      %p202 = por %p200, %p201
      %s204 = sadd.s32 %s203, 1
      %p207 = scmp.eq.s32.totalorder %s22, 1
      %p208 = scmp.ne.s32.totalorder %s203, %s205
      %p209 = scmp.eq.s32.totalorder %s22, 0
      %p210 = por %p208, %p209
      %p211 = scmp.ne.s32.totalorder %s203, %s205
      %p212 = scmp.eq.s32.totalorder %s27, 1
      %p213 = por %p211, %p212
      %p214 = scmp.ne.s32.totalorder %s205, %s206
      %p215 = scmp.eq.s32.totalorder %s27, 0
      %p216 = por %p214, %p215
      %p217 = scmp.ne.s32.totalorder %s205, %s206
      %p218 = scmp.eq.s32.totalorder %s28, 1
      %p219 = por %p217, %p218
      %p221 = scmp.ne.s32.totalorder %s206, %s220
      %p222 = scmp.eq.s32.totalorder %s28, 0
      %p223 = por %p221, %p222
      %s225 = sadd.s32 %s224, 1
      %p228 = scmp.eq.s32.totalorder %s22, 1
      %p229 = scmp.ne.s32.totalorder %s224, %s226
      %p230 = scmp.eq.s32.totalorder %s22, 0
      %p231 = por %p229, %p230
      %p232 = scmp.ne.s32.totalorder %s224, %s226
      %p233 = scmp.eq.s32.totalorder %s27, 1
      %p234 = por %p232, %p233
      %p235 = scmp.ne.s32.totalorder %s226, %s227
      %p236 = scmp.eq.s32.totalorder %s27, 0
      %p237 = por %p235, %p236
      %p238 = scmp.ne.s32.totalorder %s226, %s227
      %p239 = scmp.eq.s32.totalorder %s28, 1
      %p240 = por %p238, %p239
      %p242 = scmp.ne.s32.totalorder %s227, %s241
      %p243 = scmp.eq.s32.totalorder %s28, 0
      %p244 = por %p242, %p243
      %s246 = sadd.s32 %s245, 1
      %p249 = scmp.eq.s32.totalorder %s22, 1
      %p250 = scmp.ne.s32.totalorder %s245, %s247
      %p251 = scmp.eq.s32.totalorder %s22, 0
      %p252 = por %p250, %p251
      %p253 = scmp.ne.s32.totalorder %s245, %s247
      %p254 = scmp.eq.s32.totalorder %s27, 1
      %p255 = por %p253, %p254
      %p256 = scmp.ne.s32.totalorder %s247, %s248
      %p257 = scmp.eq.s32.totalorder %s27, 0
      %p258 = por %p256, %p257
      %p259 = scmp.ne.s32.totalorder %s247, %s248
      %p260 = scmp.eq.s32.totalorder %s28, 1
      %p261 = por %p259, %p260
      %p263 = scmp.ne.s32.totalorder %s248, %s262
      %p264 = scmp.eq.s32.totalorder %s28, 0
      %p265 = por %p263, %p264
      %s267 = sadd.s32 %s266, 1
      %p270 = scmp.eq.s32.totalorder %s22, 1
      %p271 = scmp.ne.s32.totalorder %s266, %s268
      %p272 = scmp.eq.s32.totalorder %s22, 0
      %p273 = por %p271, %p272
      %p274 = scmp.ne.s32.totalorder %s266, %s268
      %p275 = scmp.eq.s32.totalorder %s27, 1
      %p276 = por %p274, %p275
      %p277 = scmp.ne.s32.totalorder %s268, %s269
      %p278 = scmp.eq.s32.totalorder %s27, 0
      %p279 = por %p277, %p278
      %p280 = scmp.ne.s32.totalorder %s268, %s269
      %p281 = scmp.eq.s32.totalorder %s28, 1
      %p282 = por %p280, %p281
      %p284 = scmp.ne.s32.totalorder %s269, %s283
      %p285 = scmp.eq.s32.totalorder %s28, 0
      %p286 = por %p284, %p285
      %s288 = sadd.s32 %s287, 1
      %p291 = scmp.eq.s32.totalorder %s22, 1
      %p292 = scmp.ne.s32.totalorder %s287, %s289
      %p293 = scmp.eq.s32.totalorder %s22, 0
      %p294 = por %p292, %p293
      %p295 = scmp.ne.s32.totalorder %s287, %s289
      %p296 = scmp.eq.s32.totalorder %s27, 1
      %p297 = por %p295, %p296
      %p298 = scmp.ne.s32.totalorder %s289, %s290
      %p299 = scmp.eq.s32.totalorder %s27, 0
      %p300 = por %p298, %p299
      %p301 = scmp.ne.s32.totalorder %s289, %s290
      %p302 = scmp.eq.s32.totalorder %s28, 1
      %p303 = por %p301, %p302
      %p305 = scmp.ne.s32.totalorder %s290, %s304
      %p306 = scmp.eq.s32.totalorder %s28, 0
      %p307 = por %p305, %p306
      %s308 = ssub.s32 %s22, %s29
      %p309 = scmp.eq.s32.totalorder %s308, 0
      %s311 = sadd.s32 %s310, 1
      %s312 = scalar_select %p309, %s310, %s311
      %p315 = pneg %p309
      %p316 = scmp.eq.s32.totalorder %s22, 1
      %p317 = por %p315, %p316
      %p318 = scmp.ne.s32.totalorder %s310, %s313
      %p319 = scmp.eq.s32.totalorder %s22, 0
      %p320 = por %p318, %p319
      %p321 = scmp.ne.s32.totalorder %s310, %s313
      %p322 = scmp.eq.s32.totalorder %s27, 1
      %p323 = por %p321, %p322
      %p324 = scmp.ne.s32.totalorder %s313, %s314
      %p325 = scmp.eq.s32.totalorder %s27, 0
      %p326 = por %p324, %p325
      %p327 = scmp.ne.s32.totalorder %s313, %s314
      %p328 = scmp.eq.s32.totalorder %s28, 1
      %p329 = por %p327, %p328
      %p331 = scmp.ne.s32.totalorder %s314, %s330
      %p332 = scmp.eq.s32.totalorder %s28, 0
      %p333 = por %p331, %p332
      %p334 = scmp.le.s32.totalorder 1, %s22
      %p335 = scmp.lt.s32.totalorder %s22, 3
      %p336 = pnand %p334, %p335
      %p337 = pneg %p336
      // Predicated region
      $region9: #{tpu_custom_call.1} parent=5 // pred_check
        _
      $region10: #{tpu_custom_call.1} parent=5 // pred_check_branch
        %339 = sbr.rel (%p336) target = $region12
      $region11: #{tpu_custom_call.1} parent=5 // pred_region
        %s340 = ssub.s32 %s22, 1
        // Predicated region
        $region13: #{tpu_custom_call.1} parent=11 // pred_check
          %p341 = pneg %p69
        $region14: #{tpu_custom_call.1} parent=11 // pred_check_branch
          %343 = sbr.rel (%p341) target = $region16
        $region15: #{tpu_custom_call.1} parent=11 // pred_region
          _
        $region16: #{tpu_custom_call.1} parent=11 // pred_fallthru
          _
        // Predicated region
        $region17: #{tpu_custom_call.1} parent=11 // pred_check
          %p344 = pneg %p90
        $region18: #{tpu_custom_call.1} parent=11 // pred_check_branch
          %346 = sbr.rel (%p344) target = $region20
        $region19: #{tpu_custom_call.1} parent=11 // pred_region
          _
        $region20: #{tpu_custom_call.1} parent=11 // pred_fallthru
          _
        // Predicated region
        $region21: #{tpu_custom_call.1} parent=11 // pred_check
          %p347 = pneg %p111
        $region22: #{tpu_custom_call.1} parent=11 // pred_check_branch
          %349 = sbr.rel (%p347) target = $region24
        $region23: #{tpu_custom_call.1} parent=11 // pred_region
          _
        $region24: #{tpu_custom_call.1} parent=11 // pred_fallthru
          _
        // Predicated region
        $region25: #{tpu_custom_call.1} parent=11 // pred_check
          %p350 = pneg %p132
        $region26: #{tpu_custom_call.1} parent=11 // pred_check_branch
          %352 = sbr.rel (%p350) target = $region28
        $region27: #{tpu_custom_call.1} parent=11 // pred_region
          _
        $region28: #{tpu_custom_call.1} parent=11 // pred_fallthru
          _
        // Predicated region
        $region29: #{tpu_custom_call.1} parent=11 // pred_check
          %p353 = pneg %p153
        $region30: #{tpu_custom_call.1} parent=11 // pred_check_branch
          %355 = sbr.rel (%p353) target = $region32
        $region31: #{tpu_custom_call.1} parent=11 // pred_region
          _
        $region32: #{tpu_custom_call.1} parent=11 // pred_fallthru
          _
        // Predicated region
        $region33: #{tpu_custom_call.1} parent=11 // pred_check
          %p356 = pneg %p174
        $region34: #{tpu_custom_call.1} parent=11 // pred_check_branch
          %358 = sbr.rel (%p356) target = $region36
        $region35: #{tpu_custom_call.1} parent=11 // pred_region
          _
        $region36: #{tpu_custom_call.1} parent=11 // pred_fallthru
          _
        // Predicated region
        $region37: #{tpu_custom_call.1} parent=11 // pred_check
          %p359 = pneg %p195
        $region38: #{tpu_custom_call.1} parent=11 // pred_check_branch
          %361 = sbr.rel (%p359) target = $region40
        $region39: #{tpu_custom_call.1} parent=11 // pred_region
          _
        $region40: #{tpu_custom_call.1} parent=11 // pred_fallthru
          _
        // Predicated region
        $region41: #{tpu_custom_call.1} parent=11 // pred_check
          %p362 = pneg %p216
        $region42: #{tpu_custom_call.1} parent=11 // pred_check_branch
          %364 = sbr.rel (%p362) target = $region44
        $region43: #{tpu_custom_call.1} parent=11 // pred_region
          _
        $region44: #{tpu_custom_call.1} parent=11 // pred_fallthru
          _
        // Predicated region
        $region45: #{tpu_custom_call.1} parent=11 // pred_check
          %p365 = pneg %p237
        $region46: #{tpu_custom_call.1} parent=11 // pred_check_branch
          %367 = sbr.rel (%p365) target = $region48
        $region47: #{tpu_custom_call.1} parent=11 // pred_region
          _
        $region48: #{tpu_custom_call.1} parent=11 // pred_fallthru
          _
        // Predicated region
        $region49: #{tpu_custom_call.1} parent=11 // pred_check
          %p368 = pneg %p258
        $region50: #{tpu_custom_call.1} parent=11 // pred_check_branch
          %370 = sbr.rel (%p368) target = $region52
        $region51: #{tpu_custom_call.1} parent=11 // pred_region
          _
        $region52: #{tpu_custom_call.1} parent=11 // pred_fallthru
          _
        // Predicated region
        $region53: #{tpu_custom_call.1} parent=11 // pred_check
          %p371 = pneg %p279
        $region54: #{tpu_custom_call.1} parent=11 // pred_check_branch
          %373 = sbr.rel (%p371) target = $region56
        $region55: #{tpu_custom_call.1} parent=11 // pred_region
          _
        $region56: #{tpu_custom_call.1} parent=11 // pred_fallthru
          _
        // Predicated region
        $region57: #{tpu_custom_call.1} parent=11 // pred_check
          %p374 = pneg %p300
        $region58: #{tpu_custom_call.1} parent=11 // pred_check_branch
          %376 = sbr.rel (%p374) target = $region60
        $region59: #{tpu_custom_call.1} parent=11 // pred_region
          _
        $region60: #{tpu_custom_call.1} parent=11 // pred_fallthru
          _
      $region12: #{tpu_custom_call.1} parent=5 // pred_fallthru
        _
      %p377 = scmp.lt.s32.totalorder %s22, 2
      // Predicated region
      $region61: #{tpu_custom_call.1} parent=5 // pred_check
        %p378 = pneg %p377
      $region62: #{tpu_custom_call.1} parent=5 // pred_check_branch
        %380 = sbr.rel (%p378) target = $region64
      $region63: #{tpu_custom_call.1} parent=5 // pred_region
        // Predicated region
        $region65: #{tpu_custom_call.1} parent=63 // pred_check
          %p381 = pneg %p42
        $region66: #{tpu_custom_call.1} parent=63 // pred_check_branch
          %383 = sbr.rel (%p381) target = $region68
        $region67: #{tpu_custom_call.1} parent=63 // pred_region
          %s384 = smul.u32 8, %s22
          %p385 = scmp.lt.s32.totalorder %s384, 15
          %s386 = scalar_select %p385, %s384, 15
          %s387 = smul.addr %s386, 8
          %s388 = scalar_lea.vmem %s0, %s387
          %s389 = smul.u32 8, %s22
        $region68: #{tpu_custom_call.1} parent=63 // pred_fallthru
          _
      $region64: #{tpu_custom_call.1} parent=5 // pred_fallthru
        _
      %p390 = scmp.le.s32.totalorder 1, %s22
      %p391 = scmp.lt.s32.totalorder %s22, 3
      %p392 = pnand %p390, %p391
      %p393 = pneg %p392
      // Predicated region
      $region69: #{tpu_custom_call.1} parent=5 // pred_check
        _
      $region70: #{tpu_custom_call.1} parent=5 // pred_check_branch
        %395 = sbr.rel (%p392) target = $region72
      $region71: #{tpu_custom_call.1} parent=5 // pred_region
        %s396 = ssub.s32 %s22, 1
        %s397 = smul.u32 8, %s27
        %p398 = scmp.lt.s32.totalorder %s397, 15
        %s399 = scalar_select %p398, %s397, 15
        %s400 = smul.addr %s399, 8
        %s401 = scalar_lea.vmem %s0, %s400
        %p402 = pneg %p48
        %p403 = pneg %p45
        %p404 = pneg %p69
        %p405 = pneg %p66
        %p406 = pneg %p90
        %p407 = pneg %p87
        %p408 = pneg %p111
        %p409 = pneg %p108
        %p410 = pneg %p132
        %p411 = pneg %p129
        %p412 = pneg %p153
        %p413 = pneg %p150
        %p414 = pneg %p174
        %p415 = pneg %p171
        %p416 = pneg %p195
        %p417 = pneg %p192
        %p418 = pneg %p216
        %p419 = pneg %p213
        %p420 = pneg %p237
        %p421 = pneg %p234
        %p422 = pneg %p258
        %p423 = pneg %p255
        %p424 = pneg %p279
        %p425 = pneg %p276
        %p426 = pneg %p300
        %p427 = pneg %p297
        %p428 = pneg %p326
        %p429 = pneg %p323
        %s430 = sand.u32 %s313, 1
        %s431 = scalar_lea.sflag [#allocation3], %s430
        %s432 = sand.u32 %s313, 1
        %s433 = smul.addr %s432, 8
        %s434 = scalar_lea.vmem [#allocation2], %s433
        %s435 = smul.u32 8, %s27
        %p436 = scmp.lt.s32.totalorder %s435, 15
        %s437 = scalar_select %p436, %s435, 15
        %s438 = smul.addr %s437, 8
        %s439 = scalar_lea.vmem %s0, %s438
        %s440 = smul.u32 8, %s27
        %v442 = vld [vmem:[%s439] sm:$0xff]
        %v443 = vld [vmem:[%s439 + $0x8] sm:$0xff]
        %v444 = vld [vmem:[%s439 + $0x10] sm:$0xff]
        %v445 = vld [vmem:[%s439 + $0x18] sm:$0xff]
        %v446 = vld [vmem:[%s439 + $0x20] sm:$0xff]
        %v447 = vld [vmem:[%s439 + $0x28] sm:$0xff]
        %v448 = vld [vmem:[%s439 + $0x30] sm:$0xff]
        %v449 = vld [vmem:[%s439 + $0x38] sm:$0xff]
        %v458 = vrot.slane %v442, 7
        %v459 = vrot.slane %v443, 7
        %v460 = vrot.slane %v444, 7
        %v461 = vrot.slane %v445, 7
        %v462 = vrot.slane %v446, 7
        %v463 = vrot.slane %v447, 7
        %v464 = vrot.slane %v448, 7
        %v465 = vrot.slane %v449, 7
        %vm474 = vcmask 1040384
        %v475 = vsel %vm474, 0.0, %v458
        %v476 = vsel %vm474, 0.0, %v459
        %v477 = vsel %vm474, 0.0, %v460
        %v478 = vsel %vm474, 0.0, %v461
        %v479 = vsel %vm474, 0.0, %v462
        %v480 = vsel %vm474, 0.0, %v463
        %v481 = vsel %vm474, 0.0, %v464
        %v482 = vsel %vm474, 0.0, %v465
        %v483 = vrot.slane %v442, 1
        %v484 = vrot.slane %v443, 1
        %v485 = vrot.slane %v444, 1
        %v486 = vrot.slane %v445, 1
        %v487 = vrot.slane %v446, 1
        %v488 = vrot.slane %v447, 1
        %v489 = vrot.slane %v448, 1
        %v490 = vrot.slane %v449, 1
        %vm499 = vcmask 1046528
        %v500 = vsel %vm499, %v483, 0.0
        %v501 = vsel %vm499, %v484, 0.0
        %v502 = vsel %vm499, %v485, 0.0
        %v503 = vsel %vm499, %v486, 0.0
        %v504 = vsel %vm499, %v487, 0.0
        %v505 = vsel %vm499, %v488, 0.0
        %v506 = vsel %vm499, %v489, 0.0
        %v507 = vsel %vm499, %v490, 0.0
        %508 = vrot.lane.b32.xlu0 %v442, 8
        %v509 = vpop.permute.xlu0 %508
        %510 = vrot.lane.b32.xlu0 %v443, 8
        %v511 = vpop.permute.xlu0 %510
        %512 = vrot.lane.b32.xlu0 %v444, 8
        %v513 = vpop.permute.xlu0 %512
        %514 = vrot.lane.b32.xlu0 %v445, 8
        %v515 = vpop.permute.xlu0 %514
        %516 = vrot.lane.b32.xlu0 %v446, 8
        %v517 = vpop.permute.xlu0 %516
        %518 = vrot.lane.b32.xlu0 %v447, 8
        %v519 = vpop.permute.xlu0 %518
        %520 = vrot.lane.b32.xlu0 %v448, 8
        %v521 = vpop.permute.xlu0 %520
        %522 = vrot.lane.b32.xlu0 %v449, 8
        %v523 = vpop.permute.xlu0 %522
        %540 = vrot.lane.b32.xlu0 %v500, 16
        %v541 = vpop.permute.xlu0 %540
        %542 = vrot.lane.b32.xlu0 %v501, 16
        %v543 = vpop.permute.xlu0 %542
        %544 = vrot.lane.b32.xlu0 %v502, 16
        %v545 = vpop.permute.xlu0 %544
        %546 = vrot.lane.b32.xlu0 %v503, 16
        %v547 = vpop.permute.xlu0 %546
        %548 = vrot.lane.b32.xlu0 %v504, 16
        %v549 = vpop.permute.xlu0 %548
        %550 = vrot.lane.b32.xlu0 %v505, 16
        %v551 = vpop.permute.xlu0 %550
        %552 = vrot.lane.b32.xlu0 %v506, 16
        %v553 = vpop.permute.xlu0 %552
        %554 = vrot.lane.b32.xlu0 %v507, 16
        %v555 = vpop.permute.xlu0 %554
        %vm564 = vcmask 64512
        %v565 = vsel %vm564, %v475, %v509
        %v566 = vsel %vm564, %v476, %v511
        %v567 = vsel %vm564, %v477, %v513
        %v568 = vsel %vm564, %v478, %v515
        %v569 = vsel %vm564, %v479, %v517
        %v570 = vsel %vm564, %v480, %v519
        %v571 = vsel %vm564, %v481, %v521
        %v572 = vsel %vm564, %v482, %v523
        %vm573 = vcmask 130048
        %v574 = vsel %vm573, %v565, %v541
        %v575 = vsel %vm573, %v566, %v543
        %v576 = vsel %vm573, %v567, %v545
        %v577 = vsel %vm573, %v568, %v547
        %v578 = vsel %vm573, %v569, %v549
        %v579 = vsel %vm573, %v570, %v551
        %v580 = vsel %vm573, %v571, %v553
        %v581 = vsel %vm573, %v572, %v555
        %v582 = vpack.c.bf16 %v575, %v574
        %v583 = vpack.c.bf16 %v577, %v576
        %v584 = vpack.c.bf16 %v579, %v578
        %v585 = vpack.c.bf16 %v581, %v580
        %v586 = vld [vmem:[%s1] sm:$0xff]
        %v587 = vld [vmem:[%s1 + $0x8] sm:$0xff]
        %v588 = vld [vmem:[%s1 + $0x10] sm:$0xff]
        %v589 = vld [vmem:[%s2] sm:$0x3]
        %v591 = vlaneseq
        %v592 = vshrl.u32 %v591, 7
        %v593 = vsub.s32 0, %v592
        %v594 = vrot.slane %v589, %v593
        %v595 = vlaneseq
        %v596 = vshrl.u32 %v595, 7
        %v597 = vsub.s32 1, %v596
        %v598 = vrot.slane %v589, %v597
        %v604 = vunpack.c.l.b16 %v586
        %v605 = vunpack.c.h.b16 %v586
        %v606 = vunpack.c.l.b16 %v587
        %v607 = vunpack.c.h.b16 %v587
        %v608 = vunpack.c.l.b16 %v588
        %v609 = vunpack.c.h.b16 %v588
        %v610 = vpack.c.b16 %v606, %v604
        %v611 = vpack.c.b16 %v607, %v605
        %v612 = vpack.c.b16 %v608, %v608
        %v613 = vpack.c.b16 %v609, %v609
        %vm616 = vcmask 195584
        %v618 = vsel %vm616, %v582, 0
        %v621 = vsel %vm616, %v583, 0
        %v624 = vsel %vm616, %v584, 0
        %v627 = vsel %vm616, %v585, 0
        %vm629 = vcmask 1043456
        %v631 = vsel %vm629, %v612, 0
        %v634 = vsel %vm629, %v613, 0
        %636 = vmatprep.subr.bf16.mxu0 %v611
        %637 = vmatpush1.bf16.msra.mxu0 %v610
        %638 = vmatprep.subr.bf16.mxu0 %v634
        %639 = vmatpush1.bf16.msra.mxu0 %v631
        %640 = vmatprep.subr.bf16.mxu0 0
        %641 = vmatpush1.bf16.msra.mxu0 0
        %642 = vmatprep.subr.bf16.mxu0 0
        %643 = vmatpush1.bf16.msra.mxu0 0
        %644 = vmatprep.subr.bf16.mxu0 0
        %645 = vmatpush1.bf16.msra.mxu0 0
        %646 = vmatprep.subr.bf16.mxu0 0
        %647 = vmatpush1.bf16.msra.mxu0 0
        %648 = vmatprep.subr.bf16.mxu0 0
        %649 = vmatpush1.bf16.msra.mxu0 0
        %650 = vmatprep.subr.bf16.mxu0 0
        %651 = vmatpush1.bf16.msra.mxu0 0
        %652 = vmatprep.subr.bf16.mxu0 0
        %653 = vmatpush1.bf16.msra.mxu0 0
        %654 = vmatprep.subr.bf16.mxu0 0
        %655 = vmatpush1.bf16.msra.mxu0 0
        %656 = vmatprep.subr.bf16.mxu0 0
        %657 = vmatpush1.bf16.msra.mxu0 0
        %658 = vmatprep.subr.bf16.mxu0 0
        %659 = vmatpush1.bf16.msra.mxu0 0
        %660 = vmatprep.subr.bf16.mxu0 0
        %661 = vmatpush1.bf16.msra.mxu0 0
        %662 = vmatprep.subr.bf16.mxu0 0
        %663 = vmatpush1.bf16.msra.mxu0 0
        %664 = vmatprep.subr.bf16.mxu0 0
        %665 = vmatpush1.bf16.msra.mxu0 0
        %666 = vmatprep.subr.bf16.mxu0 0
        %667 = vmatpush1.bf16.msra.mxu0 0
        %668 = vmatprep.mubr.bf16.mxu0 0
        %669 = vmatmul.mubr.bf16.gmra.mrb[0].mxu0 %v618
        %v670 = vpop.f32.mrb[0].mxu0
        %v671 = vadd.f32 %v594, %v670
        %v672 = vpop.f32.mrb[0].mxu0
        %v673 = vadd.f32 %v598, %v672
        %v674 = vpop.f32.mrb[0].mxu0
        %v675 = vadd.f32 %v594, %v674
        %v676 = vpop.f32.mrb[0].mxu0
        %v677 = vadd.f32 %v598, %v676
        %678 = vmatprep.mubr.bf16.mxu0 0
        %679 = vmatmul.mubr.bf16.gmra.mrb[0].mxu0 %v621
        %v680 = vpop.f32.mrb[0].mxu0
        %v681 = vadd.f32 %v594, %v680
        %v682 = vpop.f32.mrb[0].mxu0
        %v683 = vadd.f32 %v598, %v682
        %v684 = vpop.f32.mrb[0].mxu0
        %v685 = vadd.f32 %v594, %v684
        %v686 = vpop.f32.mrb[0].mxu0
        %v687 = vadd.f32 %v598, %v686
        %688 = vmatprep.mubr.bf16.mxu0 0
        %689 = vmatmul.mubr.bf16.gmra.mrb[0].mxu0 %v624
        %v690 = vpop.f32.mrb[0].mxu0
        %v691 = vadd.f32 %v594, %v690
        %v692 = vpop.f32.mrb[0].mxu0
        %v693 = vadd.f32 %v598, %v692
        %v694 = vpop.f32.mrb[0].mxu0
        %v695 = vadd.f32 %v594, %v694
        %v696 = vpop.f32.mrb[0].mxu0
        %v697 = vadd.f32 %v598, %v696
        %698 = vmatprep.mubr.bf16.mxu0 0
        %699 = vmatmul.mubr.bf16.gmra.mrb[0].mxu0 %v627
        %v700 = vpop.f32.mrb[0].mxu0
        %v701 = vadd.f32 %v594, %v700
        %v702 = vpop.f32.mrb[0].mxu0
        %v703 = vadd.f32 %v598, %v702
        %v704 = vpop.f32.mrb[0].mxu0
        %v705 = vadd.f32 %v594, %v704
        %v706 = vpop.f32.mrb[0].mxu0
        %v707 = vadd.f32 %v598, %v706
        %708 = vdwg.mxu0
        %v709 = vmax.f32 %v671, 0.0
        %v710 = vmax.f32 %v673, 0.0
        %v711 = vmax.f32 %v675, 0.0
        %v712 = vmax.f32 %v677, 0.0
        %v713 = vmax.f32 %v681, 0.0
        %v714 = vmax.f32 %v683, 0.0
        %v715 = vmax.f32 %v685, 0.0
        %v716 = vmax.f32 %v687, 0.0
        %v717 = vmax.f32 %v691, 0.0
        %v718 = vmax.f32 %v693, 0.0
        %v719 = vmax.f32 %v695, 0.0
        %v720 = vmax.f32 %v697, 0.0
        %v721 = vmax.f32 %v701, 0.0
        %v722 = vmax.f32 %v703, 0.0
        %v723 = vmax.f32 %v705, 0.0
        %v724 = vmax.f32 %v707, 0.0
        %v725 = vmax.f32 %v709, %v710
        %v726 = vmax.f32 %v711, %v712
        %v727 = vmax.f32 %v713, %v714
        %v728 = vmax.f32 %v715, %v716
        %v729 = vmax.f32 %v717, %v718
        %v730 = vmax.f32 %v719, %v720
        %v731 = vmax.f32 %v721, %v722
        %v732 = vmax.f32 %v723, %v724
        %v741 = vrot.slane %v725, 7
        %v742 = vrot.slane %v726, 7
        %v743 = vrot.slane %v727, 7
        %v744 = vrot.slane %v728, 7
        %v745 = vrot.slane %v729, 7
        %v746 = vrot.slane %v730, 7
        %v747 = vrot.slane %v731, 7
        %v748 = vrot.slane %v732, 7
        %749 = vrot.lane.b32.xlu0 %v741, 32
        %v750 = vpop.permute.xlu0 %749
        %751 = vrot.lane.b32.xlu0 %v742, 32
        %v752 = vpop.permute.xlu0 %751
        %753 = vrot.lane.b32.xlu0 %v743, 32
        %v754 = vpop.permute.xlu0 %753
        %755 = vrot.lane.b32.xlu0 %v744, 32
        %v756 = vpop.permute.xlu0 %755
        %757 = vrot.lane.b32.xlu0 %v745, 32
        %v758 = vpop.permute.xlu0 %757
        %759 = vrot.lane.b32.xlu0 %v746, 32
        %v760 = vpop.permute.xlu0 %759
        %761 = vrot.lane.b32.xlu0 %v747, 32
        %v762 = vpop.permute.xlu0 %761
        %763 = vrot.lane.b32.xlu0 %v748, 32
        %v764 = vpop.permute.xlu0 %763
        %v773 = vsel %vm474, 0.0, %v750
        %v774 = vsel %vm474, 0.0, %v752
        %v775 = vsel %vm474, 0.0, %v754
        %v776 = vsel %vm474, 0.0, %v756
        %v777 = vsel %vm474, 0.0, %v758
        %v778 = vsel %vm474, 0.0, %v760
        %v779 = vsel %vm474, 0.0, %v762
        %v780 = vsel %vm474, 0.0, %v764
        %v781 = vrot.slane %v725, 1
        %v782 = vrot.slane %v726, 1
        %v783 = vrot.slane %v727, 1
        %v784 = vrot.slane %v728, 1
        %v785 = vrot.slane %v729, 1
        %v786 = vrot.slane %v730, 1
        %v787 = vrot.slane %v731, 1
        %v788 = vrot.slane %v732, 1
        %v797 = vsel %vm499, %v781, 0.0
        %v798 = vsel %vm499, %v782, 0.0
        %v799 = vsel %vm499, %v783, 0.0
        %v800 = vsel %vm499, %v784, 0.0
        %v801 = vsel %vm499, %v785, 0.0
        %v802 = vsel %vm499, %v786, 0.0
        %v803 = vsel %vm499, %v787, 0.0
        %v804 = vsel %vm499, %v788, 0.0
        %805 = vrot.lane.b32.xlu0 %v725, 32
        %v806 = vpop.permute.xlu0 %805
        %807 = vrot.lane.b32.xlu0 %v726, 32
        %v808 = vpop.permute.xlu0 %807
        %809 = vrot.lane.b32.xlu0 %v727, 32
        %v810 = vpop.permute.xlu0 %809
        %811 = vrot.lane.b32.xlu0 %v728, 32
        %v812 = vpop.permute.xlu0 %811
        %813 = vrot.lane.b32.xlu0 %v729, 32
        %v814 = vpop.permute.xlu0 %813
        %815 = vrot.lane.b32.xlu0 %v730, 32
        %v816 = vpop.permute.xlu0 %815
        %817 = vrot.lane.b32.xlu0 %v731, 32
        %v818 = vpop.permute.xlu0 %817
        %819 = vrot.lane.b32.xlu0 %v732, 32
        %v820 = vpop.permute.xlu0 %819
        %837 = vrot.lane.b32.xlu0 %v797, 32
        %v838 = vpop.permute.xlu0 %837
        %839 = vrot.lane.b32.xlu0 %v798, 32
        %v840 = vpop.permute.xlu0 %839
        %841 = vrot.lane.b32.xlu0 %v799, 32
        %v842 = vpop.permute.xlu0 %841
        %843 = vrot.lane.b32.xlu0 %v800, 32
        %v844 = vpop.permute.xlu0 %843
        %845 = vrot.lane.b32.xlu0 %v801, 32
        %v846 = vpop.permute.xlu0 %845
        %847 = vrot.lane.b32.xlu0 %v802, 32
        %v848 = vpop.permute.xlu0 %847
        %849 = vrot.lane.b32.xlu0 %v803, 32
        %v850 = vpop.permute.xlu0 %849
        %851 = vrot.lane.b32.xlu0 %v804, 32
        %v852 = vpop.permute.xlu0 %851
        %vm861 = vcmask 261120
        %v862 = vsel %vm861, %v773, %v806
        %v863 = vsel %vm861, %v774, %v808
        %v864 = vsel %vm861, %v775, %v810
        %v865 = vsel %vm861, %v776, %v812
        %v866 = vsel %vm861, %v777, %v814
        %v867 = vsel %vm861, %v778, %v816
        %v868 = vsel %vm861, %v779, %v818
        %v869 = vsel %vm861, %v780, %v820
        %v870 = vsel %vm861, %v806, %v838
        %v871 = vsel %vm861, %v808, %v840
        %v872 = vsel %vm861, %v810, %v842
        %v873 = vsel %vm861, %v812, %v844
        %v874 = vsel %vm861, %v814, %v846
        %v875 = vsel %vm861, %v816, %v848
        %v876 = vsel %vm861, %v818, %v850
        %v877 = vsel %vm861, %v820, %v852
        %v878 = vpack.c.bf16 %v863, %v862
        %v879 = vpack.c.bf16 %v871, %v870
        %v880 = vpack.c.bf16 %v865, %v864
        %v881 = vpack.c.bf16 %v873, %v872
        %v882 = vpack.c.bf16 %v867, %v866
        %v883 = vpack.c.bf16 %v875, %v874
        %v884 = vpack.c.bf16 %v869, %v868
        %v885 = vpack.c.bf16 %v877, %v876
        %v886 = vld [vmem:[%s3] sm:$0xff]
        %v887 = vld [vmem:[%s3 + $0x8] sm:$0xff]
        %v888 = vld [vmem:[%s3 + $0x10] sm:$0xff]
        %v889 = vld [vmem:[%s3 + $0x18] sm:$0xff]
        %v890 = vld [vmem:[%s3 + $0x20] sm:$0xff]
        %v891 = vld [vmem:[%s3 + $0x28] sm:$0xff]
        %v892 = vld [vmem:[%s3 + $0x30] sm:$0xff]
        %v893 = vld [vmem:[%s3 + $0x38] sm:$0xff]
        %v894 = vld [vmem:[%s3 + $0x40] sm:$0xff]
        %v895 = vld [vmem:[%s3 + $0x48] sm:$0xff]
        %v896 = vld [vmem:[%s3 + $0x50] sm:$0xff]
        %v897 = vld [vmem:[%s3 + $0x58] sm:$0xff]
        %v898 = vld [vmem:[%s3 + $0x60] sm:$0xff]
        %v899 = vld [vmem:[%s3 + $0x68] sm:$0xff]
        %v900 = vld [vmem:[%s3 + $0x70] sm:$0xff]
        %v901 = vld [vmem:[%s3 + $0x78] sm:$0xff]
        %v902 = vld [vmem:[%s3 + $0x80] sm:$0xff]
        %v903 = vld [vmem:[%s3 + $0x88] sm:$0xff]
        %v904 = vld [vmem:[%s3 + $0x90] sm:$0xff]
        %v905 = vld [vmem:[%s3 + $0x98] sm:$0xff]
        %v906 = vld [vmem:[%s3 + $0xa0] sm:$0xff]
        %v907 = vld [vmem:[%s3 + $0xa8] sm:$0xff]
        %v908 = vld [vmem:[%s3 + $0xb0] sm:$0xff]
        %v909 = vld [vmem:[%s3 + $0xb8] sm:$0xff]
        %v910 = vld [vmem:[%s4] sm:$0x3]
        %v912 = vlaneseq
        %v913 = vshrl.u32 %v912, 7
        %v914 = vsub.s32 0, %v913
        %v915 = vrot.slane %v910, %v914
        %v916 = vlaneseq
        %v917 = vshrl.u32 %v916, 7
        %v918 = vsub.s32 1, %v917
        %v919 = vrot.slane %v910, %v918
        %v946 = vunpack.c.l.b16 %v886
        %v947 = vunpack.c.h.b16 %v886
        %v948 = vunpack.c.l.b16 %v887
        %v949 = vunpack.c.h.b16 %v887
        %v950 = vunpack.c.l.b16 %v888
        %v951 = vunpack.c.h.b16 %v888
        %v952 = vunpack.c.l.b16 %v889
        %v953 = vunpack.c.h.b16 %v889
        %v954 = vunpack.c.l.b16 %v890
        %v955 = vunpack.c.h.b16 %v890
        %v956 = vunpack.c.l.b16 %v891
        %v957 = vunpack.c.h.b16 %v891
        %v958 = vunpack.c.l.b16 %v892
        %v959 = vunpack.c.h.b16 %v892
        %v960 = vunpack.c.l.b16 %v893
        %v961 = vunpack.c.h.b16 %v893
        %v962 = vunpack.c.l.b16 %v894
        %v963 = vunpack.c.h.b16 %v894
        %v964 = vunpack.c.l.b16 %v895
        %v965 = vunpack.c.h.b16 %v895
        %v966 = vunpack.c.l.b16 %v896
        %v967 = vunpack.c.h.b16 %v896
        %v968 = vunpack.c.l.b16 %v897
        %v969 = vunpack.c.h.b16 %v897
        %v970 = vunpack.c.l.b16 %v898
        %v971 = vunpack.c.h.b16 %v898
        %v972 = vunpack.c.l.b16 %v899
        %v973 = vunpack.c.h.b16 %v899
        %v974 = vunpack.c.l.b16 %v900
        %v975 = vunpack.c.h.b16 %v900
        %v976 = vunpack.c.l.b16 %v901
        %v977 = vunpack.c.h.b16 %v901
        %v978 = vunpack.c.l.b16 %v902
        %v979 = vunpack.c.h.b16 %v902
        %v980 = vunpack.c.l.b16 %v903
        %v981 = vunpack.c.h.b16 %v903
        %v982 = vunpack.c.l.b16 %v904
        %v983 = vunpack.c.h.b16 %v904
        %v984 = vunpack.c.l.b16 %v905
        %v985 = vunpack.c.h.b16 %v905
        %v986 = vunpack.c.l.b16 %v906
        %v987 = vunpack.c.h.b16 %v906
        %v988 = vunpack.c.l.b16 %v907
        %v989 = vunpack.c.h.b16 %v907
        %v990 = vunpack.c.l.b16 %v908
        %v991 = vunpack.c.h.b16 %v908
        %v992 = vunpack.c.l.b16 %v909
        %v993 = vunpack.c.h.b16 %v909
        %v994 = vpack.c.b16 %v948, %v946
        %v995 = vpack.c.b16 %v949, %v947
        %v996 = vpack.c.b16 %v952, %v950
        %v997 = vpack.c.b16 %v953, %v951
        %v998 = vpack.c.b16 %v956, %v954
        %v999 = vpack.c.b16 %v957, %v955
        %v1000 = vpack.c.b16 %v960, %v958
        %v1001 = vpack.c.b16 %v961, %v959
        %v1002 = vpack.c.b16 %v964, %v962
        %v1003 = vpack.c.b16 %v965, %v963
        %v1004 = vpack.c.b16 %v968, %v966
        %v1005 = vpack.c.b16 %v969, %v967
        %v1006 = vpack.c.b16 %v972, %v970
        %v1007 = vpack.c.b16 %v973, %v971
        %v1008 = vpack.c.b16 %v976, %v974
        %v1009 = vpack.c.b16 %v977, %v975
        %v1010 = vpack.c.b16 %v980, %v978
        %v1011 = vpack.c.b16 %v981, %v979
        %v1012 = vpack.c.b16 %v984, %v982
        %v1013 = vpack.c.b16 %v985, %v983
        %v1014 = vpack.c.b16 %v988, %v986
        %v1015 = vpack.c.b16 %v989, %v987
        %v1016 = vpack.c.b16 %v992, %v990
        %v1017 = vpack.c.b16 %v993, %v991
        %vm1042 = vcmask 523264
        %v1044 = vsel %vm1042, %v879, 0
        %v1047 = vsel %vm1042, %v881, 0
        %v1050 = vsel %vm1042, %v883, 0
        %v1053 = vsel %vm1042, %v885, 0
        %1055 = vmatprep.subr.bf16.mxu0 %v995
        %1056 = vmatpush1.bf16.msra.mxu0 %v994
        %1057 = vmatprep.subr.bf16.mxu0 %v997
        %1058 = vmatpush1.bf16.msra.mxu0 %v996
        %1059 = vmatprep.subr.bf16.mxu0 %v999
        %1060 = vmatpush1.bf16.msra.mxu0 %v998
        %1061 = vmatprep.subr.bf16.mxu0 %v1001
        %1062 = vmatpush1.bf16.msra.mxu0 %v1000
        %1063 = vmatprep.subr.bf16.mxu0 %v1003
        %1064 = vmatpush1.bf16.msra.mxu0 %v1002
        %1065 = vmatprep.subr.bf16.mxu0 %v1005
        %1066 = vmatpush1.bf16.msra.mxu0 %v1004
        %1067 = vmatprep.subr.bf16.mxu0 %v1007
        %1068 = vmatpush1.bf16.msra.mxu0 %v1006
        %1069 = vmatprep.subr.bf16.mxu0 %v1009
        %1070 = vmatpush1.bf16.msra.mxu0 %v1008
        %1071 = vmatprep.subr.bf16.mxu0 %v1011
        %1072 = vmatpush1.bf16.msra.mxu0 %v1010
        %1073 = vmatprep.subr.bf16.mxu0 %v1013
        %1074 = vmatpush1.bf16.msra.mxu0 %v1012
        %1075 = vmatprep.subr.bf16.mxu0 %v1015
        %1076 = vmatpush1.bf16.msra.mxu0 %v1014
        %1077 = vmatprep.subr.bf16.mxu0 %v1017
        %1078 = vmatpush1.bf16.msra.mxu0 %v1016
        %1079 = vmatprep.subr.bf16.mxu0 0
        %1080 = vmatpush1.bf16.msra.mxu0 0
        %1081 = vmatprep.subr.bf16.mxu0 0
        %1082 = vmatpush1.bf16.msra.mxu0 0
        %1083 = vmatprep.subr.bf16.mxu0 0
        %1084 = vmatpush1.bf16.msra.mxu0 0
        %1085 = vmatprep.subr.bf16.mxu0 0
        %1086 = vmatpush1.bf16.msra.mxu0 0
        %1087 = vmatprep.mubr.bf16.mxu0 %v1044
        %1088 = vmatmul.mubr.bf16.gmra.mrb[0].mxu0 %v878
        %v1089 = vpop.f32.mrb[0].mxu0
        %v1090 = vadd.f32 %v915, %v1089
        %v1091 = vpop.f32.mrb[0].mxu0
        %v1092 = vadd.f32 %v919, %v1091
        %v1093 = vpop.f32.mrb[0].mxu0
        %v1094 = vadd.f32 %v915, %v1093
        %v1095 = vpop.f32.mrb[0].mxu0
        %v1096 = vadd.f32 %v919, %v1095
        %1097 = vmatprep.mubr.bf16.mxu0 %v1047
        %1098 = vmatmul.mubr.bf16.gmra.mrb[0].mxu0 %v880
        %v1099 = vpop.f32.mrb[0].mxu0
        %v1100 = vadd.f32 %v915, %v1099
        %v1101 = vpop.f32.mrb[0].mxu0
        %v1102 = vadd.f32 %v919, %v1101
        %v1103 = vpop.f32.mrb[0].mxu0
        %v1104 = vadd.f32 %v915, %v1103
        %v1105 = vpop.f32.mrb[0].mxu0
        %v1106 = vadd.f32 %v919, %v1105
        %1107 = vmatprep.mubr.bf16.mxu0 %v1050
        %1108 = vmatmul.mubr.bf16.gmra.mrb[0].mxu0 %v882
        %v1109 = vpop.f32.mrb[0].mxu0
        %v1110 = vadd.f32 %v915, %v1109
        %v1111 = vpop.f32.mrb[0].mxu0
        %v1112 = vadd.f32 %v919, %v1111
        %v1113 = vpop.f32.mrb[0].mxu0
        %v1114 = vadd.f32 %v915, %v1113
        %v1115 = vpop.f32.mrb[0].mxu0
        %v1116 = vadd.f32 %v919, %v1115
        %1117 = vmatprep.mubr.bf16.mxu0 %v1053
        %1118 = vmatmul.mubr.bf16.gmra.mrb[0].mxu0 %v884
        %v1119 = vpop.f32.mrb[0].mxu0
        %v1120 = vadd.f32 %v915, %v1119
        %v1121 = vpop.f32.mrb[0].mxu0
        %v1122 = vadd.f32 %v919, %v1121
        %v1123 = vpop.f32.mrb[0].mxu0
        %v1124 = vadd.f32 %v915, %v1123
        %v1125 = vpop.f32.mrb[0].mxu0
        %v1126 = vadd.f32 %v919, %v1125
        %1127 = vdwg.mxu0
        %v1128 = vmax.f32 %v1090, 0.0
        %v1129 = vmax.f32 %v1092, 0.0
        %v1130 = vmax.f32 %v1094, 0.0
        %v1131 = vmax.f32 %v1096, 0.0
        %v1132 = vmax.f32 %v1100, 0.0
        %v1133 = vmax.f32 %v1102, 0.0
        %v1134 = vmax.f32 %v1104, 0.0
        %v1135 = vmax.f32 %v1106, 0.0
        %v1136 = vmax.f32 %v1110, 0.0
        %v1137 = vmax.f32 %v1112, 0.0
        %v1138 = vmax.f32 %v1114, 0.0
        %v1139 = vmax.f32 %v1116, 0.0
        %v1140 = vmax.f32 %v1120, 0.0
        %v1141 = vmax.f32 %v1122, 0.0
        %v1142 = vmax.f32 %v1124, 0.0
        %v1143 = vmax.f32 %v1126, 0.0
        %v1144 = vmax.f32 %v1128, %v1129
        %v1145 = vmax.f32 %v1130, %v1131
        %v1146 = vmax.f32 %v1132, %v1133
        %v1147 = vmax.f32 %v1134, %v1135
        %v1148 = vmax.f32 %v1136, %v1137
        %v1149 = vmax.f32 %v1138, %v1139
        %v1150 = vmax.f32 %v1140, %v1141
        %v1151 = vmax.f32 %v1142, %v1143
        %v1160 = vrot.slane %v1144, 7
        %v1161 = vrot.slane %v1145, 7
        %v1162 = vrot.slane %v1146, 7
        %v1163 = vrot.slane %v1147, 7
        %v1164 = vrot.slane %v1148, 7
        %v1165 = vrot.slane %v1149, 7
        %v1166 = vrot.slane %v1150, 7
        %v1167 = vrot.slane %v1151, 7
        %1168 = vrot.lane.b32.xlu0 %v1160, 64
        %v1169 = vpop.permute.xlu0 %1168
        %1170 = vrot.lane.b32.xlu0 %v1161, 64
        %v1171 = vpop.permute.xlu0 %1170
        %1172 = vrot.lane.b32.xlu0 %v1162, 64
        %v1173 = vpop.permute.xlu0 %1172
        %1174 = vrot.lane.b32.xlu0 %v1163, 64
        %v1175 = vpop.permute.xlu0 %1174
        %1176 = vrot.lane.b32.xlu0 %v1164, 64
        %v1177 = vpop.permute.xlu0 %1176
        %1178 = vrot.lane.b32.xlu0 %v1165, 64
        %v1179 = vpop.permute.xlu0 %1178
        %1180 = vrot.lane.b32.xlu0 %v1166, 64
        %v1181 = vpop.permute.xlu0 %1180
        %1182 = vrot.lane.b32.xlu0 %v1167, 64
        %v1183 = vpop.permute.xlu0 %1182
        %v1192 = vsel %vm474, 0.0, %v1169
        %v1193 = vsel %vm474, 0.0, %v1171
        %v1194 = vsel %vm474, 0.0, %v1173
        %v1195 = vsel %vm474, 0.0, %v1175
        %v1196 = vsel %vm474, 0.0, %v1177
        %v1197 = vsel %vm474, 0.0, %v1179
        %v1198 = vsel %vm474, 0.0, %v1181
        %v1199 = vsel %vm474, 0.0, %v1183
        %v1200 = vrot.slane %v1144, 1
        %v1201 = vrot.slane %v1145, 1
        %v1202 = vrot.slane %v1146, 1
        %v1203 = vrot.slane %v1147, 1
        %v1204 = vrot.slane %v1148, 1
        %v1205 = vrot.slane %v1149, 1
        %v1206 = vrot.slane %v1150, 1
        %v1207 = vrot.slane %v1151, 1
        %v1216 = vsel %vm499, %v1200, 0.0
        %v1217 = vsel %vm499, %v1201, 0.0
        %v1218 = vsel %vm499, %v1202, 0.0
        %v1219 = vsel %vm499, %v1203, 0.0
        %v1220 = vsel %vm499, %v1204, 0.0
        %v1221 = vsel %vm499, %v1205, 0.0
        %v1222 = vsel %vm499, %v1206, 0.0
        %v1223 = vsel %vm499, %v1207, 0.0
        %1224 = vrot.lane.b32.xlu0 %v1144, 64
        %v1225 = vpop.permute.xlu0 %1224
        %1226 = vrot.lane.b32.xlu0 %v1145, 64
        %v1227 = vpop.permute.xlu0 %1226
        %1228 = vrot.lane.b32.xlu0 %v1146, 64
        %v1229 = vpop.permute.xlu0 %1228
        %1230 = vrot.lane.b32.xlu0 %v1147, 64
        %v1231 = vpop.permute.xlu0 %1230
        %1232 = vrot.lane.b32.xlu0 %v1148, 64
        %v1233 = vpop.permute.xlu0 %1232
        %1234 = vrot.lane.b32.xlu0 %v1149, 64
        %v1235 = vpop.permute.xlu0 %1234
        %1236 = vrot.lane.b32.xlu0 %v1150, 64
        %v1237 = vpop.permute.xlu0 %1236
        %1238 = vrot.lane.b32.xlu0 %v1151, 64
        %v1239 = vpop.permute.xlu0 %1238
        %1256 = vrot.lane.b32.xlu0 %v1216, 64
        %v1257 = vpop.permute.xlu0 %1256
        %1258 = vrot.lane.b32.xlu0 %v1217, 64
        %v1259 = vpop.permute.xlu0 %1258
        %1260 = vrot.lane.b32.xlu0 %v1218, 64
        %v1261 = vpop.permute.xlu0 %1260
        %1262 = vrot.lane.b32.xlu0 %v1219, 64
        %v1263 = vpop.permute.xlu0 %1262
        %1264 = vrot.lane.b32.xlu0 %v1220, 64
        %v1265 = vpop.permute.xlu0 %1264
        %1266 = vrot.lane.b32.xlu0 %v1221, 64
        %v1267 = vpop.permute.xlu0 %1266
        %1268 = vrot.lane.b32.xlu0 %v1222, 64
        %v1269 = vpop.permute.xlu0 %1268
        %1270 = vrot.lane.b32.xlu0 %v1223, 64
        %v1271 = vpop.permute.xlu0 %1270
        %v1280 = vsel %vm1042, %v1192, %v1225
        %v1281 = vsel %vm1042, %v1193, %v1227
        %v1282 = vsel %vm1042, %v1194, %v1229
        %v1283 = vsel %vm1042, %v1195, %v1231
        %v1284 = vsel %vm1042, %v1196, %v1233
        %v1285 = vsel %vm1042, %v1197, %v1235
        %v1286 = vsel %vm1042, %v1198, %v1237
        %v1287 = vsel %vm1042, %v1199, %v1239
        %v1288 = vsel %vm1042, %v1225, %v1257
        %v1289 = vsel %vm1042, %v1227, %v1259
        %v1290 = vsel %vm1042, %v1229, %v1261
        %v1291 = vsel %vm1042, %v1231, %v1263
        %v1292 = vsel %vm1042, %v1233, %v1265
        %v1293 = vsel %vm1042, %v1235, %v1267
        %v1294 = vsel %vm1042, %v1237, %v1269
        %v1295 = vsel %vm1042, %v1239, %v1271
        %v1296 = vpack.c.bf16 %v1281, %v1280
        %v1297 = vpack.c.bf16 %v1289, %v1288
        %v1298 = vpack.c.bf16 %v1283, %v1282
        %v1299 = vpack.c.bf16 %v1291, %v1290
        %v1300 = vpack.c.bf16 %v1285, %v1284
        %v1301 = vpack.c.bf16 %v1293, %v1292
        %v1302 = vpack.c.bf16 %v1287, %v1286
        %v1303 = vpack.c.bf16 %v1295, %v1294
        %v1304 = vld [vmem:[%s5] sm:$0xff]
        %v1305 = vld [vmem:[%s5 + $0x8] sm:$0xff]
        %v1306 = vld [vmem:[%s5 + $0x10] sm:$0xff]
        %v1307 = vld [vmem:[%s5 + $0x18] sm:$0xff]
        %v1308 = vld [vmem:[%s5 + $0x20] sm:$0xff]
        %v1309 = vld [vmem:[%s5 + $0x28] sm:$0xff]
        %v1310 = vld [vmem:[%s5 + $0x30] sm:$0xff]
        %v1311 = vld [vmem:[%s5 + $0x38] sm:$0xff]
        %v1312 = vld [vmem:[%s5 + $0x40] sm:$0xff]
        %v1313 = vld [vmem:[%s5 + $0x48] sm:$0xff]
        %v1314 = vld [vmem:[%s5 + $0x50] sm:$0xff]
        %v1315 = vld [vmem:[%s5 + $0x58] sm:$0xff]
        %v1316 = vld [vmem:[%s5 + $0x60] sm:$0xff]
        %v1317 = vld [vmem:[%s5 + $0x68] sm:$0xff]
        %v1318 = vld [vmem:[%s5 + $0x70] sm:$0xff]
        %v1319 = vld [vmem:[%s5 + $0x78] sm:$0xff]
        %v1320 = vld [vmem:[%s5 + $0x80] sm:$0xff]
        %v1321 = vld [vmem:[%s5 + $0x88] sm:$0xff]
        %v1322 = vld [vmem:[%s5 + $0x90] sm:$0xff]
        %v1323 = vld [vmem:[%s5 + $0x98] sm:$0xff]
        %v1324 = vld [vmem:[%s5 + $0xa0] sm:$0xff]
        %v1325 = vld [vmem:[%s5 + $0xa8] sm:$0xff]
        %v1326 = vld [vmem:[%s5 + $0xb0] sm:$0xff]
        %v1327 = vld [vmem:[%s5 + $0xb8] sm:$0xff]
        %v1328 = vld [vmem:[%s5 + $0xc0] sm:$0xff]
        %v1329 = vld [vmem:[%s5 + $0xc8] sm:$0xff]
        %v1330 = vld [vmem:[%s5 + $0xd0] sm:$0xff]
        %v1331 = vld [vmem:[%s5 + $0xd8] sm:$0xff]
        %v1332 = vld [vmem:[%s5 + $0xe0] sm:$0xff]
        %v1333 = vld [vmem:[%s5 + $0xe8] sm:$0xff]
        %v1334 = vld [vmem:[%s5 + $0xf0] sm:$0xff]
        %v1335 = vld [vmem:[%s5 + $0xf8] sm:$0xff]
        %v1336 = vld [vmem:[%s6] sm:$0x3]
        %v1338 = vlaneseq
        %v1339 = vshrl.u32 %v1338, 7
        %v1340 = vsub.s32 0, %v1339
        %v1341 = vrot.slane %v1336, %v1340
        %v1342 = vlaneseq
        %v1343 = vshrl.u32 %v1342, 7
        %v1344 = vsub.s32 1, %v1343
        %v1345 = vrot.slane %v1336, %v1344
        %v1380 = vunpack.c.l.b16 %v1304
        %v1381 = vunpack.c.h.b16 %v1304
        %v1382 = vunpack.c.l.b16 %v1305
        %v1383 = vunpack.c.h.b16 %v1305
        %v1384 = vunpack.c.l.b16 %v1306
        %v1385 = vunpack.c.h.b16 %v1306
        %v1386 = vunpack.c.l.b16 %v1307
        %v1387 = vunpack.c.h.b16 %v1307
        %v1388 = vunpack.c.l.b16 %v1308
        %v1389 = vunpack.c.h.b16 %v1308
        %v1390 = vunpack.c.l.b16 %v1309
        %v1391 = vunpack.c.h.b16 %v1309
        %v1392 = vunpack.c.l.b16 %v1310
        %v1393 = vunpack.c.h.b16 %v1310
        %v1394 = vunpack.c.l.b16 %v1311
        %v1395 = vunpack.c.h.b16 %v1311
        %v1396 = vunpack.c.l.b16 %v1312
        %v1397 = vunpack.c.h.b16 %v1312
        %v1398 = vunpack.c.l.b16 %v1313
        %v1399 = vunpack.c.h.b16 %v1313
        %v1400 = vunpack.c.l.b16 %v1314
        %v1401 = vunpack.c.h.b16 %v1314
        %v1402 = vunpack.c.l.b16 %v1315
        %v1403 = vunpack.c.h.b16 %v1315
        %v1404 = vunpack.c.l.b16 %v1316
        %v1405 = vunpack.c.h.b16 %v1316
        %v1406 = vunpack.c.l.b16 %v1317
        %v1407 = vunpack.c.h.b16 %v1317
        %v1408 = vunpack.c.l.b16 %v1318
        %v1409 = vunpack.c.h.b16 %v1318
        %v1410 = vunpack.c.l.b16 %v1319
        %v1411 = vunpack.c.h.b16 %v1319
        %v1412 = vunpack.c.l.b16 %v1320
        %v1413 = vunpack.c.h.b16 %v1320
        %v1414 = vunpack.c.l.b16 %v1321
        %v1415 = vunpack.c.h.b16 %v1321
        %v1416 = vunpack.c.l.b16 %v1322
        %v1417 = vunpack.c.h.b16 %v1322
        %v1418 = vunpack.c.l.b16 %v1323
        %v1419 = vunpack.c.h.b16 %v1323
        %v1420 = vunpack.c.l.b16 %v1324
        %v1421 = vunpack.c.h.b16 %v1324
        %v1422 = vunpack.c.l.b16 %v1325
        %v1423 = vunpack.c.h.b16 %v1325
        %v1424 = vunpack.c.l.b16 %v1326
        %v1425 = vunpack.c.h.b16 %v1326
        %v1426 = vunpack.c.l.b16 %v1327
        %v1427 = vunpack.c.h.b16 %v1327
        %v1428 = vunpack.c.l.b16 %v1328
        %v1429 = vunpack.c.h.b16 %v1328
        %v1430 = vunpack.c.l.b16 %v1329
        %v1431 = vunpack.c.h.b16 %v1329
        %v1432 = vunpack.c.l.b16 %v1330
        %v1433 = vunpack.c.h.b16 %v1330
        %v1434 = vunpack.c.l.b16 %v1331
        %v1435 = vunpack.c.h.b16 %v1331
        %v1436 = vunpack.c.l.b16 %v1332
        %v1437 = vunpack.c.h.b16 %v1332
        %v1438 = vunpack.c.l.b16 %v1333
        %v1439 = vunpack.c.h.b16 %v1333
        %v1440 = vunpack.c.l.b16 %v1334
        %v1441 = vunpack.c.h.b16 %v1334
        %v1442 = vunpack.c.l.b16 %v1335
        %v1443 = vunpack.c.h.b16 %v1335
        %v1444 = vpack.c.b16 %v1382, %v1380
        %v1445 = vpack.c.b16 %v1383, %v1381
        %v1446 = vpack.c.b16 %v1386, %v1384
        %v1447 = vpack.c.b16 %v1387, %v1385
        %v1448 = vpack.c.b16 %v1390, %v1388
        %v1449 = vpack.c.b16 %v1391, %v1389
        %v1450 = vpack.c.b16 %v1394, %v1392
        %v1451 = vpack.c.b16 %v1395, %v1393
        %v1452 = vpack.c.b16 %v1398, %v1396
        %v1453 = vpack.c.b16 %v1399, %v1397
        %v1454 = vpack.c.b16 %v1402, %v1400
        %v1455 = vpack.c.b16 %v1403, %v1401
        %v1456 = vpack.c.b16 %v1406, %v1404
        %v1457 = vpack.c.b16 %v1407, %v1405
        %v1458 = vpack.c.b16 %v1410, %v1408
        %v1459 = vpack.c.b16 %v1411, %v1409
        %v1460 = vpack.c.b16 %v1414, %v1412
        %v1461 = vpack.c.b16 %v1415, %v1413
        %v1462 = vpack.c.b16 %v1418, %v1416
        %v1463 = vpack.c.b16 %v1419, %v1417
        %v1464 = vpack.c.b16 %v1422, %v1420
        %v1465 = vpack.c.b16 %v1423, %v1421
        %v1466 = vpack.c.b16 %v1426, %v1424
        %v1467 = vpack.c.b16 %v1427, %v1425
        %v1468 = vpack.c.b16 %v1430, %v1428
        %v1469 = vpack.c.b16 %v1431, %v1429
        %v1470 = vpack.c.b16 %v1434, %v1432
        %v1471 = vpack.c.b16 %v1435, %v1433
        %v1472 = vpack.c.b16 %v1438, %v1436
        %v1473 = vpack.c.b16 %v1439, %v1437
        %v1474 = vpack.c.b16 %v1442, %v1440
        %v1475 = vpack.c.b16 %v1443, %v1441
        %1508 = vmatprep.subr.bf16.mxu0 %v1445
        %1509 = vmatpush1.bf16.msra.mxu0 %v1444
        %1510 = vmatprep.subr.bf16.mxu0 %v1447
        %1511 = vmatpush1.bf16.msra.mxu0 %v1446
        %1512 = vmatprep.subr.bf16.mxu0 %v1449
        %1513 = vmatpush1.bf16.msra.mxu0 %v1448
        %1514 = vmatprep.subr.bf16.mxu0 %v1451
        %1515 = vmatpush1.bf16.msra.mxu0 %v1450
        %1516 = vmatprep.subr.bf16.mxu0 %v1453
        %1517 = vmatpush1.bf16.msra.mxu0 %v1452
        %1518 = vmatprep.subr.bf16.mxu0 %v1455
        %1519 = vmatpush1.bf16.msra.mxu0 %v1454
        %1520 = vmatprep.subr.bf16.mxu0 %v1457
        %1521 = vmatpush1.bf16.msra.mxu0 %v1456
        %1522 = vmatprep.subr.bf16.mxu0 %v1459
        %1523 = vmatpush1.bf16.msra.mxu0 %v1458
        %1524 = vmatprep.subr.bf16.mxu0 %v1461
        %1525 = vmatpush1.bf16.msra.mxu0 %v1460
        %1526 = vmatprep.subr.bf16.mxu0 %v1463
        %1527 = vmatpush1.bf16.msra.mxu0 %v1462
        %1528 = vmatprep.subr.bf16.mxu0 %v1465
        %1529 = vmatpush1.bf16.msra.mxu0 %v1464
        %1530 = vmatprep.subr.bf16.mxu0 %v1467
        %1531 = vmatpush1.bf16.msra.mxu0 %v1466
        %1532 = vmatprep.subr.bf16.mxu0 %v1469
        %1533 = vmatpush1.bf16.msra.mxu0 %v1468
        %1534 = vmatprep.subr.bf16.mxu0 %v1471
        %1535 = vmatpush1.bf16.msra.mxu0 %v1470
        %1536 = vmatprep.subr.bf16.mxu0 %v1473
        %1537 = vmatpush1.bf16.msra.mxu0 %v1472
        %1538 = vmatprep.subr.bf16.mxu0 %v1475
        %1539 = vmatpush1.bf16.msra.mxu0 %v1474
        %1540 = vmatprep.mubr.bf16.mxu0 %v1297
        %1541 = vmatmul.mubr.bf16.gmra.mrb[0].mxu0 %v1296
        %v1542 = vpop.f32.mrb[0].mxu0
        %v1543 = vadd.f32 %v1341, %v1542
        %v1544 = vpop.f32.mrb[0].mxu0
        %v1545 = vadd.f32 %v1345, %v1544
        %v1546 = vpop.f32.mrb[0].mxu0
        %v1547 = vadd.f32 %v1341, %v1546
        %v1548 = vpop.f32.mrb[0].mxu0
        %v1549 = vadd.f32 %v1345, %v1548
        %1550 = vmatprep.mubr.bf16.mxu0 %v1299
        %1551 = vmatmul.mubr.bf16.gmra.mrb[0].mxu0 %v1298
        %v1552 = vpop.f32.mrb[0].mxu0
        %v1553 = vadd.f32 %v1341, %v1552
        %v1554 = vpop.f32.mrb[0].mxu0
        %v1555 = vadd.f32 %v1345, %v1554
        %v1556 = vpop.f32.mrb[0].mxu0
        %v1557 = vadd.f32 %v1341, %v1556
        %v1558 = vpop.f32.mrb[0].mxu0
        %v1559 = vadd.f32 %v1345, %v1558
        %1560 = vmatprep.mubr.bf16.mxu0 %v1301
        %1561 = vmatmul.mubr.bf16.gmra.mrb[0].mxu0 %v1300
        %v1562 = vpop.f32.mrb[0].mxu0
        %v1563 = vadd.f32 %v1341, %v1562
        %v1564 = vpop.f32.mrb[0].mxu0
        %v1565 = vadd.f32 %v1345, %v1564
        %v1566 = vpop.f32.mrb[0].mxu0
        %v1567 = vadd.f32 %v1341, %v1566
        %v1568 = vpop.f32.mrb[0].mxu0
        %v1569 = vadd.f32 %v1345, %v1568
        %1570 = vmatprep.mubr.bf16.mxu0 %v1303
        %1571 = vmatmul.mubr.bf16.gmra.mrb[0].mxu0 %v1302
        %v1572 = vpop.f32.mrb[0].mxu0
        %v1573 = vadd.f32 %v1341, %v1572
        %v1574 = vpop.f32.mrb[0].mxu0
        %v1575 = vadd.f32 %v1345, %v1574
        %v1576 = vpop.f32.mrb[0].mxu0
        %v1577 = vadd.f32 %v1341, %v1576
        %v1578 = vpop.f32.mrb[0].mxu0
        %v1579 = vadd.f32 %v1345, %v1578
        %1580 = vdwg.mxu0
        %v1581 = vmax.f32 %v1543, 0.0
        %v1582 = vmax.f32 %v1545, 0.0
        %v1583 = vmax.f32 %v1547, 0.0
        %v1584 = vmax.f32 %v1549, 0.0
        %v1585 = vmax.f32 %v1553, 0.0
        %v1586 = vmax.f32 %v1555, 0.0
        %v1587 = vmax.f32 %v1557, 0.0
        %v1588 = vmax.f32 %v1559, 0.0
        %v1589 = vmax.f32 %v1563, 0.0
        %v1590 = vmax.f32 %v1565, 0.0
        %v1591 = vmax.f32 %v1567, 0.0
        %v1592 = vmax.f32 %v1569, 0.0
        %v1593 = vmax.f32 %v1573, 0.0
        %v1594 = vmax.f32 %v1575, 0.0
        %v1595 = vmax.f32 %v1577, 0.0
        %v1596 = vmax.f32 %v1579, 0.0
        %v1597 = vmax.f32 %v1581, %v1582
        %v1598 = vmax.f32 %v1583, %v1584
        %v1599 = vmax.f32 %v1585, %v1586
        %v1600 = vmax.f32 %v1587, %v1588
        %v1601 = vmax.f32 %v1589, %v1590
        %v1602 = vmax.f32 %v1591, %v1592
        %v1603 = vmax.f32 %v1593, %v1594
        %v1604 = vmax.f32 %v1595, %v1596
        %v1613 = vrot.slane %v1598, 7
        %vm1614 = vcmask 1041409
        %v1615 = vsel %vm1614, %v1613, %v1597
        %v1616 = vrot.slane %v1599, 6
        %vm1617 = vcmask 1042434
        %v1618 = vsel %vm1617, %v1616, %v1615
        %v1619 = vrot.slane %v1600, 5
        %vm1620 = vcmask 1043459
        %v1621 = vsel %vm1620, %v1619, %v1618
        %v1622 = vrot.slane %v1601, 4
        %vm1623 = vcmask 1044484
        %v1624 = vsel %vm1623, %v1622, %v1621
        %v1625 = vrot.slane %v1602, 3
        %vm1626 = vcmask 1045509
        %v1627 = vsel %vm1626, %v1625, %v1624
        %v1628 = vrot.slane %v1603, 2
        %vm1629 = vcmask 1046534
        %v1630 = vsel %vm1629, %v1628, %v1627
        %v1631 = vrot.slane %v1604, 1
        %vm1632 = vcmask 1047559
        %v1633 = vsel %vm1632, %v1631, %v1630
        %v1635 = vrot.slane %v1597, 1
        %v1636 = vsel %vm1614, %v1598, %v1635
        %v1637 = vrot.slane %v1599, 7
        %v1638 = vsel %vm1617, %v1637, %v1636
        %v1639 = vrot.slane %v1600, 6
        %v1640 = vsel %vm1620, %v1639, %v1638
        %v1641 = vrot.slane %v1601, 5
        %v1642 = vsel %vm1623, %v1641, %v1640
        %v1643 = vrot.slane %v1602, 4
        %v1644 = vsel %vm1626, %v1643, %v1642
        %v1645 = vrot.slane %v1603, 3
        %v1646 = vsel %vm1629, %v1645, %v1644
        %v1647 = vrot.slane %v1604, 2
        %v1648 = vsel %vm1632, %v1647, %v1646
        %v1650 = vrot.slane %v1597, 2
        %v1651 = vrot.slane %v1598, 1
        %v1652 = vsel %vm1614, %v1651, %v1650
        %v1653 = vsel %vm1617, %v1599, %v1652
        %v1654 = vrot.slane %v1600, 7
        %v1655 = vsel %vm1620, %v1654, %v1653
        %v1656 = vrot.slane %v1601, 6
        %v1657 = vsel %vm1623, %v1656, %v1655
        %v1658 = vrot.slane %v1602, 5
        %v1659 = vsel %vm1626, %v1658, %v1657
        %v1660 = vrot.slane %v1603, 4
        %v1661 = vsel %vm1629, %v1660, %v1659
        %v1662 = vrot.slane %v1604, 3
        %v1663 = vsel %vm1632, %v1662, %v1661
        %v1665 = vrot.slane %v1597, 3
        %v1666 = vrot.slane %v1598, 2
        %v1667 = vsel %vm1614, %v1666, %v1665
        %v1668 = vrot.slane %v1599, 1
        %v1669 = vsel %vm1617, %v1668, %v1667
        %v1670 = vsel %vm1620, %v1600, %v1669
        %v1671 = vrot.slane %v1601, 7
        %v1672 = vsel %vm1623, %v1671, %v1670
        %v1673 = vrot.slane %v1602, 6
        %v1674 = vsel %vm1626, %v1673, %v1672
        %v1675 = vrot.slane %v1603, 5
        %v1676 = vsel %vm1629, %v1675, %v1674
        %v1677 = vrot.slane %v1604, 4
        %v1678 = vsel %vm1632, %v1677, %v1676
        %v1680 = vrot.slane %v1597, 4
        %v1681 = vrot.slane %v1598, 3
        %v1682 = vsel %vm1614, %v1681, %v1680
        %v1683 = vrot.slane %v1599, 2
        %v1684 = vsel %vm1617, %v1683, %v1682
        %v1685 = vrot.slane %v1600, 1
        %v1686 = vsel %vm1620, %v1685, %v1684
        %v1687 = vsel %vm1623, %v1601, %v1686
        %v1688 = vrot.slane %v1602, 7
        %v1689 = vsel %vm1626, %v1688, %v1687
        %v1690 = vrot.slane %v1603, 6
        %v1691 = vsel %vm1629, %v1690, %v1689
        %v1692 = vrot.slane %v1604, 5
        %v1693 = vsel %vm1632, %v1692, %v1691
        %v1695 = vrot.slane %v1597, 5
        %v1696 = vrot.slane %v1598, 4
        %v1697 = vsel %vm1614, %v1696, %v1695
        %v1698 = vrot.slane %v1599, 3
        %v1699 = vsel %vm1617, %v1698, %v1697
        %v1700 = vrot.slane %v1600, 2
        %v1701 = vsel %vm1620, %v1700, %v1699
        %v1702 = vrot.slane %v1601, 1
        %v1703 = vsel %vm1623, %v1702, %v1701
        %v1704 = vsel %vm1626, %v1602, %v1703
        %v1705 = vrot.slane %v1603, 7
        %v1706 = vsel %vm1629, %v1705, %v1704
        %v1707 = vrot.slane %v1604, 6
        %v1708 = vsel %vm1632, %v1707, %v1706
        %v1710 = vrot.slane %v1597, 6
        %v1711 = vrot.slane %v1598, 5
        %v1712 = vsel %vm1614, %v1711, %v1710
        %v1713 = vrot.slane %v1599, 4
        %v1714 = vsel %vm1617, %v1713, %v1712
        %v1715 = vrot.slane %v1600, 3
        %v1716 = vsel %vm1620, %v1715, %v1714
        %v1717 = vrot.slane %v1601, 2
        %v1718 = vsel %vm1623, %v1717, %v1716
        %v1719 = vrot.slane %v1602, 1
        %v1720 = vsel %vm1626, %v1719, %v1718
        %v1721 = vsel %vm1629, %v1603, %v1720
        %v1722 = vrot.slane %v1604, 7
        %v1723 = vsel %vm1632, %v1722, %v1721
        %v1725 = vrot.slane %v1597, 7
        %v1726 = vrot.slane %v1598, 6
        %v1727 = vsel %vm1614, %v1726, %v1725
        %v1728 = vrot.slane %v1599, 5
        %v1729 = vsel %vm1617, %v1728, %v1727
        %v1730 = vrot.slane %v1600, 4
        %v1731 = vsel %vm1620, %v1730, %v1729
        %v1732 = vrot.slane %v1601, 3
        %v1733 = vsel %vm1623, %v1732, %v1731
        %v1734 = vrot.slane %v1602, 2
        %v1735 = vsel %vm1626, %v1734, %v1733
        %v1736 = vrot.slane %v1603, 1
        %v1737 = vsel %vm1629, %v1736, %v1735
        %v1738 = vsel %vm1632, %v1604, %v1737
        %v1740 = vpack.c.bf16 %v1633, %v1633
        %v1741 = vpack.c.bf16 %v1648, %v1648
        %v1742 = vpack.c.bf16 %v1663, %v1663
        %v1743 = vpack.c.bf16 %v1678, %v1678
        %v1744 = vpack.c.bf16 %v1693, %v1693
        %v1745 = vpack.c.bf16 %v1708, %v1708
        %v1746 = vpack.c.bf16 %v1723, %v1723
        %v1747 = vpack.c.bf16 %v1738, %v1738
        %v1748 = vld [vmem:[%s7] sm:$0xf]
        %v1749 = vld [vmem:[%s7 + $0x4] sm:$0xf]
        %v1750 = vld [vmem:[%s7 + $0x8] sm:$0xf]
        %v1751 = vld [vmem:[%s7 + $0xc] sm:$0xf]
        %v1752 = vld [vmem:[%s7 + $0x10] sm:$0xf]
        %v1753 = vld [vmem:[%s7 + $0x14] sm:$0xf]
        %v1754 = vld [vmem:[%s7 + $0x18] sm:$0xf]
        %v1755 = vld [vmem:[%s7 + $0x1c] sm:$0xf]
        %v1756 = vld [vmem:[%s7 + $0x20] sm:$0xf]
        %v1757 = vld [vmem:[%s7 + $0x24] sm:$0xf]
        %v1758 = vld [vmem:[%s7 + $0x28] sm:$0xf]
        %v1759 = vld [vmem:[%s7 + $0x2c] sm:$0xf]
        %v1760 = vld [vmem:[%s7 + $0x30] sm:$0xf]
        %v1761 = vld [vmem:[%s7 + $0x34] sm:$0xf]
        %v1762 = vld [vmem:[%s7 + $0x38] sm:$0xf]
        %v1763 = vld [vmem:[%s7 + $0x3c] sm:$0xf]
        %v1764 = vld [vmem:[%s7 + $0x40] sm:$0xf]
        %v1765 = vld [vmem:[%s7 + $0x44] sm:$0xf]
        %v1766 = vld [vmem:[%s7 + $0x48] sm:$0xf]
        %v1767 = vld [vmem:[%s7 + $0x4c] sm:$0xf]
        %v1768 = vld [vmem:[%s7 + $0x50] sm:$0xf]
        %v1769 = vld [vmem:[%s7 + $0x54] sm:$0xf]
        %v1770 = vld [vmem:[%s7 + $0x58] sm:$0xf]
        %v1771 = vld [vmem:[%s7 + $0x5c] sm:$0xf]
        %v1772 = vld [vmem:[%s7 + $0x60] sm:$0xf]
        %v1773 = vld [vmem:[%s7 + $0x64] sm:$0xf]
        %v1774 = vld [vmem:[%s7 + $0x68] sm:$0xf]
        %v1775 = vld [vmem:[%s7 + $0x6c] sm:$0xf]
        %v1776 = vld [vmem:[%s7 + $0x70] sm:$0xf]
        %v1777 = vld [vmem:[%s7 + $0x74] sm:$0xf]
        %v1778 = vld [vmem:[%s7 + $0x78] sm:$0xf]
        %v1779 = vld [vmem:[%s7 + $0x7c] sm:$0xf]
        %v1780 = vld [vmem:[%s7 + $0x80] sm:$0xf]
        %v1781 = vld [vmem:[%s7 + $0x84] sm:$0xf]
        %v1782 = vld [vmem:[%s7 + $0x88] sm:$0xf]
        %v1783 = vld [vmem:[%s7 + $0x8c] sm:$0xf]
        %v1784 = vld [vmem:[%s7 + $0x90] sm:$0xf]
        %v1785 = vld [vmem:[%s7 + $0x94] sm:$0xf]
        %v1786 = vld [vmem:[%s7 + $0x98] sm:$0xf]
        %v1787 = vld [vmem:[%s7 + $0x9c] sm:$0xf]
        %v1788 = vld [vmem:[%s7 + $0xa0] sm:$0xf]
        %v1789 = vld [vmem:[%s7 + $0xa4] sm:$0xf]
        %v1790 = vld [vmem:[%s7 + $0xa8] sm:$0xf]
        %v1791 = vld [vmem:[%s7 + $0xac] sm:$0xf]
        %v1792 = vld [vmem:[%s7 + $0xb0] sm:$0xf]
        %v1793 = vld [vmem:[%s7 + $0xb4] sm:$0xf]
        %v1794 = vld [vmem:[%s7 + $0xb8] sm:$0xf]
        %v1795 = vld [vmem:[%s7 + $0xbc] sm:$0xf]
        %v1796 = vld [vmem:[%s7 + $0xc0] sm:$0xf]
        %v1797 = vld [vmem:[%s7 + $0xc4] sm:$0xf]
        %v1798 = vld [vmem:[%s7 + $0xc8] sm:$0xf]
        %v1799 = vld [vmem:[%s7 + $0xcc] sm:$0xf]
        %v1800 = vld [vmem:[%s7 + $0xd0] sm:$0xf]
        %v1801 = vld [vmem:[%s7 + $0xd4] sm:$0xf]
        %v1802 = vld [vmem:[%s7 + $0xd8] sm:$0xf]
        %v1803 = vld [vmem:[%s7 + $0xdc] sm:$0xf]
        %v1804 = vld [vmem:[%s7 + $0xe0] sm:$0xf]
        %v1805 = vld [vmem:[%s7 + $0xe4] sm:$0xf]
        %v1806 = vld [vmem:[%s7 + $0xe8] sm:$0xf]
        %v1807 = vld [vmem:[%s7 + $0xec] sm:$0xf]
        %v1808 = vld [vmem:[%s7 + $0xf0] sm:$0xf]
        %v1809 = vld [vmem:[%s7 + $0xf4] sm:$0xf]
        %v1810 = vld [vmem:[%s7 + $0xf8] sm:$0xf]
        %v1811 = vld [vmem:[%s7 + $0xfc] sm:$0xf]
        %v1812 = vld [vmem:[%s7 + $0x100] sm:$0xf]
        %v1813 = vld [vmem:[%s7 + $0x104] sm:$0xf]
        %v1814 = vld [vmem:[%s7 + $0x108] sm:$0xf]
        %v1815 = vld [vmem:[%s7 + $0x10c] sm:$0xf]
        %v1816 = vld [vmem:[%s7 + $0x110] sm:$0xf]
        %v1817 = vld [vmem:[%s7 + $0x114] sm:$0xf]
        %v1818 = vld [vmem:[%s7 + $0x118] sm:$0xf]
        %v1819 = vld [vmem:[%s7 + $0x11c] sm:$0xf]
        %v1820 = vld [vmem:[%s7 + $0x120] sm:$0xf]
        %v1821 = vld [vmem:[%s7 + $0x124] sm:$0xf]
        %v1822 = vld [vmem:[%s7 + $0x128] sm:$0xf]
        %v1823 = vld [vmem:[%s7 + $0x12c] sm:$0xf]
        %v1824 = vld [vmem:[%s7 + $0x130] sm:$0xf]
        %v1825 = vld [vmem:[%s7 + $0x134] sm:$0xf]
        %v1826 = vld [vmem:[%s7 + $0x138] sm:$0xf]
        %v1827 = vld [vmem:[%s7 + $0x13c] sm:$0xf]
        %v1828 = vld [vmem:[%s7 + $0x140] sm:$0xf]
        %v1829 = vld [vmem:[%s7 + $0x144] sm:$0xf]
        %v1830 = vld [vmem:[%s7 + $0x148] sm:$0xf]
        %v1831 = vld [vmem:[%s7 + $0x14c] sm:$0xf]
        %v1832 = vld [vmem:[%s7 + $0x150] sm:$0xf]
        %v1833 = vld [vmem:[%s7 + $0x154] sm:$0xf]
        %v1834 = vld [vmem:[%s7 + $0x158] sm:$0xf]
        %v1835 = vld [vmem:[%s7 + $0x15c] sm:$0xf]
        %v1836 = vld [vmem:[%s7 + $0x160] sm:$0xf]
        %v1837 = vld [vmem:[%s7 + $0x164] sm:$0xf]
        %v1838 = vld [vmem:[%s7 + $0x168] sm:$0xf]
        %v1839 = vld [vmem:[%s7 + $0x16c] sm:$0xf]
        %v1840 = vld [vmem:[%s7 + $0x170] sm:$0xf]
        %v1841 = vld [vmem:[%s7 + $0x174] sm:$0xf]
        %v1842 = vld [vmem:[%s7 + $0x178] sm:$0xf]
        %v1843 = vld [vmem:[%s7 + $0x17c] sm:$0xf]
        %v1844 = vld [vmem:[%s7 + $0x180] sm:$0xf]
        %v1845 = vld [vmem:[%s7 + $0x184] sm:$0xf]
        %v1846 = vld [vmem:[%s7 + $0x188] sm:$0xf]
        %v1847 = vld [vmem:[%s7 + $0x18c] sm:$0xf]
        %v1848 = vld [vmem:[%s7 + $0x190] sm:$0xf]
        %v1849 = vld [vmem:[%s7 + $0x194] sm:$0xf]
        %v1850 = vld [vmem:[%s7 + $0x198] sm:$0xf]
        %v1851 = vld [vmem:[%s7 + $0x19c] sm:$0xf]
        %v1852 = vld [vmem:[%s7 + $0x1a0] sm:$0xf]
        %v1853 = vld [vmem:[%s7 + $0x1a4] sm:$0xf]
        %v1854 = vld [vmem:[%s7 + $0x1a8] sm:$0xf]
        %v1855 = vld [vmem:[%s7 + $0x1ac] sm:$0xf]
        %v1856 = vld [vmem:[%s7 + $0x1b0] sm:$0xf]
        %v1857 = vld [vmem:[%s7 + $0x1b4] sm:$0xf]
        %v1858 = vld [vmem:[%s7 + $0x1b8] sm:$0xf]
        %v1859 = vld [vmem:[%s7 + $0x1bc] sm:$0xf]
        %v1860 = vld [vmem:[%s7 + $0x1c0] sm:$0xf]
        %v1861 = vld [vmem:[%s7 + $0x1c4] sm:$0xf]
        %v1862 = vld [vmem:[%s7 + $0x1c8] sm:$0xf]
        %v1863 = vld [vmem:[%s7 + $0x1cc] sm:$0xf]
        %v1864 = vld [vmem:[%s7 + $0x1d0] sm:$0xf]
        %v1865 = vld [vmem:[%s7 + $0x1d4] sm:$0xf]
        %v1866 = vld [vmem:[%s7 + $0x1d8] sm:$0xf]
        %v1867 = vld [vmem:[%s7 + $0x1dc] sm:$0xf]
        %v1868 = vld [vmem:[%s7 + $0x1e0] sm:$0xf]
        %v1869 = vld [vmem:[%s7 + $0x1e4] sm:$0xf]
        %v1870 = vld [vmem:[%s7 + $0x1e8] sm:$0xf]
        %v1871 = vld [vmem:[%s7 + $0x1ec] sm:$0xf]
        %v1872 = vld [vmem:[%s7 + $0x1f0] sm:$0xf]
        %v1873 = vld [vmem:[%s7 + $0x1f4] sm:$0xf]
        %v1874 = vld [vmem:[%s7 + $0x1f8] sm:$0xf]
        %v1875 = vld [vmem:[%s7 + $0x1fc] sm:$0xf]
        %v1876 = vld [vmem:[%s8] sm:$0x1]
        %v1878 = vlaneseq
        %v1879 = vshrl.u32 %v1878, 7
        %v1880 = vsub.s32 0, %v1879
        %v1881 = vrot.slane %v1876, %v1880
        %v2011 = vunpack.c.l.b16 %v1748
        %v2012 = vunpack.c.l.b16 %v1749
        %v2013 = vunpack.c.l.b16 %v1750
        %v2014 = vunpack.c.l.b16 %v1751
        %v2015 = vunpack.c.l.b16 %v1752
        %v2016 = vunpack.c.l.b16 %v1753
        %v2017 = vunpack.c.l.b16 %v1754
        %v2018 = vunpack.c.l.b16 %v1755
        %v2019 = vunpack.c.l.b16 %v1756
        %v2020 = vunpack.c.l.b16 %v1757
        %v2021 = vunpack.c.l.b16 %v1758
        %v2022 = vunpack.c.l.b16 %v1759
        %v2023 = vunpack.c.l.b16 %v1760
        %v2024 = vunpack.c.l.b16 %v1761
        %v2025 = vunpack.c.l.b16 %v1762
        %v2026 = vunpack.c.l.b16 %v1763
        %v2027 = vunpack.c.l.b16 %v1764
        %v2028 = vunpack.c.l.b16 %v1765
        %v2029 = vunpack.c.l.b16 %v1766
        %v2030 = vunpack.c.l.b16 %v1767
        %v2031 = vunpack.c.l.b16 %v1768
        %v2032 = vunpack.c.l.b16 %v1769
        %v2033 = vunpack.c.l.b16 %v1770
        %v2034 = vunpack.c.l.b16 %v1771
        %v2035 = vunpack.c.l.b16 %v1772
        %v2036 = vunpack.c.l.b16 %v1773
        %v2037 = vunpack.c.l.b16 %v1774
        %v2038 = vunpack.c.l.b16 %v1775
        %v2039 = vunpack.c.l.b16 %v1776
        %v2040 = vunpack.c.l.b16 %v1777
        %v2041 = vunpack.c.l.b16 %v1778
        %v2042 = vunpack.c.l.b16 %v1779
        %v2043 = vunpack.c.l.b16 %v1780
        %v2044 = vunpack.c.l.b16 %v1781
        %v2045 = vunpack.c.l.b16 %v1782
        %v2046 = vunpack.c.l.b16 %v1783
        %v2047 = vunpack.c.l.b16 %v1784
        %v2048 = vunpack.c.l.b16 %v1785
        %v2049 = vunpack.c.l.b16 %v1786
        %v2050 = vunpack.c.l.b16 %v1787
        %v2051 = vunpack.c.l.b16 %v1788
        %v2052 = vunpack.c.l.b16 %v1789
        %v2053 = vunpack.c.l.b16 %v1790
        %v2054 = vunpack.c.l.b16 %v1791
        %v2055 = vunpack.c.l.b16 %v1792
        %v2056 = vunpack.c.l.b16 %v1793
        %v2057 = vunpack.c.l.b16 %v1794
        %v2058 = vunpack.c.l.b16 %v1795
        %v2059 = vunpack.c.l.b16 %v1796
        %v2060 = vunpack.c.l.b16 %v1797
        %v2061 = vunpack.c.l.b16 %v1798
        %v2062 = vunpack.c.l.b16 %v1799
        %v2063 = vunpack.c.l.b16 %v1800
        %v2064 = vunpack.c.l.b16 %v1801
        %v2065 = vunpack.c.l.b16 %v1802
        %v2066 = vunpack.c.l.b16 %v1803
        %v2067 = vunpack.c.l.b16 %v1804
        %v2068 = vunpack.c.l.b16 %v1805
        %v2069 = vunpack.c.l.b16 %v1806
        %v2070 = vunpack.c.l.b16 %v1807
        %v2071 = vunpack.c.l.b16 %v1808
        %v2072 = vunpack.c.l.b16 %v1809
        %v2073 = vunpack.c.l.b16 %v1810
        %v2074 = vunpack.c.l.b16 %v1811
        %v2075 = vunpack.c.l.b16 %v1812
        %v2076 = vunpack.c.l.b16 %v1813
        %v2077 = vunpack.c.l.b16 %v1814
        %v2078 = vunpack.c.l.b16 %v1815
        %v2079 = vunpack.c.l.b16 %v1816
        %v2080 = vunpack.c.l.b16 %v1817
        %v2081 = vunpack.c.l.b16 %v1818
        %v2082 = vunpack.c.l.b16 %v1819
        %v2083 = vunpack.c.l.b16 %v1820
        %v2084 = vunpack.c.l.b16 %v1821
        %v2085 = vunpack.c.l.b16 %v1822
        %v2086 = vunpack.c.l.b16 %v1823
        %v2087 = vunpack.c.l.b16 %v1824
        %v2088 = vunpack.c.l.b16 %v1825
        %v2089 = vunpack.c.l.b16 %v1826
        %v2090 = vunpack.c.l.b16 %v1827
        %v2091 = vunpack.c.l.b16 %v1828
        %v2092 = vunpack.c.l.b16 %v1829
        %v2093 = vunpack.c.l.b16 %v1830
        %v2094 = vunpack.c.l.b16 %v1831
        %v2095 = vunpack.c.l.b16 %v1832
        %v2096 = vunpack.c.l.b16 %v1833
        %v2097 = vunpack.c.l.b16 %v1834
        %v2098 = vunpack.c.l.b16 %v1835
        %v2099 = vunpack.c.l.b16 %v1836
        %v2100 = vunpack.c.l.b16 %v1837
        %v2101 = vunpack.c.l.b16 %v1838
        %v2102 = vunpack.c.l.b16 %v1839
        %v2103 = vunpack.c.l.b16 %v1840
        %v2104 = vunpack.c.l.b16 %v1841
        %v2105 = vunpack.c.l.b16 %v1842
        %v2106 = vunpack.c.l.b16 %v1843
        %v2107 = vunpack.c.l.b16 %v1844
        %v2108 = vunpack.c.l.b16 %v1845
        %v2109 = vunpack.c.l.b16 %v1846
        %v2110 = vunpack.c.l.b16 %v1847
        %v2111 = vunpack.c.l.b16 %v1848
        %v2112 = vunpack.c.l.b16 %v1849
        %v2113 = vunpack.c.l.b16 %v1850
        %v2114 = vunpack.c.l.b16 %v1851
        %v2115 = vunpack.c.l.b16 %v1852
        %v2116 = vunpack.c.l.b16 %v1853
        %v2117 = vunpack.c.l.b16 %v1854
        %v2118 = vunpack.c.l.b16 %v1855
        %v2119 = vunpack.c.l.b16 %v1856
        %v2120 = vunpack.c.l.b16 %v1857
        %v2121 = vunpack.c.l.b16 %v1858
        %v2122 = vunpack.c.l.b16 %v1859
        %v2123 = vunpack.c.l.b16 %v1860
        %v2124 = vunpack.c.l.b16 %v1861
        %v2125 = vunpack.c.l.b16 %v1862
        %v2126 = vunpack.c.l.b16 %v1863
        %v2127 = vunpack.c.l.b16 %v1864
        %v2128 = vunpack.c.l.b16 %v1865
        %v2129 = vunpack.c.l.b16 %v1866
        %v2130 = vunpack.c.l.b16 %v1867
        %v2131 = vunpack.c.l.b16 %v1868
        %v2132 = vunpack.c.l.b16 %v1869
        %v2133 = vunpack.c.l.b16 %v1870
        %v2134 = vunpack.c.l.b16 %v1871
        %v2135 = vunpack.c.l.b16 %v1872
        %v2136 = vunpack.c.l.b16 %v1873
        %v2137 = vunpack.c.l.b16 %v1874
        %v2138 = vunpack.c.l.b16 %v1875
        %v2139 = vpack.c.b16 %v2012, %v2011
        %v2140 = vpack.c.b16 %v2014, %v2013
        %v2141 = vpack.c.b16 %v2016, %v2015
        %v2142 = vpack.c.b16 %v2018, %v2017
        %v2143 = vpack.c.b16 %v2020, %v2019
        %v2144 = vpack.c.b16 %v2022, %v2021
        %v2145 = vpack.c.b16 %v2024, %v2023
        %v2146 = vpack.c.b16 %v2026, %v2025
        %v2147 = vpack.c.b16 %v2028, %v2027
        %v2148 = vpack.c.b16 %v2030, %v2029
        %v2149 = vpack.c.b16 %v2032, %v2031
        %v2150 = vpack.c.b16 %v2034, %v2033
        %v2151 = vpack.c.b16 %v2036, %v2035
        %v2152 = vpack.c.b16 %v2038, %v2037
        %v2153 = vpack.c.b16 %v2040, %v2039
        %v2154 = vpack.c.b16 %v2042, %v2041
        %v2155 = vpack.c.b16 %v2044, %v2043
        %v2156 = vpack.c.b16 %v2046, %v2045
        %v2157 = vpack.c.b16 %v2048, %v2047
        %v2158 = vpack.c.b16 %v2050, %v2049
        %v2159 = vpack.c.b16 %v2052, %v2051
        %v2160 = vpack.c.b16 %v2054, %v2053
        %v2161 = vpack.c.b16 %v2056, %v2055
        %v2162 = vpack.c.b16 %v2058, %v2057
        %v2163 = vpack.c.b16 %v2060, %v2059
        %v2164 = vpack.c.b16 %v2062, %v2061
        %v2165 = vpack.c.b16 %v2064, %v2063
        %v2166 = vpack.c.b16 %v2066, %v2065
        %v2167 = vpack.c.b16 %v2068, %v2067
        %v2168 = vpack.c.b16 %v2070, %v2069
        %v2169 = vpack.c.b16 %v2072, %v2071
        %v2170 = vpack.c.b16 %v2074, %v2073
        %v2171 = vpack.c.b16 %v2076, %v2075
        %v2172 = vpack.c.b16 %v2078, %v2077
        %v2173 = vpack.c.b16 %v2080, %v2079
        %v2174 = vpack.c.b16 %v2082, %v2081
        %v2175 = vpack.c.b16 %v2084, %v2083
        %v2176 = vpack.c.b16 %v2086, %v2085
        %v2177 = vpack.c.b16 %v2088, %v2087
        %v2178 = vpack.c.b16 %v2090, %v2089
        %v2179 = vpack.c.b16 %v2092, %v2091
        %v2180 = vpack.c.b16 %v2094, %v2093
        %v2181 = vpack.c.b16 %v2096, %v2095
        %v2182 = vpack.c.b16 %v2098, %v2097
        %v2183 = vpack.c.b16 %v2100, %v2099
        %v2184 = vpack.c.b16 %v2102, %v2101
        %v2185 = vpack.c.b16 %v2104, %v2103
        %v2186 = vpack.c.b16 %v2106, %v2105
        %v2187 = vpack.c.b16 %v2108, %v2107
        %v2188 = vpack.c.b16 %v2110, %v2109
        %v2189 = vpack.c.b16 %v2112, %v2111
        %v2190 = vpack.c.b16 %v2114, %v2113
        %v2191 = vpack.c.b16 %v2116, %v2115
        %v2192 = vpack.c.b16 %v2118, %v2117
        %v2193 = vpack.c.b16 %v2120, %v2119
        %v2194 = vpack.c.b16 %v2122, %v2121
        %v2195 = vpack.c.b16 %v2124, %v2123
        %v2196 = vpack.c.b16 %v2126, %v2125
        %v2197 = vpack.c.b16 %v2128, %v2127
        %v2198 = vpack.c.b16 %v2130, %v2129
        %v2199 = vpack.c.b16 %v2132, %v2131
        %v2200 = vpack.c.b16 %v2134, %v2133
        %v2201 = vpack.c.b16 %v2136, %v2135
        %v2202 = vpack.c.b16 %v2138, %v2137
        %2267 = vmatprep.subr.bf16.mxu0 0
        %2268 = vmatpush1.bf16.msra.mxu0 %v2139
        %2269 = vmatprep.subr.bf16.mxu0 0
        %2270 = vmatpush1.bf16.msra.mxu0 %v2140
        %2271 = vmatprep.subr.bf16.mxu0 0
        %2272 = vmatpush1.bf16.msra.mxu0 %v2141
        %2273 = vmatprep.subr.bf16.mxu0 0
        %2274 = vmatpush1.bf16.msra.mxu0 %v2142
        %2275 = vmatprep.subr.bf16.mxu0 0
        %2276 = vmatpush1.bf16.msra.mxu0 %v2143
        %2277 = vmatprep.subr.bf16.mxu0 0
        %2278 = vmatpush1.bf16.msra.mxu0 %v2144
        %2279 = vmatprep.subr.bf16.mxu0 0
        %2280 = vmatpush1.bf16.msra.mxu0 %v2145
        %2281 = vmatprep.subr.bf16.mxu0 0
        %2282 = vmatpush1.bf16.msra.mxu0 %v2146
        %2283 = vmatprep.subr.bf16.mxu0 0
        %2284 = vmatpush1.bf16.msra.mxu0 %v2147
        %2285 = vmatprep.subr.bf16.mxu0 0
        %2286 = vmatpush1.bf16.msra.mxu0 %v2148
        %2287 = vmatprep.subr.bf16.mxu0 0
        %2288 = vmatpush1.bf16.msra.mxu0 %v2149
        %2289 = vmatprep.subr.bf16.mxu0 0
        %2290 = vmatpush1.bf16.msra.mxu0 %v2150
        %2291 = vmatprep.subr.bf16.mxu0 0
        %2292 = vmatpush1.bf16.msra.mxu0 %v2151
        %2293 = vmatprep.subr.bf16.mxu0 0
        %2294 = vmatpush1.bf16.msra.mxu0 %v2152
        %2295 = vmatprep.subr.bf16.mxu0 0
        %2296 = vmatpush1.bf16.msra.mxu0 %v2153
        %2297 = vmatprep.subr.bf16.mxu0 0
        %2298 = vmatpush1.bf16.msra.mxu0 %v2154
        %2299 = vmatprep.mubr.bf16.mxu0 %v1741
        %2300 = vmatmul.mubr.bf16.gmra.mrb[0].mxu0 %v1740
        %v2301 = vpop.f32.mrb[0].mxu0
        %v2302 = vadd.f32 %v1881, %v2301
        %v2303 = vpop.f32.mrb[0].mxu0
        %v2304 = vpop.f32.mrb[0].mxu0
        %v2305 = vpop.f32.mrb[0].mxu0
        %2306 = vdwg.mxu0
        %2307 = vmatprep.subr.bf16.mxu0 0
        %2308 = vmatpush1.bf16.msra.mxu0 %v2155
        %2309 = vmatprep.subr.bf16.mxu0 0
        %2310 = vmatpush1.bf16.msra.mxu0 %v2156
        %2311 = vmatprep.subr.bf16.mxu0 0
        %2312 = vmatpush1.bf16.msra.mxu0 %v2157
        %2313 = vmatprep.subr.bf16.mxu0 0
        %2314 = vmatpush1.bf16.msra.mxu0 %v2158
        %2315 = vmatprep.subr.bf16.mxu0 0
        %2316 = vmatpush1.bf16.msra.mxu0 %v2159
        %2317 = vmatprep.subr.bf16.mxu0 0
        %2318 = vmatpush1.bf16.msra.mxu0 %v2160
        %2319 = vmatprep.subr.bf16.mxu0 0
        %2320 = vmatpush1.bf16.msra.mxu0 %v2161
        %2321 = vmatprep.subr.bf16.mxu0 0
        %2322 = vmatpush1.bf16.msra.mxu0 %v2162
        %2323 = vmatprep.subr.bf16.mxu0 0
        %2324 = vmatpush1.bf16.msra.mxu0 %v2163
        %2325 = vmatprep.subr.bf16.mxu0 0
        %2326 = vmatpush1.bf16.msra.mxu0 %v2164
        %2327 = vmatprep.subr.bf16.mxu0 0
        %2328 = vmatpush1.bf16.msra.mxu0 %v2165
        %2329 = vmatprep.subr.bf16.mxu0 0
        %2330 = vmatpush1.bf16.msra.mxu0 %v2166
        %2331 = vmatprep.subr.bf16.mxu0 0
        %2332 = vmatpush1.bf16.msra.mxu0 %v2167
        %2333 = vmatprep.subr.bf16.mxu0 0
        %2334 = vmatpush1.bf16.msra.mxu0 %v2168
        %2335 = vmatprep.subr.bf16.mxu0 0
        %2336 = vmatpush1.bf16.msra.mxu0 %v2169
        %2337 = vmatprep.subr.bf16.mxu0 0
        %2338 = vmatpush1.bf16.msra.mxu0 %v2170
        %2339 = vmatprep.mubr.bf16.mxu0 %v1743
        %2340 = vmatmul.mubr.bf16.gmra.mrb[0].mxu0 %v1742
        %v2341 = vpop.f32.mrb[0].mxu0
        %v2342 = vadd.f32 %v2302, %v2341
        %v2343 = vpop.f32.mrb[0].mxu0
        %v2344 = vpop.f32.mrb[0].mxu0
        %v2345 = vpop.f32.mrb[0].mxu0
        %2346 = vdwg.mxu0
        %2347 = vmatprep.subr.bf16.mxu0 0
        %2348 = vmatpush1.bf16.msra.mxu0 %v2171
        %2349 = vmatprep.subr.bf16.mxu0 0
        %2350 = vmatpush1.bf16.msra.mxu0 %v2172
        %2351 = vmatprep.subr.bf16.mxu0 0
        %2352 = vmatpush1.bf16.msra.mxu0 %v2173
        %2353 = vmatprep.subr.bf16.mxu0 0
        %2354 = vmatpush1.bf16.msra.mxu0 %v2174
        %2355 = vmatprep.subr.bf16.mxu0 0
        %2356 = vmatpush1.bf16.msra.mxu0 %v2175
        %2357 = vmatprep.subr.bf16.mxu0 0
        %2358 = vmatpush1.bf16.msra.mxu0 %v2176
        %2359 = vmatprep.subr.bf16.mxu0 0
        %2360 = vmatpush1.bf16.msra.mxu0 %v2177
        %2361 = vmatprep.subr.bf16.mxu0 0
        %2362 = vmatpush1.bf16.msra.mxu0 %v2178
        %2363 = vmatprep.subr.bf16.mxu0 0
        %2364 = vmatpush1.bf16.msra.mxu0 %v2179
        %2365 = vmatprep.subr.bf16.mxu0 0
        %2366 = vmatpush1.bf16.msra.mxu0 %v2180
        %2367 = vmatprep.subr.bf16.mxu0 0
        %2368 = vmatpush1.bf16.msra.mxu0 %v2181
        %2369 = vmatprep.subr.bf16.mxu0 0
        %2370 = vmatpush1.bf16.msra.mxu0 %v2182
        %2371 = vmatprep.subr.bf16.mxu0 0
        %2372 = vmatpush1.bf16.msra.mxu0 %v2183
        %2373 = vmatprep.subr.bf16.mxu0 0
        %2374 = vmatpush1.bf16.msra.mxu0 %v2184
        %2375 = vmatprep.subr.bf16.mxu0 0
        %2376 = vmatpush1.bf16.msra.mxu0 %v2185
        %2377 = vmatprep.subr.bf16.mxu0 0
        %2378 = vmatpush1.bf16.msra.mxu0 %v2186
        %2379 = vmatprep.mubr.bf16.mxu0 %v1745
        %2380 = vmatmul.mubr.bf16.gmra.mrb[0].mxu0 %v1744
        %v2381 = vpop.f32.mrb[0].mxu0
        %v2382 = vadd.f32 %v2342, %v2381
        %v2383 = vpop.f32.mrb[0].mxu0
        %v2384 = vpop.f32.mrb[0].mxu0
        %v2385 = vpop.f32.mrb[0].mxu0
        %2386 = vdwg.mxu0
        %2387 = vmatprep.subr.bf16.mxu0 0
        %2388 = vmatpush1.bf16.msra.mxu0 %v2187
        %2389 = vmatprep.subr.bf16.mxu0 0
        %2390 = vmatpush1.bf16.msra.mxu0 %v2188
        %2391 = vmatprep.subr.bf16.mxu0 0
        %2392 = vmatpush1.bf16.msra.mxu0 %v2189
        %2393 = vmatprep.subr.bf16.mxu0 0
        %2394 = vmatpush1.bf16.msra.mxu0 %v2190
        %2395 = vmatprep.subr.bf16.mxu0 0
        %2396 = vmatpush1.bf16.msra.mxu0 %v2191
        %2397 = vmatprep.subr.bf16.mxu0 0
        %2398 = vmatpush1.bf16.msra.mxu0 %v2192
        %2399 = vmatprep.subr.bf16.mxu0 0
        %2400 = vmatpush1.bf16.msra.mxu0 %v2193
        %2401 = vmatprep.subr.bf16.mxu0 0
        %2402 = vmatpush1.bf16.msra.mxu0 %v2194
        %2403 = vmatprep.subr.bf16.mxu0 0
        %2404 = vmatpush1.bf16.msra.mxu0 %v2195
        %2405 = vmatprep.subr.bf16.mxu0 0
        %2406 = vmatpush1.bf16.msra.mxu0 %v2196
        %2407 = vmatprep.subr.bf16.mxu0 0
        %2408 = vmatpush1.bf16.msra.mxu0 %v2197
        %2409 = vmatprep.subr.bf16.mxu0 0
        %2410 = vmatpush1.bf16.msra.mxu0 %v2198
        %2411 = vmatprep.subr.bf16.mxu0 0
        %2412 = vmatpush1.bf16.msra.mxu0 %v2199
        %2413 = vmatprep.subr.bf16.mxu0 0
        %2414 = vmatpush1.bf16.msra.mxu0 %v2200
        %2415 = vmatprep.subr.bf16.mxu0 0
        %2416 = vmatpush1.bf16.msra.mxu0 %v2201
        %2417 = vmatprep.subr.bf16.mxu0 0
        %2418 = vmatpush1.bf16.msra.mxu0 %v2202
        %2419 = vmatprep.mubr.bf16.mxu0 %v1747
        %2420 = vmatmul.mubr.bf16.gmra.mrb[0].mxu0 %v1746
        %v2421 = vpop.f32.mrb[0].mxu0
        %v2422 = vadd.f32 %v2382, %v2421
        %v2423 = vpop.f32.mrb[0].mxu0
        %v2424 = vpop.f32.mrb[0].mxu0
        %v2425 = vpop.f32.mrb[0].mxu0
        %2426 = vdwg.mxu0
        %v2427 = vmax.f32 %v2422, 0.0
        %v2428 = vpack.c.bf16 %v2427, %v2427
        %v2429 = vld [vmem:[%s9] sm:$0xf]
        %v2430 = vld [vmem:[%s9 + $0x4] sm:$0xf]
        %v2431 = vld [vmem:[%s9 + $0x8] sm:$0xf]
        %v2432 = vld [vmem:[%s9 + $0xc] sm:$0xf]
        %v2433 = vld [vmem:[%s9 + $0x10] sm:$0xf]
        %v2434 = vld [vmem:[%s9 + $0x14] sm:$0xf]
        %v2435 = vld [vmem:[%s9 + $0x18] sm:$0xf]
        %v2436 = vld [vmem:[%s9 + $0x1c] sm:$0xf]
        %v2437 = vld [vmem:[%s10] sm:$0x1]
        %v2439 = vlaneseq
        %v2440 = vshrl.u32 %v2439, 7
        %v2441 = vsub.s32 0, %v2440
        %v2442 = vrot.slane %v2437, %v2441
        %v2452 = vunpack.c.l.b16 %v2429
        %v2453 = vunpack.c.l.b16 %v2430
        %v2454 = vunpack.c.l.b16 %v2431
        %v2455 = vunpack.c.l.b16 %v2432
        %v2456 = vunpack.c.l.b16 %v2433
        %v2457 = vunpack.c.l.b16 %v2434
        %v2458 = vunpack.c.l.b16 %v2435
        %v2459 = vunpack.c.l.b16 %v2436
        %v2460 = vpack.c.b16 %v2453, %v2452
        %v2461 = vpack.c.b16 %v2455, %v2454
        %v2462 = vpack.c.b16 %v2457, %v2456
        %v2463 = vpack.c.b16 %v2459, %v2458
        %v2469 = vsel %vm1042, %v2428, 0
        %2471 = vmatprep.subr.bf16.mxu0 0
        %2472 = vmatpush1.bf16.msra.mxu0 %v2460
        %2473 = vmatprep.subr.bf16.mxu0 0
        %2474 = vmatpush1.bf16.msra.mxu0 %v2461
        %2475 = vmatprep.subr.bf16.mxu0 0
        %2476 = vmatpush1.bf16.msra.mxu0 %v2462
        %2477 = vmatprep.subr.bf16.mxu0 0
        %2478 = vmatpush1.bf16.msra.mxu0 %v2463
        %2479 = vmatprep.subr.bf16.mxu0 0
        %2480 = vmatpush1.bf16.msra.mxu0 0
        %2481 = vmatprep.subr.bf16.mxu0 0
        %2482 = vmatpush1.bf16.msra.mxu0 0
        %2483 = vmatprep.subr.bf16.mxu0 0
        %2484 = vmatpush1.bf16.msra.mxu0 0
        %2485 = vmatprep.subr.bf16.mxu0 0
        %2486 = vmatpush1.bf16.msra.mxu0 0
        %2487 = vmatprep.subr.bf16.mxu0 0
        %2488 = vmatpush1.bf16.msra.mxu0 0
        %2489 = vmatprep.subr.bf16.mxu0 0
        %2490 = vmatpush1.bf16.msra.mxu0 0
        %2491 = vmatprep.subr.bf16.mxu0 0
        %2492 = vmatpush1.bf16.msra.mxu0 0
        %2493 = vmatprep.subr.bf16.mxu0 0
        %2494 = vmatpush1.bf16.msra.mxu0 0
        %2495 = vmatprep.subr.bf16.mxu0 0
        %2496 = vmatpush1.bf16.msra.mxu0 0
        %2497 = vmatprep.subr.bf16.mxu0 0
        %2498 = vmatpush1.bf16.msra.mxu0 0
        %2499 = vmatprep.subr.bf16.mxu0 0
        %2500 = vmatpush1.bf16.msra.mxu0 0
        %2501 = vmatprep.subr.bf16.mxu0 0
        %2502 = vmatpush1.bf16.msra.mxu0 0
        %2503 = vmatprep.mubr.bf16.mxu0 0
        %2504 = vmatmul.mubr.bf16.gmra.mrb[0].mxu0 %v2469
        %v2505 = vpop.f32.mrb[0].mxu0
        %v2506 = vadd.f32 %v2442, %v2505
        %v2507 = vpop.f32.mrb[0].mxu0
        %v2508 = vpop.f32.mrb[0].mxu0
        %v2509 = vpop.f32.mrb[0].mxu0
        %2510 = vdwg.mxu0
        %v2511 = vmax.f32 %v2506, 0.0
        %v2512 = vpack.c.bf16 %v2511, %v2511
        %v2513 = vld [vmem:[%s11] sm:$0xf]
        %v2514 = vld [vmem:[%s11 + $0x4] sm:$0xf]
        %v2515 = vld [vmem:[%s11 + $0x8] sm:$0xf]
        %v2516 = vld [vmem:[%s11 + $0xc] sm:$0xf]
        %v2517 = vld [vmem:[%s12] sm:$0x1]
        %v2519 = vlaneseq
        %v2520 = vshrl.u32 %v2519, 7
        %v2521 = vsub.s32 0, %v2520
        %v2522 = vrot.slane %v2517, %v2521
        %v2528 = vunpack.c.l.b16 %v2513
        %v2529 = vunpack.c.l.b16 %v2514
        %v2530 = vunpack.c.l.b16 %v2515
        %v2531 = vunpack.c.l.b16 %v2516
        %v2532 = vpack.c.b16 %v2529, %v2528
        %v2533 = vpack.c.b16 %v2531, %v2530
        %v2537 = vsel %vm861, %v2512, 0
        %2539 = vmatprep.subr.bf16.mxu0 0
        %2540 = vmatpush1.bf16.msra.mxu0 %v2532
        %2541 = vmatprep.subr.bf16.mxu0 0
        %2542 = vmatpush1.bf16.msra.mxu0 %v2533
        %2543 = vmatprep.subr.bf16.mxu0 0
        %2544 = vmatpush1.bf16.msra.mxu0 0
        %2545 = vmatprep.subr.bf16.mxu0 0
        %2546 = vmatpush1.bf16.msra.mxu0 0
        %2547 = vmatprep.subr.bf16.mxu0 0
        %2548 = vmatpush1.bf16.msra.mxu0 0
        %2549 = vmatprep.subr.bf16.mxu0 0
        %2550 = vmatpush1.bf16.msra.mxu0 0
        %2551 = vmatprep.subr.bf16.mxu0 0
        %2552 = vmatpush1.bf16.msra.mxu0 0
        %2553 = vmatprep.subr.bf16.mxu0 0
        %2554 = vmatpush1.bf16.msra.mxu0 0
        %2555 = vmatprep.subr.bf16.mxu0 0
        %2556 = vmatpush1.bf16.msra.mxu0 0
        %2557 = vmatprep.subr.bf16.mxu0 0
        %2558 = vmatpush1.bf16.msra.mxu0 0
        %2559 = vmatprep.subr.bf16.mxu0 0
        %2560 = vmatpush1.bf16.msra.mxu0 0
        %2561 = vmatprep.subr.bf16.mxu0 0
        %2562 = vmatpush1.bf16.msra.mxu0 0
        %2563 = vmatprep.subr.bf16.mxu0 0
        %2564 = vmatpush1.bf16.msra.mxu0 0
        %2565 = vmatprep.subr.bf16.mxu0 0
        %2566 = vmatpush1.bf16.msra.mxu0 0
        %2567 = vmatprep.subr.bf16.mxu0 0
        %2568 = vmatpush1.bf16.msra.mxu0 0
        %2569 = vmatprep.subr.bf16.mxu0 0
        %2570 = vmatpush1.bf16.msra.mxu0 0
        %2571 = vmatprep.mubr.bf16.mxu0 0
        %2572 = vmatmul.mubr.bf16.gmra.mrb[0].mxu0 %v2537
        %v2573 = vpop.f32.mrb[0].mxu0
        %v2574 = vadd.f32 %v2522, %v2573
        %v2575 = vpop.f32.mrb[0].mxu0
        %v2576 = vpop.f32.mrb[0].mxu0
        %v2577 = vpop.f32.mrb[0].mxu0
        %2578 = vdwg.mxu0
        %2579 = vst.msk [vmem:[%s434] sm:$0xff] %vm573, %v2574
        %s2580 = sand.u32 %s313, 1
        %s2581 = scalar_lea.sflag [#allocation3], %s2580
        %s2582 = sand.u32 %s313, 1
        %s2583 = smul.addr %s2582, 8
        %s2584 = scalar_lea.vmem [#allocation2], %s2583
        // Predicated region
        $region73: #{tpu_custom_call.1} parent=71 // pred_check
          %p2585 = pneg %p323
        $region74: #{tpu_custom_call.1} parent=71 // pred_check_branch
          %2587 = sbr.rel (%p2585) target = $region76
        $region75: #{tpu_custom_call.1} parent=71 // pred_region
          %s2589 = ssub.s32 128, 128
          %2590 = vsyncadd %s2581, %s2589
          %s2591 = smul.addr %s27, 128
          %s2592 = scalar_lea.hbm %s13, %s2591
          %s2594 = sshll.u32 %s2584, 4
          %s2595 = int_to_ptr.vmem [resolvable:$true] %s2594
          %2597 = dma.vmem_to_hbm [thread:$0]  %s2595, 128, %s2592, %s2581
        $region76: #{tpu_custom_call.1} parent=71 // pred_fallthru
          _
      $region72: #{tpu_custom_call.1} parent=5 // pred_fallthru
        _
      %p2598 = scmp.le.s32.totalorder 2, %s22
      // Predicated region
      $region77: #{tpu_custom_call.1} parent=5 // pred_check
        %p2599 = pneg %p2598
      $region78: #{tpu_custom_call.1} parent=5 // pred_check_branch
        %2601 = sbr.rel (%p2599) target = $region80
      $region79: #{tpu_custom_call.1} parent=5 // pred_region
        %s2602 = ssub.s32 %s22, 2
        // Predicated region
        $region81: #{tpu_custom_call.1} parent=79 // pred_check
          %p2603 = pneg %p329
        $region82: #{tpu_custom_call.1} parent=79 // pred_check_branch
          %2605 = sbr.rel (%p2603) target = $region84
        $region83: #{tpu_custom_call.1} parent=79 // pred_region
          %s2606 = sand.u32 %s314, 1
          %s2607 = scalar_lea.sflag [#allocation3], %s2606
          %s2608 = sand.u32 %s314, 1
          %s2609 = smul.addr %s2608, 8
          %s2610 = scalar_lea.vmem [#allocation2], %s2609
          %2611 = dma.done %s2607, 128
        $region84: #{tpu_custom_call.1} parent=79 // pred_fallthru
          _
      $region80: #{tpu_custom_call.1} parent=5 // pred_fallthru
        _
    $region6: #{tpu_custom_call.1} parent=1 // loop_footer
      %s26 = sadd.s32 1, %s22
    $region7: #{tpu_custom_call.1} parent=1 // loop_footer_branch
      %21 = sbr.rel target = $region3
    $region8: #{tpu_custom_call.1} parent=1 // loop_exit
      _
    %2612 = vsyncpa [#allocation3], 1
    %s2613 = scalar_lea.sflag [#allocation3], 1
    %2614 = vsyncpa %s2613, 1

</llo_original>
